<compile_context>
chip_gen: v6e
topology: v6e:2x2x1
jax: 0.10.0
libtpu: 0.0.40
codegen_flags: <defaults>
</compile_context>

<pallas_src>
import math

import jax
import jax.numpy as jnp
from jax.experimental import pallas as pl
from jax.experimental.pallas import tpu as pltpu

# ----------------------------- module config --------------------------------
CNN_N_FILT = (4, 8)
CNN_LEN_FILT = (5, 3)
CNN_MAX_POOL = (2, 2)
CNN_ACT = ("relu", "relu")
# nn.Dropout(p=0.0) in eval mode -> identity; no per-element multiply emitted.


def _act(x, kind):
    if kind == "relu":
        return jnp.maximum(x, 0.0)
    if kind == "tanh":
        return jnp.tanh(x)
    if kind == "sigmoid":
        return jax.nn.sigmoid(x)
    if kind == "leaky_relu":
        return jnp.where(x >= 0, x, 0.2 * x)      # act_fun uses LeakyReLU(0.2)
    if kind == "elu":
        return jnp.where(x >= 0, x, jnp.expm1(x))
    if kind == "linear":
        return x                                   # LeakyReLU(1) == identity
    # TODO(synk): 'softmax' (LogSoftmax over the channel dim) not emitted.
    raise NotImplementedError(kind)


# ------------------------------ fused kernel --------------------------------
def _make_cnn_kernel(cfg):
    (N1, K1, P1, N2, K2, P2, S, LP, I1, L2,
     W1_OFF, B1_OFF, W2_OFF, B2_OFF, ACT1, ACT2) = cfg

    def kernel(x_ref, p_ref, out_ref):
        # x_ref  : (1, S, LP)  one sample, pre-split into S = P1*P2 length-phases
        #                      (phase on sublanes, phase-length LP on lanes).
        # p_ref  : (P,) f32 in SMEM -- packed [w1 | b1 | w2 | b2]; weights/biases are
        #          scalar reads, so every conv FMA is scalar x dense-lane-vector.
        # out_ref: (1, 1, N2*L2) flattened channel-major output row (lane-dense).
        xph = x_ref[0]                                    # (S, LP)
        xrows = [xph[p:p + 1, :] for p in range(S)]       # S x (1, LP)

        # ----- layer 1: Conv1d(1->N1, K1) -> MaxPool1d(P1) -> act -----
        # Computed directly in the P2 phases that layer 2's pooling needs, so both
        # max-pools reduce to elementwise maxima (no strided / reshape relayouts).
        pooled1 = [[None] * N1 for _ in range(P2)]        # pooled1[r1][c] : (1, I1)
        for r1 in range(P2):
            for c in range(N1):
                bias = p_ref[B1_OFF + c]
                best = None
                for p1 in range(P1):
                    q = P1 * r1 + p1                      # conv position phase mod S
                    acc = None
                    for k in range(K1):
                        ph, off = (q + k) % S, (q + k) // S
                        w = p_ref[W1_OFF + c * K1 + k]
                        term = xrows[ph][:, off:off + I1] * w
                        acc = (term + bias) if acc is None else (acc + term)
                    best = acc if best is None else jnp.maximum(best, acc)
                pooled1[r1][c] = _act(best, ACT1)
                # Dropout(p=0.0, eval) -> identity.

        # ----- layer 2: Conv1d(N1->N2, K2) -> MaxPool1d(P2) -> act -----
        for n in range(N2):
            bias = p_ref[B2_OFF + n]
            best = None
            for r2 in range(P2):
                acc = None
                for c in range(N1):
                    for k in range(K2):
                        ph, off = (r2 + k) % P2, (r2 + k) // P2
                        w = p_ref[W2_OFF + (n * N1 + c) * K2 + k]
                        term = pooled1[ph][c][:, off:off + L2] * w
                        acc = (term + bias) if acc is None else (acc + term)
                best = acc if best is None else jnp.maximum(best, acc)
            row = _act(best, ACT2)                        # (1, L2)
            # Channel-major flatten (torch x.view(batch, -1)) written straight into
            # the lane-dense output row; HBM writeback is one dense block DMA.
            out_ref[0, :, n * L2:(n + 1) * L2] = row

    return kernel


# ------------------------------ wrapper --------------------------------------
def cnn_forward_pallas(x, params):
    """x: (B, L0) f32; params: [(w (N,Cin,K) torch layout, b (N,)), ...] -> (B, out_dim)."""
    B, L0 = x.shape
    (w1, b1), (w2, b2) = params
    N1, Cin1, K1 = w1.shape
    N2, Cin2, K2 = w2.shape
    P1, P2 = CNN_MAX_POOL
    assert Cin1 == 1 and Cin2 == N1

    Lc1 = L0 - K1 + 1
    L1 = Lc1 // P1
    Lc2 = L1 - K2 + 1
    L2 = Lc2 // P2
    OUT = N2 * L2

    S = P1 * P2                          # input length-phases carried through layer 1
    assert L0 % S == 0, "toy wrapper assumes L0 divisible by pool1*pool2"
    LP = L0 // S
    I1 = L2 + (P2 + K2 - 2) // P2        # pooled-layer-1 length needed per phase
    # In-bounds checks for the polyphase slices.
    assert P2 * (I1 - 1) + (P2 - 1) <= L1 - 1
    assert (S - 1 + K1 - 1) // S + I1 <= LP

    # ---- layout plumbing (wrapper-side, cheap XLA) ----
    # Interleaved phase split: x_ph[b, p, i] = x[b, S*i + p].
    x_ph = jnp.transpose(x.reshape(B, LP, S), (0, 2, 1)).astype(jnp.float32)
    # One packed parameter slab -> a single tiny SMEM input (scalar reads in-kernel).
    packed = jnp.concatenate(
        [w1.reshape(-1), b1.reshape(-1), w2.reshape(-1), b2.reshape(-1)]
    ).astype(jnp.float32)
    W1_OFF = 0
    B1_OFF = W1_OFF + N1 * Cin1 * K1
    W2_OFF = B1_OFF + N1
    B2_OFF = W2_OFF + N2 * N1 * K2

    kernel = _make_cnn_kernel((N1, K1, P1, N2, K2, P2, S, LP, I1, L2,
                               W1_OFF, B1_OFF, W2_OFF, B2_OFF,
                               CNN_ACT[0], CNN_ACT[1]))

    out3 = pl.pallas_call(
        kernel,
        out_shape=jax.ShapeDtypeStruct((B, 1, OUT), jnp.float32),
        grid=(B,),                        # batch axis; "parallel" -> both v7x cores
        in_specs=[
            pl.BlockSpec((1, S, LP), lambda b: (b, 0, 0)),
            pl.BlockSpec(memory_space=pltpu.MemorySpace.SMEM),
        ],
        out_specs=pl.BlockSpec((1, 1, OUT), lambda b: (b, 0, 0)),
        compiler_params=pltpu.CompilerParams(dimension_semantics=("parallel",)),
    )(x_ph, packed)

    return out3[:, 0, :]                  # drop singleton axis (no transpose, no copy)


# --------------------------- params & reference ------------------------------
def init_cnn_params(key):
    """Deterministic init mimicking torch nn.Conv1d default (uniform +-1/sqrt(Cin*K))."""
    params = []
    cin = 1
    for n_filt, k_len in zip(CNN_N_FILT, CNN_LEN_FILT):
        key, kw, kb = jax.random.split(key, 3)
        bound = 1.0 / math.sqrt(cin * k_len)
        w = jax.random.uniform(kw, (n_filt, cin, k_len), jnp.float32, -bound, bound)
        b = jax.random.uniform(kb, (n_filt,), jnp.float32, -bound, bound)
        params.append((w, b))
        cin = n_filt
    return params


def cnn_forward_ref(x, params):
    """Pure-JAX reference mirroring the PyTorch forward (eval mode)."""
    B, L = x.shape
    h = x.reshape(B, 1, L)
    for (w, b), pool, act in zip(params, CNN_MAX_POOL, CNN_ACT):
        N, Cin, K = w.shape
        Lc = h.shape[2] - K + 1
        out = jnp.zeros((B, N, Lc), jnp.float32)
        for k in range(K):
            out = out + jnp.einsum("bcl,nc->bnl", h[:, :, k:k + Lc], w[:, :, k])
        out = out + b[None, :, None]
        Lp = Lc // pool
        out = out[:, :, : Lp * pool].reshape(B, N, Lp, pool).max(axis=-1)
        h = _act(out, act)
    return h.reshape(B, -1)


if __name__ == "__main__":
    B, L0 = 2, 64

    key = jax.random.PRNGKey(0)
    kx, kp = jax.random.split(key)
    x = jax.random.normal(kx, (B, L0), dtype=jnp.float32)
    params = init_cnn_params(kp)

    out = jax.block_until_ready(cnn_forward_pallas(x, params))

    ref = cnn_forward_ref(x, params)
    L1 = (L0 - CNN_LEN_FILT[0] + 1) // CNN_MAX_POOL[0]
    L2 = (L1 - CNN_LEN_FILT[1] + 1) // CNN_MAX_POOL[1]
    assert out.shape == (B, CNN_N_FILT[-1] * L2), out.shape
    err = float(jnp.max(jnp.abs(out - ref)))
    assert jnp.allclose(out, ref, atol=2e-5, rtol=1e-5), err

    print("KERNEL_OK")
</pallas_src>

<mosaic_0001>
module attributes {stable_mosaic.version = 11 : i64} {
  func.func @kernel(%arg0: i32, %arg1: memref<1x4x16xf32, #tpu.memory_space<vmem>>, %arg2: memref<128xf32, #tpu.memory_space<smem>>, %arg3: memref<1x1x112xf32, #tpu.memory_space<vmem>>) attributes {dimension_semantics = [#tpu.dimension_semantics<parallel>], iteration_bounds = array<i64: 2>, scalar_prefetch = 0 : i64, scratch_operands = 0 : i64, tpu.core_type = #tpu.core_type<tc>, window_params = [{transform_indices = @transform_0, window_bounds = array<i64: 1, 4, 16>}, {transform_indices = @transform_1, window_bounds = array<i64: 128>}, {transform_indices = @transform_2, window_bounds = array<i64: 1, 1, 112>}]} {
    %c0 = arith.constant 0 : index
    %c0_0 = arith.constant 0 : index
    %c0_1 = arith.constant 0 : index
    %0 = vector.load %arg1[%c0, %c0_0, %c0_1] : memref<1x4x16xf32, #tpu.memory_space<vmem>>, vector<1x4x16xf32>
    %1 = vector.shape_cast %0 : vector<1x4x16xf32> to vector<4x16xf32>
    %2 = vector.extract_strided_slice %1 {offsets = [0, 0], sizes = [1, 16], strides = [1, 1]} : vector<4x16xf32> to vector<1x16xf32>
    %3 = vector.extract_strided_slice %1 {offsets = [1, 0], sizes = [1, 16], strides = [1, 1]} : vector<4x16xf32> to vector<1x16xf32>
    %4 = vector.extract_strided_slice %1 {offsets = [2, 0], sizes = [1, 16], strides = [1, 1]} : vector<4x16xf32> to vector<1x16xf32>
    %5 = vector.extract_strided_slice %1 {offsets = [3, 0], sizes = [1, 16], strides = [1, 1]} : vector<4x16xf32> to vector<1x16xf32>
    %c20 = arith.constant 20 : index
    %6 = memref.load %arg2[%c20] : memref<128xf32, #tpu.memory_space<smem>>
    %c0_2 = arith.constant 0 : index
    %7 = memref.load %arg2[%c0_2] : memref<128xf32, #tpu.memory_space<smem>>
    %8 = vector.extract_strided_slice %2 {offsets = [0, 0], sizes = [1, 15], strides = [1, 1]} : vector<1x16xf32> to vector<1x15xf32>
    %9 = vector.broadcast %7 : f32 to vector<1x15xf32>
    %10 = arith.mulf %8, %9 : vector<1x15xf32>
    %11 = vector.broadcast %6 : f32 to vector<1x15xf32>
    %12 = arith.addf %10, %11 : vector<1x15xf32>
    %c1 = arith.constant 1 : index
    %13 = memref.load %arg2[%c1] : memref<128xf32, #tpu.memory_space<smem>>
    %14 = vector.extract_strided_slice %3 {offsets = [0, 0], sizes = [1, 15], strides = [1, 1]} : vector<1x16xf32> to vector<1x15xf32>
    %15 = vector.broadcast %13 : f32 to vector<1x15xf32>
    %16 = arith.mulf %14, %15 : vector<1x15xf32>
    %17 = arith.addf %12, %16 : vector<1x15xf32>
    %c2 = arith.constant 2 : index
    %18 = memref.load %arg2[%c2] : memref<128xf32, #tpu.memory_space<smem>>
    %19 = vector.extract_strided_slice %4 {offsets = [0, 0], sizes = [1, 15], strides = [1, 1]} : vector<1x16xf32> to vector<1x15xf32>
    %20 = vector.broadcast %18 : f32 to vector<1x15xf32>
    %21 = arith.mulf %19, %20 : vector<1x15xf32>
    %22 = arith.addf %17, %21 : vector<1x15xf32>
    %c3 = arith.constant 3 : index
    %23 = memref.load %arg2[%c3] : memref<128xf32, #tpu.memory_space<smem>>
    %24 = vector.extract_strided_slice %5 {offsets = [0, 0], sizes = [1, 15], strides = [1, 1]} : vector<1x16xf32> to vector<1x15xf32>
    %25 = vector.broadcast %23 : f32 to vector<1x15xf32>
    %26 = arith.mulf %24, %25 : vector<1x15xf32>
    %27 = arith.addf %22, %26 : vector<1x15xf32>
    %c4 = arith.constant 4 : index
    %28 = memref.load %arg2[%c4] : memref<128xf32, #tpu.memory_space<smem>>
    %29 = vector.extract_strided_slice %2 {offsets = [0, 1], sizes = [1, 15], strides = [1, 1]} : vector<1x16xf32> to vector<1x15xf32>
    %30 = vector.broadcast %28 : f32 to vector<1x15xf32>
    %31 = arith.mulf %29, %30 : vector<1x15xf32>
    %32 = arith.addf %27, %31 : vector<1x15xf32>
    %c0_3 = arith.constant 0 : index
    %33 = memref.load %arg2[%c0_3] : memref<128xf32, #tpu.memory_space<smem>>
    %34 = vector.extract_strided_slice %3 {offsets = [0, 0], sizes = [1, 15], strides = [1, 1]} : vector<1x16xf32> to vector<1x15xf32>
    %35 = vector.broadcast %33 : f32 to vector<1x15xf32>
    %36 = arith.mulf %34, %35 : vector<1x15xf32>
    %37 = vector.broadcast %6 : f32 to vector<1x15xf32>
    %38 = arith.addf %36, %37 : vector<1x15xf32>
    %c1_4 = arith.constant 1 : index
    %39 = memref.load %arg2[%c1_4] : memref<128xf32, #tpu.memory_space<smem>>
    %40 = vector.extract_strided_slice %4 {offsets = [0, 0], sizes = [1, 15], strides = [1, 1]} : vector<1x16xf32> to vector<1x15xf32>
    %41 = vector.broadcast %39 : f32 to vector<1x15xf32>
    %42 = arith.mulf %40, %41 : vector<1x15xf32>
    %43 = arith.addf %38, %42 : vector<1x15xf32>
    %c2_5 = arith.constant 2 : index
    %44 = memref.load %arg2[%c2_5] : memref<128xf32, #tpu.memory_space<smem>>
    %45 = vector.extract_strided_slice %5 {offsets = [0, 0], sizes = [1, 15], strides = [1, 1]} : vector<1x16xf32> to vector<1x15xf32>
    %46 = vector.broadcast %44 : f32 to vector<1x15xf32>
    %47 = arith.mulf %45, %46 : vector<1x15xf32>
    %48 = arith.addf %43, %47 : vector<1x15xf32>
    %c3_6 = arith.constant 3 : index
    %49 = memref.load %arg2[%c3_6] : memref<128xf32, #tpu.memory_space<smem>>
    %50 = vector.extract_strided_slice %2 {offsets = [0, 1], sizes = [1, 15], strides = [1, 1]} : vector<1x16xf32> to vector<1x15xf32>
    %51 = vector.broadcast %49 : f32 to vector<1x15xf32>
    %52 = arith.mulf %50, %51 : vector<1x15xf32>
    %53 = arith.addf %48, %52 : vector<1x15xf32>
    %c4_7 = arith.constant 4 : index
    %54 = memref.load %arg2[%c4_7] : memref<128xf32, #tpu.memory_space<smem>>
    %55 = vector.extract_strided_slice %3 {offsets = [0, 1], sizes = [1, 15], strides = [1, 1]} : vector<1x16xf32> to vector<1x15xf32>
    %56 = vector.broadcast %54 : f32 to vector<1x15xf32>
    %57 = arith.mulf %55, %56 : vector<1x15xf32>
    %58 = arith.addf %53, %57 : vector<1x15xf32>
    %59 = arith.maximumf %32, %58 : vector<1x15xf32>
    %cst = arith.constant 0.000000e+00 : f32
    %60 = vector.broadcast %cst : f32 to vector<1x15xf32>
    %61 = arith.maximumf %59, %60 : vector<1x15xf32>
    %c21 = arith.constant 21 : index
    %62 = memref.load %arg2[%c21] : memref<128xf32, #tpu.memory_space<smem>>
    %c5 = arith.constant 5 : index
    %63 = memref.load %arg2[%c5] : memref<128xf32, #tpu.memory_space<smem>>
    %64 = vector.extract_strided_slice %2 {offsets = [0, 0], sizes = [1, 15], strides = [1, 1]} : vector<1x16xf32> to vector<1x15xf32>
    %65 = vector.broadcast %63 : f32 to vector<1x15xf32>
    %66 = arith.mulf %64, %65 : vector<1x15xf32>
    %67 = vector.broadcast %62 : f32 to vector<1x15xf32>
    %68 = arith.addf %66, %67 : vector<1x15xf32>
    %c6 = arith.constant 6 : index
    %69 = memref.load %arg2[%c6] : memref<128xf32, #tpu.memory_space<smem>>
    %70 = vector.extract_strided_slice %3 {offsets = [0, 0], sizes = [1, 15], strides = [1, 1]} : vector<1x16xf32> to vector<1x15xf32>
    %71 = vector.broadcast %69 : f32 to vector<1x15xf32>
    %72 = arith.mulf %70, %71 : vector<1x15xf32>
    %73 = arith.addf %68, %72 : vector<1x15xf32>
    %c7 = arith.constant 7 : index
    %74 = memref.load %arg2[%c7] : memref<128xf32, #tpu.memory_space<smem>>
    %75 = vector.extract_strided_slice %4 {offsets = [0, 0], sizes = [1, 15], strides = [1, 1]} : vector<1x16xf32> to vector<1x15xf32>
    %76 = vector.broadcast %74 : f32 to vector<1x15xf32>
    %77 = arith.mulf %75, %76 : vector<1x15xf32>
    %78 = arith.addf %73, %77 : vector<1x15xf32>
    %c8 = arith.constant 8 : index
    %79 = memref.load %arg2[%c8] : memref<128xf32, #tpu.memory_space<smem>>
    %80 = vector.extract_strided_slice %5 {offsets = [0, 0], sizes = [1, 15], strides = [1, 1]} : vector<1x16xf32> to vector<1x15xf32>
    %81 = vector.broadcast %79 : f32 to vector<1x15xf32>
    %82 = arith.mulf %80, %81 : vector<1x15xf32>
    %83 = arith.addf %78, %82 : vector<1x15xf32>
    %c9 = arith.constant 9 : index
    %84 = memref.load %arg2[%c9] : memref<128xf32, #tpu.memory_space<smem>>
    %85 = vector.extract_strided_slice %2 {offsets = [0, 1], sizes = [1, 15], strides = [1, 1]} : vector<1x16xf32> to vector<1x15xf32>
    %86 = vector.broadcast %84 : f32 to vector<1x15xf32>
    %87 = arith.mulf %85, %86 : vector<1x15xf32>
    %88 = arith.addf %83, %87 : vector<1x15xf32>
    %c5_8 = arith.constant 5 : index
    %89 = memref.load %arg2[%c5_8] : memref<128xf32, #tpu.memory_space<smem>>
    %90 = vector.extract_strided_slice %3 {offsets = [0, 0], sizes = [1, 15], strides = [1, 1]} : vector<1x16xf32> to vector<1x15xf32>
    %91 = vector.broadcast %89 : f32 to vector<1x15xf32>
    %92 = arith.mulf %90, %91 : vector<1x15xf32>
    %93 = vector.broadcast %62 : f32 to vector<1x15xf32>
    %94 = arith.addf %92, %93 : vector<1x15xf32>
    %c6_9 = arith.constant 6 : index
    %95 = memref.load %arg2[%c6_9] : memref<128xf32, #tpu.memory_space<smem>>
    %96 = vector.extract_strided_slice %4 {offsets = [0, 0], sizes = [1, 15], strides = [1, 1]} : vector<1x16xf32> to vector<1x15xf32>
    %97 = vector.broadcast %95 : f32 to vector<1x15xf32>
    %98 = arith.mulf %96, %97 : vector<1x15xf32>
    %99 = arith.addf %94, %98 : vector<1x15xf32>
    %c7_10 = arith.constant 7 : index
    %100 = memref.load %arg2[%c7_10] : memref<128xf32, #tpu.memory_space<smem>>
    %101 = vector.extract_strided_slice %5 {offsets = [0, 0], sizes = [1, 15], strides = [1, 1]} : vector<1x16xf32> to vector<1x15xf32>
    %102 = vector.broadcast %100 : f32 to vector<1x15xf32>
    %103 = arith.mulf %101, %102 : vector<1x15xf32>
    %104 = arith.addf %99, %103 : vector<1x15xf32>
    %c8_11 = arith.constant 8 : index
    %105 = memref.load %arg2[%c8_11] : memref<128xf32, #tpu.memory_space<smem>>
    %106 = vector.extract_strided_slice %2 {offsets = [0, 1], sizes = [1, 15], strides = [1, 1]} : vector<1x16xf32> to vector<1x15xf32>
    %107 = vector.broadcast %105 : f32 to vector<1x15xf32>
    %108 = arith.mulf %106, %107 : vector<1x15xf32>
    %109 = arith.addf %104, %108 : vector<1x15xf32>
    %c9_12 = arith.constant 9 : index
    %110 = memref.load %arg2[%c9_12] : memref<128xf32, #tpu.memory_space<smem>>
    %111 = vector.extract_strided_slice %3 {offsets = [0, 1], sizes = [1, 15], strides = [1, 1]} : vector<1x16xf32> to vector<1x15xf32>
    %112 = vector.broadcast %110 : f32 to vector<1x15xf32>
    %113 = arith.mulf %111, %112 : vector<1x15xf32>
    %114 = arith.addf %109, %113 : vector<1x15xf32>
    %115 = arith.maximumf %88, %114 : vector<1x15xf32>
    %cst_13 = arith.constant 0.000000e+00 : f32
    %116 = vector.broadcast %cst_13 : f32 to vector<1x15xf32>
    %117 = arith.maximumf %115, %116 : vector<1x15xf32>
    %c22 = arith.constant 22 : index
    %118 = memref.load %arg2[%c22] : memref<128xf32, #tpu.memory_space<smem>>
    %c10 = arith.constant 10 : index
    %119 = memref.load %arg2[%c10] : memref<128xf32, #tpu.memory_space<smem>>
    %120 = vector.extract_strided_slice %2 {offsets = [0, 0], sizes = [1, 15], strides = [1, 1]} : vector<1x16xf32> to vector<1x15xf32>
    %121 = vector.broadcast %119 : f32 to vector<1x15xf32>
    %122 = arith.mulf %120, %121 : vector<1x15xf32>
    %123 = vector.broadcast %118 : f32 to vector<1x15xf32>
    %124 = arith.addf %122, %123 : vector<1x15xf32>
    %c11 = arith.constant 11 : index
    %125 = memref.load %arg2[%c11] : memref<128xf32, #tpu.memory_space<smem>>
    %126 = vector.extract_strided_slice %3 {offsets = [0, 0], sizes = [1, 15], strides = [1, 1]} : vector<1x16xf32> to vector<1x15xf32>
    %127 = vector.broadcast %125 : f32 to vector<1x15xf32>
    %128 = arith.mulf %126, %127 : vector<1x15xf32>
    %129 = arith.addf %124, %128 : vector<1x15xf32>
    %c12 = arith.constant 12 : index
    %130 = memref.load %arg2[%c12] : memref<128xf32, #tpu.memory_space<smem>>
    %131 = vector.extract_strided_slice %4 {offsets = [0, 0], sizes = [1, 15], strides = [1, 1]} : vector<1x16xf32> to vector<1x15xf32>
    %132 = vector.broadcast %130 : f32 to vector<1x15xf32>
    %133 = arith.mulf %131, %132 : vector<1x15xf32>
    %134 = arith.addf %129, %133 : vector<1x15xf32>
    %c13 = arith.constant 13 : index
    %135 = memref.load %arg2[%c13] : memref<128xf32, #tpu.memory_space<smem>>
    %136 = vector.extract_strided_slice %5 {offsets = [0, 0], sizes = [1, 15], strides = [1, 1]} : vector<1x16xf32> to vector<1x15xf32>
    %137 = vector.broadcast %135 : f32 to vector<1x15xf32>
    %138 = arith.mulf %136, %137 : vector<1x15xf32>
    %139 = arith.addf %134, %138 : vector<1x15xf32>
    %c14 = arith.constant 14 : index
    %140 = memref.load %arg2[%c14] : memref<128xf32, #tpu.memory_space<smem>>
    %141 = vector.extract_strided_slice %2 {offsets = [0, 1], sizes = [1, 15], strides = [1, 1]} : vector<1x16xf32> to vector<1x15xf32>
    %142 = vector.broadcast %140 : f32 to vector<1x15xf32>
    %143 = arith.mulf %141, %142 : vector<1x15xf32>
    %144 = arith.addf %139, %143 : vector<1x15xf32>
    %c10_14 = arith.constant 10 : index
    %145 = memref.load %arg2[%c10_14] : memref<128xf32, #tpu.memory_space<smem>>
    %146 = vector.extract_strided_slice %3 {offsets = [0, 0], sizes = [1, 15], strides = [1, 1]} : vector<1x16xf32> to vector<1x15xf32>
    %147 = vector.broadcast %145 : f32 to vector<1x15xf32>
    %148 = arith.mulf %146, %147 : vector<1x15xf32>
    %149 = vector.broadcast %118 : f32 to vector<1x15xf32>
    %150 = arith.addf %148, %149 : vector<1x15xf32>
    %c11_15 = arith.constant 11 : index
    %151 = memref.load %arg2[%c11_15] : memref<128xf32, #tpu.memory_space<smem>>
    %152 = vector.extract_strided_slice %4 {offsets = [0, 0], sizes = [1, 15], strides = [1, 1]} : vector<1x16xf32> to vector<1x15xf32>
    %153 = vector.broadcast %151 : f32 to vector<1x15xf32>
    %154 = arith.mulf %152, %153 : vector<1x15xf32>
    %155 = arith.addf %150, %154 : vector<1x15xf32>
    %c12_16 = arith.constant 12 : index
    %156 = memref.load %arg2[%c12_16] : memref<128xf32, #tpu.memory_space<smem>>
    %157 = vector.extract_strided_slice %5 {offsets = [0, 0], sizes = [1, 15], strides = [1, 1]} : vector<1x16xf32> to vector<1x15xf32>
    %158 = vector.broadcast %156 : f32 to vector<1x15xf32>
    %159 = arith.mulf %157, %158 : vector<1x15xf32>
    %160 = arith.addf %155, %159 : vector<1x15xf32>
    %c13_17 = arith.constant 13 : index
    %161 = memref.load %arg2[%c13_17] : memref<128xf32, #tpu.memory_space<smem>>
    %162 = vector.extract_strided_slice %2 {offsets = [0, 1], sizes = [1, 15], strides = [1, 1]} : vector<1x16xf32> to vector<1x15xf32>
    %163 = vector.broadcast %161 : f32 to vector<1x15xf32>
    %164 = arith.mulf %162, %163 : vector<1x15xf32>
    %165 = arith.addf %160, %164 : vector<1x15xf32>
    %c14_18 = arith.constant 14 : index
    %166 = memref.load %arg2[%c14_18] : memref<128xf32, #tpu.memory_space<smem>>
    %167 = vector.extract_strided_slice %3 {offsets = [0, 1], sizes = [1, 15], strides = [1, 1]} : vector<1x16xf32> to vector<1x15xf32>
    %168 = vector.broadcast %166 : f32 to vector<1x15xf32>
    %169 = arith.mulf %167, %168 : vector<1x15xf32>
    %170 = arith.addf %165, %169 : vector<1x15xf32>
    %171 = arith.maximumf %144, %170 : vector<1x15xf32>
    %cst_19 = arith.constant 0.000000e+00 : f32
    %172 = vector.broadcast %cst_19 : f32 to vector<1x15xf32>
    %173 = arith.maximumf %171, %172 : vector<1x15xf32>
    %c23 = arith.constant 23 : index
    %174 = memref.load %arg2[%c23] : memref<128xf32, #tpu.memory_space<smem>>
    %c15 = arith.constant 15 : index
    %175 = memref.load %arg2[%c15] : memref<128xf32, #tpu.memory_space<smem>>
    %176 = vector.extract_strided_slice %2 {offsets = [0, 0], sizes = [1, 15], strides = [1, 1]} : vector<1x16xf32> to vector<1x15xf32>
    %177 = vector.broadcast %175 : f32 to vector<1x15xf32>
    %178 = arith.mulf %176, %177 : vector<1x15xf32>
    %179 = vector.broadcast %174 : f32 to vector<1x15xf32>
    %180 = arith.addf %178, %179 : vector<1x15xf32>
    %c16 = arith.constant 16 : index
    %181 = memref.load %arg2[%c16] : memref<128xf32, #tpu.memory_space<smem>>
    %182 = vector.extract_strided_slice %3 {offsets = [0, 0], sizes = [1, 15], strides = [1, 1]} : vector<1x16xf32> to vector<1x15xf32>
    %183 = vector.broadcast %181 : f32 to vector<1x15xf32>
    %184 = arith.mulf %182, %183 : vector<1x15xf32>
    %185 = arith.addf %180, %184 : vector<1x15xf32>
    %c17 = arith.constant 17 : index
    %186 = memref.load %arg2[%c17] : memref<128xf32, #tpu.memory_space<smem>>
    %187 = vector.extract_strided_slice %4 {offsets = [0, 0], sizes = [1, 15], strides = [1, 1]} : vector<1x16xf32> to vector<1x15xf32>
    %188 = vector.broadcast %186 : f32 to vector<1x15xf32>
    %189 = arith.mulf %187, %188 : vector<1x15xf32>
    %190 = arith.addf %185, %189 : vector<1x15xf32>
    %c18 = arith.constant 18 : index
    %191 = memref.load %arg2[%c18] : memref<128xf32, #tpu.memory_space<smem>>
    %192 = vector.extract_strided_slice %5 {offsets = [0, 0], sizes = [1, 15], strides = [1, 1]} : vector<1x16xf32> to vector<1x15xf32>
    %193 = vector.broadcast %191 : f32 to vector<1x15xf32>
    %194 = arith.mulf %192, %193 : vector<1x15xf32>
    %195 = arith.addf %190, %194 : vector<1x15xf32>
    %c19 = arith.constant 19 : index
    %196 = memref.load %arg2[%c19] : memref<128xf32, #tpu.memory_space<smem>>
    %197 = vector.extract_strided_slice %2 {offsets = [0, 1], sizes = [1, 15], strides = [1, 1]} : vector<1x16xf32> to vector<1x15xf32>
    %198 = vector.broadcast %196 : f32 to vector<1x15xf32>
    %199 = arith.mulf %197, %198 : vector<1x15xf32>
    %200 = arith.addf %195, %199 : vector<1x15xf32>
    %c15_20 = arith.constant 15 : index
    %201 = memref.load %arg2[%c15_20] : memref<128xf32, #tpu.memory_space<smem>>
    %202 = vector.extract_strided_slice %3 {offsets = [0, 0], sizes = [1, 15], strides = [1, 1]} : vector<1x16xf32> to vector<1x15xf32>
    %203 = vector.broadcast %201 : f32 to vector<1x15xf32>
    %204 = arith.mulf %202, %203 : vector<1x15xf32>
    %205 = vector.broadcast %174 : f32 to vector<1x15xf32>
    %206 = arith.addf %204, %205 : vector<1x15xf32>
    %c16_21 = arith.constant 16 : index
    %207 = memref.load %arg2[%c16_21] : memref<128xf32, #tpu.memory_space<smem>>
    %208 = vector.extract_strided_slice %4 {offsets = [0, 0], sizes = [1, 15], strides = [1, 1]} : vector<1x16xf32> to vector<1x15xf32>
    %209 = vector.broadcast %207 : f32 to vector<1x15xf32>
    %210 = arith.mulf %208, %209 : vector<1x15xf32>
    %211 = arith.addf %206, %210 : vector<1x15xf32>
    %c17_22 = arith.constant 17 : index
    %212 = memref.load %arg2[%c17_22] : memref<128xf32, #tpu.memory_space<smem>>
    %213 = vector.extract_strided_slice %5 {offsets = [0, 0], sizes = [1, 15], strides = [1, 1]} : vector<1x16xf32> to vector<1x15xf32>
    %214 = vector.broadcast %212 : f32 to vector<1x15xf32>
    %215 = arith.mulf %213, %214 : vector<1x15xf32>
    %216 = arith.addf %211, %215 : vector<1x15xf32>
    %c18_23 = arith.constant 18 : index
    %217 = memref.load %arg2[%c18_23] : memref<128xf32, #tpu.memory_space<smem>>
    %218 = vector.extract_strided_slice %2 {offsets = [0, 1], sizes = [1, 15], strides = [1, 1]} : vector<1x16xf32> to vector<1x15xf32>
    %219 = vector.broadcast %217 : f32 to vector<1x15xf32>
    %220 = arith.mulf %218, %219 : vector<1x15xf32>
    %221 = arith.addf %216, %220 : vector<1x15xf32>
    %c19_24 = arith.constant 19 : index
    %222 = memref.load %arg2[%c19_24] : memref<128xf32, #tpu.memory_space<smem>>
    %223 = vector.extract_strided_slice %3 {offsets = [0, 1], sizes = [1, 15], strides = [1, 1]} : vector<1x16xf32> to vector<1x15xf32>
    %224 = vector.broadcast %222 : f32 to vector<1x15xf32>
    %225 = arith.mulf %223, %224 : vector<1x15xf32>
    %226 = arith.addf %221, %225 : vector<1x15xf32>
    %227 = arith.maximumf %200, %226 : vector<1x15xf32>
    %cst_25 = arith.constant 0.000000e+00 : f32
    %228 = vector.broadcast %cst_25 : f32 to vector<1x15xf32>
    %229 = arith.maximumf %227, %228 : vector<1x15xf32>
    %c20_26 = arith.constant 20 : index
    %230 = memref.load %arg2[%c20_26] : memref<128xf32, #tpu.memory_space<smem>>
    %c0_27 = arith.constant 0 : index
    %231 = memref.load %arg2[%c0_27] : memref<128xf32, #tpu.memory_space<smem>>
    %232 = vector.extract_strided_slice %4 {offsets = [0, 0], sizes = [1, 15], strides = [1, 1]} : vector<1x16xf32> to vector<1x15xf32>
    %233 = vector.broadcast %231 : f32 to vector<1x15xf32>
    %234 = arith.mulf %232, %233 : vector<1x15xf32>
    %235 = vector.broadcast %230 : f32 to vector<1x15xf32>
    %236 = arith.addf %234, %235 : vector<1x15xf32>
    %c1_28 = arith.constant 1 : index
    %237 = memref.load %arg2[%c1_28] : memref<128xf32, #tpu.memory_space<smem>>
    %238 = vector.extract_strided_slice %5 {offsets = [0, 0], sizes = [1, 15], strides = [1, 1]} : vector<1x16xf32> to vector<1x15xf32>
    %239 = vector.broadcast %237 : f32 to vector<1x15xf32>
    %240 = arith.mulf %238, %239 : vector<1x15xf32>
    %241 = arith.addf %236, %240 : vector<1x15xf32>
    %c2_29 = arith.constant 2 : index
    %242 = memref.load %arg2[%c2_29] : memref<128xf32, #tpu.memory_space<smem>>
    %243 = vector.extract_strided_slice %2 {offsets = [0, 1], sizes = [1, 15], strides = [1, 1]} : vector<1x16xf32> to vector<1x15xf32>
    %244 = vector.broadcast %242 : f32 to vector<1x15xf32>
    %245 = arith.mulf %243, %244 : vector<1x15xf32>
    %246 = arith.addf %241, %245 : vector<1x15xf32>
    %c3_30 = arith.constant 3 : index
    %247 = memref.load %arg2[%c3_30] : memref<128xf32, #tpu.memory_space<smem>>
    %248 = vector.extract_strided_slice %3 {offsets = [0, 1], sizes = [1, 15], strides = [1, 1]} : vector<1x16xf32> to vector<1x15xf32>
    %249 = vector.broadcast %247 : f32 to vector<1x15xf32>
    %250 = arith.mulf %248, %249 : vector<1x15xf32>
    %251 = arith.addf %246, %250 : vector<1x15xf32>
    %c4_31 = arith.constant 4 : index
    %252 = memref.load %arg2[%c4_31] : memref<128xf32, #tpu.memory_space<smem>>
    %253 = vector.extract_strided_slice %4 {offsets = [0, 1], sizes = [1, 15], strides = [1, 1]} : vector<1x16xf32> to vector<1x15xf32>
    %254 = vector.broadcast %252 : f32 to vector<1x15xf32>
    %255 = arith.mulf %253, %254 : vector<1x15xf32>
    %256 = arith.addf %251, %255 : vector<1x15xf32>
    %c0_32 = arith.constant 0 : index
    %257 = memref.load %arg2[%c0_32] : memref<128xf32, #tpu.memory_space<smem>>
    %258 = vector.extract_strided_slice %5 {offsets = [0, 0], sizes = [1, 15], strides = [1, 1]} : vector<1x16xf32> to vector<1x15xf32>
    %259 = vector.broadcast %257 : f32 to vector<1x15xf32>
    %260 = arith.mulf %258, %259 : vector<1x15xf32>
    %261 = vector.broadcast %230 : f32 to vector<1x15xf32>
    %262 = arith.addf %260, %261 : vector<1x15xf32>
    %c1_33 = arith.constant 1 : index
    %263 = memref.load %arg2[%c1_33] : memref<128xf32, #tpu.memory_space<smem>>
    %264 = vector.extract_strided_slice %2 {offsets = [0, 1], sizes = [1, 15], strides = [1, 1]} : vector<1x16xf32> to vector<1x15xf32>
    %265 = vector.broadcast %263 : f32 to vector<1x15xf32>
    %266 = arith.mulf %264, %265 : vector<1x15xf32>
    %267 = arith.addf %262, %266 : vector<1x15xf32>
    %c2_34 = arith.constant 2 : index
    %268 = memref.load %arg2[%c2_34] : memref<128xf32, #tpu.memory_space<smem>>
    %269 = vector.extract_strided_slice %3 {offsets = [0, 1], sizes = [1, 15], strides = [1, 1]} : vector<1x16xf32> to vector<1x15xf32>
    %270 = vector.broadcast %268 : f32 to vector<1x15xf32>
    %271 = arith.mulf %269, %270 : vector<1x15xf32>
    %272 = arith.addf %267, %271 : vector<1x15xf32>
    %c3_35 = arith.constant 3 : index
    %273 = memref.load %arg2[%c3_35] : memref<128xf32, #tpu.memory_space<smem>>
    %274 = vector.extract_strided_slice %4 {offsets = [0, 1], sizes = [1, 15], strides = [1, 1]} : vector<1x16xf32> to vector<1x15xf32>
    %275 = vector.broadcast %273 : f32 to vector<1x15xf32>
    %276 = arith.mulf %274, %275 : vector<1x15xf32>
    %277 = arith.addf %272, %276 : vector<1x15xf32>
    %c4_36 = arith.constant 4 : index
    %278 = memref.load %arg2[%c4_36] : memref<128xf32, #tpu.memory_space<smem>>
    %279 = vector.extract_strided_slice %5 {offsets = [0, 1], sizes = [1, 15], strides = [1, 1]} : vector<1x16xf32> to vector<1x15xf32>
    %280 = vector.broadcast %278 : f32 to vector<1x15xf32>
    %281 = arith.mulf %279, %280 : vector<1x15xf32>
    %282 = arith.addf %277, %281 : vector<1x15xf32>
    %283 = arith.maximumf %256, %282 : vector<1x15xf32>
    %cst_37 = arith.constant 0.000000e+00 : f32
    %284 = vector.broadcast %cst_37 : f32 to vector<1x15xf32>
    %285 = arith.maximumf %283, %284 : vector<1x15xf32>
    %c21_38 = arith.constant 21 : index
    %286 = memref.load %arg2[%c21_38] : memref<128xf32, #tpu.memory_space<smem>>
    %c5_39 = arith.constant 5 : index
    %287 = memref.load %arg2[%c5_39] : memref<128xf32, #tpu.memory_space<smem>>
    %288 = vector.extract_strided_slice %4 {offsets = [0, 0], sizes = [1, 15], strides = [1, 1]} : vector<1x16xf32> to vector<1x15xf32>
    %289 = vector.broadcast %287 : f32 to vector<1x15xf32>
    %290 = arith.mulf %288, %289 : vector<1x15xf32>
    %291 = vector.broadcast %286 : f32 to vector<1x15xf32>
    %292 = arith.addf %290, %291 : vector<1x15xf32>
    %c6_40 = arith.constant 6 : index
    %293 = memref.load %arg2[%c6_40] : memref<128xf32, #tpu.memory_space<smem>>
    %294 = vector.extract_strided_slice %5 {offsets = [0, 0], sizes = [1, 15], strides = [1, 1]} : vector<1x16xf32> to vector<1x15xf32>
    %295 = vector.broadcast %293 : f32 to vector<1x15xf32>
    %296 = arith.mulf %294, %295 : vector<1x15xf32>
    %297 = arith.addf %292, %296 : vector<1x15xf32>
    %c7_41 = arith.constant 7 : index
    %298 = memref.load %arg2[%c7_41] : memref<128xf32, #tpu.memory_space<smem>>
    %299 = vector.extract_strided_slice %2 {offsets = [0, 1], sizes = [1, 15], strides = [1, 1]} : vector<1x16xf32> to vector<1x15xf32>
    %300 = vector.broadcast %298 : f32 to vector<1x15xf32>
    %301 = arith.mulf %299, %300 : vector<1x15xf32>
    %302 = arith.addf %297, %301 : vector<1x15xf32>
    %c8_42 = arith.constant 8 : index
    %303 = memref.load %arg2[%c8_42] : memref<128xf32, #tpu.memory_space<smem>>
    %304 = vector.extract_strided_slice %3 {offsets = [0, 1], sizes = [1, 15], strides = [1, 1]} : vector<1x16xf32> to vector<1x15xf32>
    %305 = vector.broadcast %303 : f32 to vector<1x15xf32>
    %306 = arith.mulf %304, %305 : vector<1x15xf32>
    %307 = arith.addf %302, %306 : vector<1x15xf32>
    %c9_43 = arith.constant 9 : index
    %308 = memref.load %arg2[%c9_43] : memref<128xf32, #tpu.memory_space<smem>>
    %309 = vector.extract_strided_slice %4 {offsets = [0, 1], sizes = [1, 15], strides = [1, 1]} : vector<1x16xf32> to vector<1x15xf32>
    %310 = vector.broadcast %308 : f32 to vector<1x15xf32>
    %311 = arith.mulf %309, %310 : vector<1x15xf32>
    %312 = arith.addf %307, %311 : vector<1x15xf32>
    %c5_44 = arith.constant 5 : index
    %313 = memref.load %arg2[%c5_44] : memref<128xf32, #tpu.memory_space<smem>>
    %314 = vector.extract_strided_slice %5 {offsets = [0, 0], sizes = [1, 15], strides = [1, 1]} : vector<1x16xf32> to vector<1x15xf32>
    %315 = vector.broadcast %313 : f32 to vector<1x15xf32>
    %316 = arith.mulf %314, %315 : vector<1x15xf32>
    %317 = vector.broadcast %286 : f32 to vector<1x15xf32>
    %318 = arith.addf %316, %317 : vector<1x15xf32>
    %c6_45 = arith.constant 6 : index
    %319 = memref.load %arg2[%c6_45] : memref<128xf32, #tpu.memory_space<smem>>
    %320 = vector.extract_strided_slice %2 {offsets = [0, 1], sizes = [1, 15], strides = [1, 1]} : vector<1x16xf32> to vector<1x15xf32>
    %321 = vector.broadcast %319 : f32 to vector<1x15xf32>
    %322 = arith.mulf %320, %321 : vector<1x15xf32>
    %323 = arith.addf %318, %322 : vector<1x15xf32>
    %c7_46 = arith.constant 7 : index
    %324 = memref.load %arg2[%c7_46] : memref<128xf32, #tpu.memory_space<smem>>
    %325 = vector.extract_strided_slice %3 {offsets = [0, 1], sizes = [1, 15], strides = [1, 1]} : vector<1x16xf32> to vector<1x15xf32>
    %326 = vector.broadcast %324 : f32 to vector<1x15xf32>
    %327 = arith.mulf %325, %326 : vector<1x15xf32>
    %328 = arith.addf %323, %327 : vector<1x15xf32>
    %c8_47 = arith.constant 8 : index
    %329 = memref.load %arg2[%c8_47] : memref<128xf32, #tpu.memory_space<smem>>
    %330 = vector.extract_strided_slice %4 {offsets = [0, 1], sizes = [1, 15], strides = [1, 1]} : vector<1x16xf32> to vector<1x15xf32>
    %331 = vector.broadcast %329 : f32 to vector<1x15xf32>
    %332 = arith.mulf %330, %331 : vector<1x15xf32>
    %333 = arith.addf %328, %332 : vector<1x15xf32>
    %c9_48 = arith.constant 9 : index
    %334 = memref.load %arg2[%c9_48] : memref<128xf32, #tpu.memory_space<smem>>
    %335 = vector.extract_strided_slice %5 {offsets = [0, 1], sizes = [1, 15], strides = [1, 1]} : vector<1x16xf32> to vector<1x15xf32>
    %336 = vector.broadcast %334 : f32 to vector<1x15xf32>
    %337 = arith.mulf %335, %336 : vector<1x15xf32>
    %338 = arith.addf %333, %337 : vector<1x15xf32>
    %339 = arith.maximumf %312, %338 : vector<1x15xf32>
    %cst_49 = arith.constant 0.000000e+00 : f32
    %340 = vector.broadcast %cst_49 : f32 to vector<1x15xf32>
    %341 = arith.maximumf %339, %340 : vector<1x15xf32>
    %c22_50 = arith.constant 22 : index
    %342 = memref.load %arg2[%c22_50] : memref<128xf32, #tpu.memory_space<smem>>
    %c10_51 = arith.constant 10 : index
    %343 = memref.load %arg2[%c10_51] : memref<128xf32, #tpu.memory_space<smem>>
    %344 = vector.extract_strided_slice %4 {offsets = [0, 0], sizes = [1, 15], strides = [1, 1]} : vector<1x16xf32> to vector<1x15xf32>
    %345 = vector.broadcast %343 : f32 to vector<1x15xf32>
    %346 = arith.mulf %344, %345 : vector<1x15xf32>
    %347 = vector.broadcast %342 : f32 to vector<1x15xf32>
    %348 = arith.addf %346, %347 : vector<1x15xf32>
    %c11_52 = arith.constant 11 : index
    %349 = memref.load %arg2[%c11_52] : memref<128xf32, #tpu.memory_space<smem>>
    %350 = vector.extract_strided_slice %5 {offsets = [0, 0], sizes = [1, 15], strides = [1, 1]} : vector<1x16xf32> to vector<1x15xf32>
    %351 = vector.broadcast %349 : f32 to vector<1x15xf32>
    %352 = arith.mulf %350, %351 : vector<1x15xf32>
    %353 = arith.addf %348, %352 : vector<1x15xf32>
    %c12_53 = arith.constant 12 : index
    %354 = memref.load %arg2[%c12_53] : memref<128xf32, #tpu.memory_space<smem>>
    %355 = vector.extract_strided_slice %2 {offsets = [0, 1], sizes = [1, 15], strides = [1, 1]} : vector<1x16xf32> to vector<1x15xf32>
    %356 = vector.broadcast %354 : f32 to vector<1x15xf32>
    %357 = arith.mulf %355, %356 : vector<1x15xf32>
    %358 = arith.addf %353, %357 : vector<1x15xf32>
    %c13_54 = arith.constant 13 : index
    %359 = memref.load %arg2[%c13_54] : memref<128xf32, #tpu.memory_space<smem>>
    %360 = vector.extract_strided_slice %3 {offsets = [0, 1], sizes = [1, 15], strides = [1, 1]} : vector<1x16xf32> to vector<1x15xf32>
    %361 = vector.broadcast %359 : f32 to vector<1x15xf32>
    %362 = arith.mulf %360, %361 : vector<1x15xf32>
    %363 = arith.addf %358, %362 : vector<1x15xf32>
    %c14_55 = arith.constant 14 : index
    %364 = memref.load %arg2[%c14_55] : memref<128xf32, #tpu.memory_space<smem>>
    %365 = vector.extract_strided_slice %4 {offsets = [0, 1], sizes = [1, 15], strides = [1, 1]} : vector<1x16xf32> to vector<1x15xf32>
    %366 = vector.broadcast %364 : f32 to vector<1x15xf32>
    %367 = arith.mulf %365, %366 : vector<1x15xf32>
    %368 = arith.addf %363, %367 : vector<1x15xf32>
    %c10_56 = arith.constant 10 : index
    %369 = memref.load %arg2[%c10_56] : memref<128xf32, #tpu.memory_space<smem>>
    %370 = vector.extract_strided_slice %5 {offsets = [0, 0], sizes = [1, 15], strides = [1, 1]} : vector<1x16xf32> to vector<1x15xf32>
    %371 = vector.broadcast %369 : f32 to vector<1x15xf32>
    %372 = arith.mulf %370, %371 : vector<1x15xf32>
    %373 = vector.broadcast %342 : f32 to vector<1x15xf32>
    %374 = arith.addf %372, %373 : vector<1x15xf32>
    %c11_57 = arith.constant 11 : index
    %375 = memref.load %arg2[%c11_57] : memref<128xf32, #tpu.memory_space<smem>>
    %376 = vector.extract_strided_slice %2 {offsets = [0, 1], sizes = [1, 15], strides = [1, 1]} : vector<1x16xf32> to vector<1x15xf32>
    %377 = vector.broadcast %375 : f32 to vector<1x15xf32>
    %378 = arith.mulf %376, %377 : vector<1x15xf32>
    %379 = arith.addf %374, %378 : vector<1x15xf32>
    %c12_58 = arith.constant 12 : index
    %380 = memref.load %arg2[%c12_58] : memref<128xf32, #tpu.memory_space<smem>>
    %381 = vector.extract_strided_slice %3 {offsets = [0, 1], sizes = [1, 15], strides = [1, 1]} : vector<1x16xf32> to vector<1x15xf32>
    %382 = vector.broadcast %380 : f32 to vector<1x15xf32>
    %383 = arith.mulf %381, %382 : vector<1x15xf32>
    %384 = arith.addf %379, %383 : vector<1x15xf32>
    %c13_59 = arith.constant 13 : index
    %385 = memref.load %arg2[%c13_59] : memref<128xf32, #tpu.memory_space<smem>>
    %386 = vector.extract_strided_slice %4 {offsets = [0, 1], sizes = [1, 15], strides = [1, 1]} : vector<1x16xf32> to vector<1x15xf32>
    %387 = vector.broadcast %385 : f32 to vector<1x15xf32>
    %388 = arith.mulf %386, %387 : vector<1x15xf32>
    %389 = arith.addf %384, %388 : vector<1x15xf32>
    %c14_60 = arith.constant 14 : index
    %390 = memref.load %arg2[%c14_60] : memref<128xf32, #tpu.memory_space<smem>>
    %391 = vector.extract_strided_slice %5 {offsets = [0, 1], sizes = [1, 15], strides = [1, 1]} : vector<1x16xf32> to vector<1x15xf32>
    %392 = vector.broadcast %390 : f32 to vector<1x15xf32>
    %393 = arith.mulf %391, %392 : vector<1x15xf32>
    %394 = arith.addf %389, %393 : vector<1x15xf32>
    %395 = arith.maximumf %368, %394 : vector<1x15xf32>
    %cst_61 = arith.constant 0.000000e+00 : f32
    %396 = vector.broadcast %cst_61 : f32 to vector<1x15xf32>
    %397 = arith.maximumf %395, %396 : vector<1x15xf32>
    %c23_62 = arith.constant 23 : index
    %398 = memref.load %arg2[%c23_62] : memref<128xf32, #tpu.memory_space<smem>>
    %c15_63 = arith.constant 15 : index
    %399 = memref.load %arg2[%c15_63] : memref<128xf32, #tpu.memory_space<smem>>
    %400 = vector.extract_strided_slice %4 {offsets = [0, 0], sizes = [1, 15], strides = [1, 1]} : vector<1x16xf32> to vector<1x15xf32>
    %401 = vector.broadcast %399 : f32 to vector<1x15xf32>
    %402 = arith.mulf %400, %401 : vector<1x15xf32>
    %403 = vector.broadcast %398 : f32 to vector<1x15xf32>
    %404 = arith.addf %402, %403 : vector<1x15xf32>
    %c16_64 = arith.constant 16 : index
    %405 = memref.load %arg2[%c16_64] : memref<128xf32, #tpu.memory_space<smem>>
    %406 = vector.extract_strided_slice %5 {offsets = [0, 0], sizes = [1, 15], strides = [1, 1]} : vector<1x16xf32> to vector<1x15xf32>
    %407 = vector.broadcast %405 : f32 to vector<1x15xf32>
    %408 = arith.mulf %406, %407 : vector<1x15xf32>
    %409 = arith.addf %404, %408 : vector<1x15xf32>
    %c17_65 = arith.constant 17 : index
    %410 = memref.load %arg2[%c17_65] : memref<128xf32, #tpu.memory_space<smem>>
    %411 = vector.extract_strided_slice %2 {offsets = [0, 1], sizes = [1, 15], strides = [1, 1]} : vector<1x16xf32> to vector<1x15xf32>
    %412 = vector.broadcast %410 : f32 to vector<1x15xf32>
    %413 = arith.mulf %411, %412 : vector<1x15xf32>
    %414 = arith.addf %409, %413 : vector<1x15xf32>
    %c18_66 = arith.constant 18 : index
    %415 = memref.load %arg2[%c18_66] : memref<128xf32, #tpu.memory_space<smem>>
    %416 = vector.extract_strided_slice %3 {offsets = [0, 1], sizes = [1, 15], strides = [1, 1]} : vector<1x16xf32> to vector<1x15xf32>
    %417 = vector.broadcast %415 : f32 to vector<1x15xf32>
    %418 = arith.mulf %416, %417 : vector<1x15xf32>
    %419 = arith.addf %414, %418 : vector<1x15xf32>
    %c19_67 = arith.constant 19 : index
    %420 = memref.load %arg2[%c19_67] : memref<128xf32, #tpu.memory_space<smem>>
    %421 = vector.extract_strided_slice %4 {offsets = [0, 1], sizes = [1, 15], strides = [1, 1]} : vector<1x16xf32> to vector<1x15xf32>
    %422 = vector.broadcast %420 : f32 to vector<1x15xf32>
    %423 = arith.mulf %421, %422 : vector<1x15xf32>
    %424 = arith.addf %419, %423 : vector<1x15xf32>
    %c15_68 = arith.constant 15 : index
    %425 = memref.load %arg2[%c15_68] : memref<128xf32, #tpu.memory_space<smem>>
    %426 = vector.extract_strided_slice %5 {offsets = [0, 0], sizes = [1, 15], strides = [1, 1]} : vector<1x16xf32> to vector<1x15xf32>
    %427 = vector.broadcast %425 : f32 to vector<1x15xf32>
    %428 = arith.mulf %426, %427 : vector<1x15xf32>
    %429 = vector.broadcast %398 : f32 to vector<1x15xf32>
    %430 = arith.addf %428, %429 : vector<1x15xf32>
    %c16_69 = arith.constant 16 : index
    %431 = memref.load %arg2[%c16_69] : memref<128xf32, #tpu.memory_space<smem>>
    %432 = vector.extract_strided_slice %2 {offsets = [0, 1], sizes = [1, 15], strides = [1, 1]} : vector<1x16xf32> to vector<1x15xf32>
    %433 = vector.broadcast %431 : f32 to vector<1x15xf32>
    %434 = arith.mulf %432, %433 : vector<1x15xf32>
    %435 = arith.addf %430, %434 : vector<1x15xf32>
    %c17_70 = arith.constant 17 : index
    %436 = memref.load %arg2[%c17_70] : memref<128xf32, #tpu.memory_space<smem>>
    %437 = vector.extract_strided_slice %3 {offsets = [0, 1], sizes = [1, 15], strides = [1, 1]} : vector<1x16xf32> to vector<1x15xf32>
    %438 = vector.broadcast %436 : f32 to vector<1x15xf32>
    %439 = arith.mulf %437, %438 : vector<1x15xf32>
    %440 = arith.addf %435, %439 : vector<1x15xf32>
    %c18_71 = arith.constant 18 : index
    %441 = memref.load %arg2[%c18_71] : memref<128xf32, #tpu.memory_space<smem>>
    %442 = vector.extract_strided_slice %4 {offsets = [0, 1], sizes = [1, 15], strides = [1, 1]} : vector<1x16xf32> to vector<1x15xf32>
    %443 = vector.broadcast %441 : f32 to vector<1x15xf32>
    %444 = arith.mulf %442, %443 : vector<1x15xf32>
    %445 = arith.addf %440, %444 : vector<1x15xf32>
    %c19_72 = arith.constant 19 : index
    %446 = memref.load %arg2[%c19_72] : memref<128xf32, #tpu.memory_space<smem>>
    %447 = vector.extract_strided_slice %5 {offsets = [0, 1], sizes = [1, 15], strides = [1, 1]} : vector<1x16xf32> to vector<1x15xf32>
    %448 = vector.broadcast %446 : f32 to vector<1x15xf32>
    %449 = arith.mulf %447, %448 : vector<1x15xf32>
    %450 = arith.addf %445, %449 : vector<1x15xf32>
    %451 = arith.maximumf %424, %450 : vector<1x15xf32>
    %cst_73 = arith.constant 0.000000e+00 : f32
    %452 = vector.broadcast %cst_73 : f32 to vector<1x15xf32>
    %453 = arith.maximumf %451, %452 : vector<1x15xf32>
    %c120 = arith.constant 120 : index
    %454 = memref.load %arg2[%c120] : memref<128xf32, #tpu.memory_space<smem>>
    %c24 = arith.constant 24 : index
    %455 = memref.load %arg2[%c24] : memref<128xf32, #tpu.memory_space<smem>>
    %456 = vector.extract_strided_slice %61 {offsets = [0, 0], sizes = [1, 14], strides = [1, 1]} : vector<1x15xf32> to vector<1x14xf32>
    %457 = vector.broadcast %455 : f32 to vector<1x14xf32>
    %458 = arith.mulf %456, %457 : vector<1x14xf32>
    %459 = vector.broadcast %454 : f32 to vector<1x14xf32>
    %460 = arith.addf %458, %459 : vector<1x14xf32>
    %c25 = arith.constant 25 : index
    %461 = memref.load %arg2[%c25] : memref<128xf32, #tpu.memory_space<smem>>
    %462 = vector.extract_strided_slice %285 {offsets = [0, 0], sizes = [1, 14], strides = [1, 1]} : vector<1x15xf32> to vector<1x14xf32>
    %463 = vector.broadcast %461 : f32 to vector<1x14xf32>
    %464 = arith.mulf %462, %463 : vector<1x14xf32>
    %465 = arith.addf %460, %464 : vector<1x14xf32>
    %c26 = arith.constant 26 : index
    %466 = memref.load %arg2[%c26] : memref<128xf32, #tpu.memory_space<smem>>
    %467 = vector.extract_strided_slice %61 {offsets = [0, 1], sizes = [1, 14], strides = [1, 1]} : vector<1x15xf32> to vector<1x14xf32>
    %468 = vector.broadcast %466 : f32 to vector<1x14xf32>
    %469 = arith.mulf %467, %468 : vector<1x14xf32>
    %470 = arith.addf %465, %469 : vector<1x14xf32>
    %c27 = arith.constant 27 : index
    %471 = memref.load %arg2[%c27] : memref<128xf32, #tpu.memory_space<smem>>
    %472 = vector.extract_strided_slice %117 {offsets = [0, 0], sizes = [1, 14], strides = [1, 1]} : vector<1x15xf32> to vector<1x14xf32>
    %473 = vector.broadcast %471 : f32 to vector<1x14xf32>
    %474 = arith.mulf %472, %473 : vector<1x14xf32>
    %475 = arith.addf %470, %474 : vector<1x14xf32>
    %c28 = arith.constant 28 : index
    %476 = memref.load %arg2[%c28] : memref<128xf32, #tpu.memory_space<smem>>
    %477 = vector.extract_strided_slice %341 {offsets = [0, 0], sizes = [1, 14], strides = [1, 1]} : vector<1x15xf32> to vector<1x14xf32>
    %478 = vector.broadcast %476 : f32 to vector<1x14xf32>
    %479 = arith.mulf %477, %478 : vector<1x14xf32>
    %480 = arith.addf %475, %479 : vector<1x14xf32>
    %c29 = arith.constant 29 : index
    %481 = memref.load %arg2[%c29] : memref<128xf32, #tpu.memory_space<smem>>
    %482 = vector.extract_strided_slice %117 {offsets = [0, 1], sizes = [1, 14], strides = [1, 1]} : vector<1x15xf32> to vector<1x14xf32>
    %483 = vector.broadcast %481 : f32 to vector<1x14xf32>
    %484 = arith.mulf %482, %483 : vector<1x14xf32>
    %485 = arith.addf %480, %484 : vector<1x14xf32>
    %c30 = arith.constant 30 : index
    %486 = memref.load %arg2[%c30] : memref<128xf32, #tpu.memory_space<smem>>
    %487 = vector.extract_strided_slice %173 {offsets = [0, 0], sizes = [1, 14], strides = [1, 1]} : vector<1x15xf32> to vector<1x14xf32>
    %488 = vector.broadcast %486 : f32 to vector<1x14xf32>
    %489 = arith.mulf %487, %488 : vector<1x14xf32>
    %490 = arith.addf %485, %489 : vector<1x14xf32>
    %c31 = arith.constant 31 : index
    %491 = memref.load %arg2[%c31] : memref<128xf32, #tpu.memory_space<smem>>
    %492 = vector.extract_strided_slice %397 {offsets = [0, 0], sizes = [1, 14], strides = [1, 1]} : vector<1x15xf32> to vector<1x14xf32>
    %493 = vector.broadcast %491 : f32 to vector<1x14xf32>
    %494 = arith.mulf %492, %493 : vector<1x14xf32>
    %495 = arith.addf %490, %494 : vector<1x14xf32>
    %c32 = arith.constant 32 : index
    %496 = memref.load %arg2[%c32] : memref<128xf32, #tpu.memory_space<smem>>
    %497 = vector.extract_strided_slice %173 {offsets = [0, 1], sizes = [1, 14], strides = [1, 1]} : vector<1x15xf32> to vector<1x14xf32>
    %498 = vector.broadcast %496 : f32 to vector<1x14xf32>
    %499 = arith.mulf %497, %498 : vector<1x14xf32>
    %500 = arith.addf %495, %499 : vector<1x14xf32>
    %c33 = arith.constant 33 : index
    %501 = memref.load %arg2[%c33] : memref<128xf32, #tpu.memory_space<smem>>
    %502 = vector.extract_strided_slice %229 {offsets = [0, 0], sizes = [1, 14], strides = [1, 1]} : vector<1x15xf32> to vector<1x14xf32>
    %503 = vector.broadcast %501 : f32 to vector<1x14xf32>
    %504 = arith.mulf %502, %503 : vector<1x14xf32>
    %505 = arith.addf %500, %504 : vector<1x14xf32>
    %c34 = arith.constant 34 : index
    %506 = memref.load %arg2[%c34] : memref<128xf32, #tpu.memory_space<smem>>
    %507 = vector.extract_strided_slice %453 {offsets = [0, 0], sizes = [1, 14], strides = [1, 1]} : vector<1x15xf32> to vector<1x14xf32>
    %508 = vector.broadcast %506 : f32 to vector<1x14xf32>
    %509 = arith.mulf %507, %508 : vector<1x14xf32>
    %510 = arith.addf %505, %509 : vector<1x14xf32>
    %c35 = arith.constant 35 : index
    %511 = memref.load %arg2[%c35] : memref<128xf32, #tpu.memory_space<smem>>
    %512 = vector.extract_strided_slice %229 {offsets = [0, 1], sizes = [1, 14], strides = [1, 1]} : vector<1x15xf32> to vector<1x14xf32>
    %513 = vector.broadcast %511 : f32 to vector<1x14xf32>
    %514 = arith.mulf %512, %513 : vector<1x14xf32>
    %515 = arith.addf %510, %514 : vector<1x14xf32>
    %c24_74 = arith.constant 24 : index
    %516 = memref.load %arg2[%c24_74] : memref<128xf32, #tpu.memory_space<smem>>
    %517 = vector.extract_strided_slice %285 {offsets = [0, 0], sizes = [1, 14], strides = [1, 1]} : vector<1x15xf32> to vector<1x14xf32>
    %518 = vector.broadcast %516 : f32 to vector<1x14xf32>
    %519 = arith.mulf %517, %518 : vector<1x14xf32>
    %520 = vector.broadcast %454 : f32 to vector<1x14xf32>
    %521 = arith.addf %519, %520 : vector<1x14xf32>
    %c25_75 = arith.constant 25 : index
    %522 = memref.load %arg2[%c25_75] : memref<128xf32, #tpu.memory_space<smem>>
    %523 = vector.extract_strided_slice %61 {offsets = [0, 1], sizes = [1, 14], strides = [1, 1]} : vector<1x15xf32> to vector<1x14xf32>
    %524 = vector.broadcast %522 : f32 to vector<1x14xf32>
    %525 = arith.mulf %523, %524 : vector<1x14xf32>
    %526 = arith.addf %521, %525 : vector<1x14xf32>
    %c26_76 = arith.constant 26 : index
    %527 = memref.load %arg2[%c26_76] : memref<128xf32, #tpu.memory_space<smem>>
    %528 = vector.extract_strided_slice %285 {offsets = [0, 1], sizes = [1, 14], strides = [1, 1]} : vector<1x15xf32> to vector<1x14xf32>
    %529 = vector.broadcast %527 : f32 to vector<1x14xf32>
    %530 = arith.mulf %528, %529 : vector<1x14xf32>
    %531 = arith.addf %526, %530 : vector<1x14xf32>
    %c27_77 = arith.constant 27 : index
    %532 = memref.load %arg2[%c27_77] : memref<128xf32, #tpu.memory_space<smem>>
    %533 = vector.extract_strided_slice %341 {offsets = [0, 0], sizes = [1, 14], strides = [1, 1]} : vector<1x15xf32> to vector<1x14xf32>
    %534 = vector.broadcast %532 : f32 to vector<1x14xf32>
    %535 = arith.mulf %533, %534 : vector<1x14xf32>
    %536 = arith.addf %531, %535 : vector<1x14xf32>
    %c28_78 = arith.constant 28 : index
    %537 = memref.load %arg2[%c28_78] : memref<128xf32, #tpu.memory_space<smem>>
    %538 = vector.extract_strided_slice %117 {offsets = [0, 1], sizes = [1, 14], strides = [1, 1]} : vector<1x15xf32> to vector<1x14xf32>
    %539 = vector.broadcast %537 : f32 to vector<1x14xf32>
    %540 = arith.mulf %538, %539 : vector<1x14xf32>
    %541 = arith.addf %536, %540 : vector<1x14xf32>
    %c29_79 = arith.constant 29 : index
    %542 = memref.load %arg2[%c29_79] : memref<128xf32, #tpu.memory_space<smem>>
    %543 = vector.extract_strided_slice %341 {offsets = [0, 1], sizes = [1, 14], strides = [1, 1]} : vector<1x15xf32> to vector<1x14xf32>
    %544 = vector.broadcast %542 : f32 to vector<1x14xf32>
    %545 = arith.mulf %543, %544 : vector<1x14xf32>
    %546 = arith.addf %541, %545 : vector<1x14xf32>
    %c30_80 = arith.constant 30 : index
    %547 = memref.load %arg2[%c30_80] : memref<128xf32, #tpu.memory_space<smem>>
    %548 = vector.extract_strided_slice %397 {offsets = [0, 0], sizes = [1, 14], strides = [1, 1]} : vector<1x15xf32> to vector<1x14xf32>
    %549 = vector.broadcast %547 : f32 to vector<1x14xf32>
    %550 = arith.mulf %548, %549 : vector<1x14xf32>
    %551 = arith.addf %546, %550 : vector<1x14xf32>
    %c31_81 = arith.constant 31 : index
    %552 = memref.load %arg2[%c31_81] : memref<128xf32, #tpu.memory_space<smem>>
    %553 = vector.extract_strided_slice %173 {offsets = [0, 1], sizes = [1, 14], strides = [1, 1]} : vector<1x15xf32> to vector<1x14xf32>
    %554 = vector.broadcast %552 : f32 to vector<1x14xf32>
    %555 = arith.mulf %553, %554 : vector<1x14xf32>
    %556 = arith.addf %551, %555 : vector<1x14xf32>
    %c32_82 = arith.constant 32 : index
    %557 = memref.load %arg2[%c32_82] : memref<128xf32, #tpu.memory_space<smem>>
    %558 = vector.extract_strided_slice %397 {offsets = [0, 1], sizes = [1, 14], strides = [1, 1]} : vector<1x15xf32> to vector<1x14xf32>
    %559 = vector.broadcast %557 : f32 to vector<1x14xf32>
    %560 = arith.mulf %558, %559 : vector<1x14xf32>
    %561 = arith.addf %556, %560 : vector<1x14xf32>
    %c33_83 = arith.constant 33 : index
    %562 = memref.load %arg2[%c33_83] : memref<128xf32, #tpu.memory_space<smem>>
    %563 = vector.extract_strided_slice %453 {offsets = [0, 0], sizes = [1, 14], strides = [1, 1]} : vector<1x15xf32> to vector<1x14xf32>
    %564 = vector.broadcast %562 : f32 to vector<1x14xf32>
    %565 = arith.mulf %563, %564 : vector<1x14xf32>
    %566 = arith.addf %561, %565 : vector<1x14xf32>
    %c34_84 = arith.constant 34 : index
    %567 = memref.load %arg2[%c34_84] : memref<128xf32, #tpu.memory_space<smem>>
    %568 = vector.extract_strided_slice %229 {offsets = [0, 1], sizes = [1, 14], strides = [1, 1]} : vector<1x15xf32> to vector<1x14xf32>
    %569 = vector.broadcast %567 : f32 to vector<1x14xf32>
    %570 = arith.mulf %568, %569 : vector<1x14xf32>
    %571 = arith.addf %566, %570 : vector<1x14xf32>
    %c35_85 = arith.constant 35 : index
    %572 = memref.load %arg2[%c35_85] : memref<128xf32, #tpu.memory_space<smem>>
    %573 = vector.extract_strided_slice %453 {offsets = [0, 1], sizes = [1, 14], strides = [1, 1]} : vector<1x15xf32> to vector<1x14xf32>
    %574 = vector.broadcast %572 : f32 to vector<1x14xf32>
    %575 = arith.mulf %573, %574 : vector<1x14xf32>
    %576 = arith.addf %571, %575 : vector<1x14xf32>
    %577 = arith.maximumf %515, %576 : vector<1x14xf32>
    %cst_86 = arith.constant 0.000000e+00 : f32
    %578 = vector.broadcast %cst_86 : f32 to vector<1x14xf32>
    %579 = arith.maximumf %577, %578 : vector<1x14xf32>
    %c0_87 = arith.constant 0 : index
    %c0_88 = arith.constant 0 : index
    %c0_89 = arith.constant 0 : index
    %580 = vector.load %arg3[%c0_87, %c0_88, %c0_89] : memref<1x1x112xf32, #tpu.memory_space<vmem>>, vector<1x1x14xf32>
    %581 = vector.shape_cast %580 : vector<1x1x14xf32> to vector<1x14xf32>
    %582 = vector.shape_cast %579 : vector<1x14xf32> to vector<1x1x14xf32>
    tpu.vector_store %arg3[%c0_87, %c0_88, %c0_89], %582 {strides = array<i32>} : memref<1x1x112xf32, #tpu.memory_space<vmem>>, vector<1x1x14xf32>,
    %c121 = arith.constant 121 : index
    %583 = memref.load %arg2[%c121] : memref<128xf32, #tpu.memory_space<smem>>
    %c36 = arith.constant 36 : index
    %584 = memref.load %arg2[%c36] : memref<128xf32, #tpu.memory_space<smem>>
    %585 = vector.extract_strided_slice %61 {offsets = [0, 0], sizes = [1, 14], strides = [1, 1]} : vector<1x15xf32> to vector<1x14xf32>
    %586 = vector.broadcast %584 : f32 to vector<1x14xf32>
    %587 = arith.mulf %585, %586 : vector<1x14xf32>
    %588 = vector.broadcast %583 : f32 to vector<1x14xf32>
    %589 = arith.addf %587, %588 : vector<1x14xf32>
    %c37 = arith.constant 37 : index
    %590 = memref.load %arg2[%c37] : memref<128xf32, #tpu.memory_space<smem>>
    %591 = vector.extract_strided_slice %285 {offsets = [0, 0], sizes = [1, 14], strides = [1, 1]} : vector<1x15xf32> to vector<1x14xf32>
    %592 = vector.broadcast %590 : f32 to vector<1x14xf32>
    %593 = arith.mulf %591, %592 : vector<1x14xf32>
    %594 = arith.addf %589, %593 : vector<1x14xf32>
    %c38 = arith.constant 38 : index
    %595 = memref.load %arg2[%c38] : memref<128xf32, #tpu.memory_space<smem>>
    %596 = vector.extract_strided_slice %61 {offsets = [0, 1], sizes = [1, 14], strides = [1, 1]} : vector<1x15xf32> to vector<1x14xf32>
    %597 = vector.broadcast %595 : f32 to vector<1x14xf32>
    %598 = arith.mulf %596, %597 : vector<1x14xf32>
    %599 = arith.addf %594, %598 : vector<1x14xf32>
    %c39 = arith.constant 39 : index
    %600 = memref.load %arg2[%c39] : memref<128xf32, #tpu.memory_space<smem>>
    %601 = vector.extract_strided_slice %117 {offsets = [0, 0], sizes = [1, 14], strides = [1, 1]} : vector<1x15xf32> to vector<1x14xf32>
    %602 = vector.broadcast %600 : f32 to vector<1x14xf32>
    %603 = arith.mulf %601, %602 : vector<1x14xf32>
    %604 = arith.addf %599, %603 : vector<1x14xf32>
    %c40 = arith.constant 40 : index
    %605 = memref.load %arg2[%c40] : memref<128xf32, #tpu.memory_space<smem>>
    %606 = vector.extract_strided_slice %341 {offsets = [0, 0], sizes = [1, 14], strides = [1, 1]} : vector<1x15xf32> to vector<1x14xf32>
    %607 = vector.broadcast %605 : f32 to vector<1x14xf32>
    %608 = arith.mulf %606, %607 : vector<1x14xf32>
    %609 = arith.addf %604, %608 : vector<1x14xf32>
    %c41 = arith.constant 41 : index
    %610 = memref.load %arg2[%c41] : memref<128xf32, #tpu.memory_space<smem>>
    %611 = vector.extract_strided_slice %117 {offsets = [0, 1], sizes = [1, 14], strides = [1, 1]} : vector<1x15xf32> to vector<1x14xf32>
    %612 = vector.broadcast %610 : f32 to vector<1x14xf32>
    %613 = arith.mulf %611, %612 : vector<1x14xf32>
    %614 = arith.addf %609, %613 : vector<1x14xf32>
    %c42 = arith.constant 42 : index
    %615 = memref.load %arg2[%c42] : memref<128xf32, #tpu.memory_space<smem>>
    %616 = vector.extract_strided_slice %173 {offsets = [0, 0], sizes = [1, 14], strides = [1, 1]} : vector<1x15xf32> to vector<1x14xf32>
    %617 = vector.broadcast %615 : f32 to vector<1x14xf32>
    %618 = arith.mulf %616, %617 : vector<1x14xf32>
    %619 = arith.addf %614, %618 : vector<1x14xf32>
    %c43 = arith.constant 43 : index
    %620 = memref.load %arg2[%c43] : memref<128xf32, #tpu.memory_space<smem>>
    %621 = vector.extract_strided_slice %397 {offsets = [0, 0], sizes = [1, 14], strides = [1, 1]} : vector<1x15xf32> to vector<1x14xf32>
    %622 = vector.broadcast %620 : f32 to vector<1x14xf32>
    %623 = arith.mulf %621, %622 : vector<1x14xf32>
    %624 = arith.addf %619, %623 : vector<1x14xf32>
    %c44 = arith.constant 44 : index
    %625 = memref.load %arg2[%c44] : memref<128xf32, #tpu.memory_space<smem>>
    %626 = vector.extract_strided_slice %173 {offsets = [0, 1], sizes = [1, 14], strides = [1, 1]} : vector<1x15xf32> to vector<1x14xf32>
    %627 = vector.broadcast %625 : f32 to vector<1x14xf32>
    %628 = arith.mulf %626, %627 : vector<1x14xf32>
    %629 = arith.addf %624, %628 : vector<1x14xf32>
    %c45 = arith.constant 45 : index
    %630 = memref.load %arg2[%c45] : memref<128xf32, #tpu.memory_space<smem>>
    %631 = vector.extract_strided_slice %229 {offsets = [0, 0], sizes = [1, 14], strides = [1, 1]} : vector<1x15xf32> to vector<1x14xf32>
    %632 = vector.broadcast %630 : f32 to vector<1x14xf32>
    %633 = arith.mulf %631, %632 : vector<1x14xf32>
    %634 = arith.addf %629, %633 : vector<1x14xf32>
    %c46 = arith.constant 46 : index
    %635 = memref.load %arg2[%c46] : memref<128xf32, #tpu.memory_space<smem>>
    %636 = vector.extract_strided_slice %453 {offsets = [0, 0], sizes = [1, 14], strides = [1, 1]} : vector<1x15xf32> to vector<1x14xf32>
    %637 = vector.broadcast %635 : f32 to vector<1x14xf32>
    %638 = arith.mulf %636, %637 : vector<1x14xf32>
    %639 = arith.addf %634, %638 : vector<1x14xf32>
    %c47 = arith.constant 47 : index
    %640 = memref.load %arg2[%c47] : memref<128xf32, #tpu.memory_space<smem>>
    %641 = vector.extract_strided_slice %229 {offsets = [0, 1], sizes = [1, 14], strides = [1, 1]} : vector<1x15xf32> to vector<1x14xf32>
    %642 = vector.broadcast %640 : f32 to vector<1x14xf32>
    %643 = arith.mulf %641, %642 : vector<1x14xf32>
    %644 = arith.addf %639, %643 : vector<1x14xf32>
    %c36_90 = arith.constant 36 : index
    %645 = memref.load %arg2[%c36_90] : memref<128xf32, #tpu.memory_space<smem>>
    %646 = vector.extract_strided_slice %285 {offsets = [0, 0], sizes = [1, 14], strides = [1, 1]} : vector<1x15xf32> to vector<1x14xf32>
    %647 = vector.broadcast %645 : f32 to vector<1x14xf32>
    %648 = arith.mulf %646, %647 : vector<1x14xf32>
    %649 = vector.broadcast %583 : f32 to vector<1x14xf32>
    %650 = arith.addf %648, %649 : vector<1x14xf32>
    %c37_91 = arith.constant 37 : index
    %651 = memref.load %arg2[%c37_91] : memref<128xf32, #tpu.memory_space<smem>>
    %652 = vector.extract_strided_slice %61 {offsets = [0, 1], sizes = [1, 14], strides = [1, 1]} : vector<1x15xf32> to vector<1x14xf32>
    %653 = vector.broadcast %651 : f32 to vector<1x14xf32>
    %654 = arith.mulf %652, %653 : vector<1x14xf32>
    %655 = arith.addf %650, %654 : vector<1x14xf32>
    %c38_92 = arith.constant 38 : index
    %656 = memref.load %arg2[%c38_92] : memref<128xf32, #tpu.memory_space<smem>>
    %657 = vector.extract_strided_slice %285 {offsets = [0, 1], sizes = [1, 14], strides = [1, 1]} : vector<1x15xf32> to vector<1x14xf32>
    %658 = vector.broadcast %656 : f32 to vector<1x14xf32>
    %659 = arith.mulf %657, %658 : vector<1x14xf32>
    %660 = arith.addf %655, %659 : vector<1x14xf32>
    %c39_93 = arith.constant 39 : index
    %661 = memref.load %arg2[%c39_93] : memref<128xf32, #tpu.memory_space<smem>>
    %662 = vector.extract_strided_slice %341 {offsets = [0, 0], sizes = [1, 14], strides = [1, 1]} : vector<1x15xf32> to vector<1x14xf32>
    %663 = vector.broadcast %661 : f32 to vector<1x14xf32>
    %664 = arith.mulf %662, %663 : vector<1x14xf32>
    %665 = arith.addf %660, %664 : vector<1x14xf32>
    %c40_94 = arith.constant 40 : index
    %666 = memref.load %arg2[%c40_94] : memref<128xf32, #tpu.memory_space<smem>>
    %667 = vector.extract_strided_slice %117 {offsets = [0, 1], sizes = [1, 14], strides = [1, 1]} : vector<1x15xf32> to vector<1x14xf32>
    %668 = vector.broadcast %666 : f32 to vector<1x14xf32>
    %669 = arith.mulf %667, %668 : vector<1x14xf32>
    %670 = arith.addf %665, %669 : vector<1x14xf32>
    %c41_95 = arith.constant 41 : index
    %671 = memref.load %arg2[%c41_95] : memref<128xf32, #tpu.memory_space<smem>>
    %672 = vector.extract_strided_slice %341 {offsets = [0, 1], sizes = [1, 14], strides = [1, 1]} : vector<1x15xf32> to vector<1x14xf32>
    %673 = vector.broadcast %671 : f32 to vector<1x14xf32>
    %674 = arith.mulf %672, %673 : vector<1x14xf32>
    %675 = arith.addf %670, %674 : vector<1x14xf32>
    %c42_96 = arith.constant 42 : index
    %676 = memref.load %arg2[%c42_96] : memref<128xf32, #tpu.memory_space<smem>>
    %677 = vector.extract_strided_slice %397 {offsets = [0, 0], sizes = [1, 14], strides = [1, 1]} : vector<1x15xf32> to vector<1x14xf32>
    %678 = vector.broadcast %676 : f32 to vector<1x14xf32>
    %679 = arith.mulf %677, %678 : vector<1x14xf32>
    %680 = arith.addf %675, %679 : vector<1x14xf32>
    %c43_97 = arith.constant 43 : index
    %681 = memref.load %arg2[%c43_97] : memref<128xf32, #tpu.memory_space<smem>>
    %682 = vector.extract_strided_slice %173 {offsets = [0, 1], sizes = [1, 14], strides = [1, 1]} : vector<1x15xf32> to vector<1x14xf32>
    %683 = vector.broadcast %681 : f32 to vector<1x14xf32>
    %684 = arith.mulf %682, %683 : vector<1x14xf32>
    %685 = arith.addf %680, %684 : vector<1x14xf32>
    %c44_98 = arith.constant 44 : index
    %686 = memref.load %arg2[%c44_98] : memref<128xf32, #tpu.memory_space<smem>>
    %687 = vector.extract_strided_slice %397 {offsets = [0, 1], sizes = [1, 14], strides = [1, 1]} : vector<1x15xf32> to vector<1x14xf32>
    %688 = vector.broadcast %686 : f32 to vector<1x14xf32>
    %689 = arith.mulf %687, %688 : vector<1x14xf32>
    %690 = arith.addf %685, %689 : vector<1x14xf32>
    %c45_99 = arith.constant 45 : index
    %691 = memref.load %arg2[%c45_99] : memref<128xf32, #tpu.memory_space<smem>>
    %692 = vector.extract_strided_slice %453 {offsets = [0, 0], sizes = [1, 14], strides = [1, 1]} : vector<1x15xf32> to vector<1x14xf32>
    %693 = vector.broadcast %691 : f32 to vector<1x14xf32>
    %694 = arith.mulf %692, %693 : vector<1x14xf32>
    %695 = arith.addf %690, %694 : vector<1x14xf32>
    %c46_100 = arith.constant 46 : index
    %696 = memref.load %arg2[%c46_100] : memref<128xf32, #tpu.memory_space<smem>>
    %697 = vector.extract_strided_slice %229 {offsets = [0, 1], sizes = [1, 14], strides = [1, 1]} : vector<1x15xf32> to vector<1x14xf32>
    %698 = vector.broadcast %696 : f32 to vector<1x14xf32>
    %699 = arith.mulf %697, %698 : vector<1x14xf32>
    %700 = arith.addf %695, %699 : vector<1x14xf32>
    %c47_101 = arith.constant 47 : index
    %701 = memref.load %arg2[%c47_101] : memref<128xf32, #tpu.memory_space<smem>>
    %702 = vector.extract_strided_slice %453 {offsets = [0, 1], sizes = [1, 14], strides = [1, 1]} : vector<1x15xf32> to vector<1x14xf32>
    %703 = vector.broadcast %701 : f32 to vector<1x14xf32>
    %704 = arith.mulf %702, %703 : vector<1x14xf32>
    %705 = arith.addf %700, %704 : vector<1x14xf32>
    %706 = arith.maximumf %644, %705 : vector<1x14xf32>
    %cst_102 = arith.constant 0.000000e+00 : f32
    %707 = vector.broadcast %cst_102 : f32 to vector<1x14xf32>
    %708 = arith.maximumf %706, %707 : vector<1x14xf32>
    %c0_103 = arith.constant 0 : index
    %c0_104 = arith.constant 0 : index
    %c14_105 = arith.constant 14 : index
    %709 = vector.load %arg3[%c0_103, %c0_104, %c14_105] : memref<1x1x112xf32, #tpu.memory_space<vmem>>, vector<1x1x14xf32>
    %710 = vector.shape_cast %709 : vector<1x1x14xf32> to vector<1x14xf32>
    %711 = vector.shape_cast %708 : vector<1x14xf32> to vector<1x1x14xf32>
    tpu.vector_store %arg3[%c0_103, %c0_104, %c14_105], %711 {strides = array<i32>} : memref<1x1x112xf32, #tpu.memory_space<vmem>>, vector<1x1x14xf32>,
    %c122 = arith.constant 122 : index
    %712 = memref.load %arg2[%c122] : memref<128xf32, #tpu.memory_space<smem>>
    %c48 = arith.constant 48 : index
    %713 = memref.load %arg2[%c48] : memref<128xf32, #tpu.memory_space<smem>>
    %714 = vector.extract_strided_slice %61 {offsets = [0, 0], sizes = [1, 14], strides = [1, 1]} : vector<1x15xf32> to vector<1x14xf32>
    %715 = vector.broadcast %713 : f32 to vector<1x14xf32>
    %716 = arith.mulf %714, %715 : vector<1x14xf32>
    %717 = vector.broadcast %712 : f32 to vector<1x14xf32>
    %718 = arith.addf %716, %717 : vector<1x14xf32>
    %c49 = arith.constant 49 : index
    %719 = memref.load %arg2[%c49] : memref<128xf32, #tpu.memory_space<smem>>
    %720 = vector.extract_strided_slice %285 {offsets = [0, 0], sizes = [1, 14], strides = [1, 1]} : vector<1x15xf32> to vector<1x14xf32>
    %721 = vector.broadcast %719 : f32 to vector<1x14xf32>
    %722 = arith.mulf %720, %721 : vector<1x14xf32>
    %723 = arith.addf %718, %722 : vector<1x14xf32>
    %c50 = arith.constant 50 : index
    %724 = memref.load %arg2[%c50] : memref<128xf32, #tpu.memory_space<smem>>
    %725 = vector.extract_strided_slice %61 {offsets = [0, 1], sizes = [1, 14], strides = [1, 1]} : vector<1x15xf32> to vector<1x14xf32>
    %726 = vector.broadcast %724 : f32 to vector<1x14xf32>
    %727 = arith.mulf %725, %726 : vector<1x14xf32>
    %728 = arith.addf %723, %727 : vector<1x14xf32>
    %c51 = arith.constant 51 : index
    %729 = memref.load %arg2[%c51] : memref<128xf32, #tpu.memory_space<smem>>
    %730 = vector.extract_strided_slice %117 {offsets = [0, 0], sizes = [1, 14], strides = [1, 1]} : vector<1x15xf32> to vector<1x14xf32>
    %731 = vector.broadcast %729 : f32 to vector<1x14xf32>
    %732 = arith.mulf %730, %731 : vector<1x14xf32>
    %733 = arith.addf %728, %732 : vector<1x14xf32>
    %c52 = arith.constant 52 : index
    %734 = memref.load %arg2[%c52] : memref<128xf32, #tpu.memory_space<smem>>
    %735 = vector.extract_strided_slice %341 {offsets = [0, 0], sizes = [1, 14], strides = [1, 1]} : vector<1x15xf32> to vector<1x14xf32>
    %736 = vector.broadcast %734 : f32 to vector<1x14xf32>
    %737 = arith.mulf %735, %736 : vector<1x14xf32>
    %738 = arith.addf %733, %737 : vector<1x14xf32>
    %c53 = arith.constant 53 : index
    %739 = memref.load %arg2[%c53] : memref<128xf32, #tpu.memory_space<smem>>
    %740 = vector.extract_strided_slice %117 {offsets = [0, 1], sizes = [1, 14], strides = [1, 1]} : vector<1x15xf32> to vector<1x14xf32>
    %741 = vector.broadcast %739 : f32 to vector<1x14xf32>
    %742 = arith.mulf %740, %741 : vector<1x14xf32>
    %743 = arith.addf %738, %742 : vector<1x14xf32>
    %c54 = arith.constant 54 : index
    %744 = memref.load %arg2[%c54] : memref<128xf32, #tpu.memory_space<smem>>
    %745 = vector.extract_strided_slice %173 {offsets = [0, 0], sizes = [1, 14], strides = [1, 1]} : vector<1x15xf32> to vector<1x14xf32>
    %746 = vector.broadcast %744 : f32 to vector<1x14xf32>
    %747 = arith.mulf %745, %746 : vector<1x14xf32>
    %748 = arith.addf %743, %747 : vector<1x14xf32>
    %c55 = arith.constant 55 : index
    %749 = memref.load %arg2[%c55] : memref<128xf32, #tpu.memory_space<smem>>
    %750 = vector.extract_strided_slice %397 {offsets = [0, 0], sizes = [1, 14], strides = [1, 1]} : vector<1x15xf32> to vector<1x14xf32>
    %751 = vector.broadcast %749 : f32 to vector<1x14xf32>
    %752 = arith.mulf %750, %751 : vector<1x14xf32>
    %753 = arith.addf %748, %752 : vector<1x14xf32>
    %c56 = arith.constant 56 : index
    %754 = memref.load %arg2[%c56] : memref<128xf32, #tpu.memory_space<smem>>
    %755 = vector.extract_strided_slice %173 {offsets = [0, 1], sizes = [1, 14], strides = [1, 1]} : vector<1x15xf32> to vector<1x14xf32>
    %756 = vector.broadcast %754 : f32 to vector<1x14xf32>
    %757 = arith.mulf %755, %756 : vector<1x14xf32>
    %758 = arith.addf %753, %757 : vector<1x14xf32>
    %c57 = arith.constant 57 : index
    %759 = memref.load %arg2[%c57] : memref<128xf32, #tpu.memory_space<smem>>
    %760 = vector.extract_strided_slice %229 {offsets = [0, 0], sizes = [1, 14], strides = [1, 1]} : vector<1x15xf32> to vector<1x14xf32>
    %761 = vector.broadcast %759 : f32 to vector<1x14xf32>
    %762 = arith.mulf %760, %761 : vector<1x14xf32>
    %763 = arith.addf %758, %762 : vector<1x14xf32>
    %c58 = arith.constant 58 : index
    %764 = memref.load %arg2[%c58] : memref<128xf32, #tpu.memory_space<smem>>
    %765 = vector.extract_strided_slice %453 {offsets = [0, 0], sizes = [1, 14], strides = [1, 1]} : vector<1x15xf32> to vector<1x14xf32>
    %766 = vector.broadcast %764 : f32 to vector<1x14xf32>
    %767 = arith.mulf %765, %766 : vector<1x14xf32>
    %768 = arith.addf %763, %767 : vector<1x14xf32>
    %c59 = arith.constant 59 : index
    %769 = memref.load %arg2[%c59] : memref<128xf32, #tpu.memory_space<smem>>
    %770 = vector.extract_strided_slice %229 {offsets = [0, 1], sizes = [1, 14], strides = [1, 1]} : vector<1x15xf32> to vector<1x14xf32>
    %771 = vector.broadcast %769 : f32 to vector<1x14xf32>
    %772 = arith.mulf %770, %771 : vector<1x14xf32>
    %773 = arith.addf %768, %772 : vector<1x14xf32>
    %c48_106 = arith.constant 48 : index
    %774 = memref.load %arg2[%c48_106] : memref<128xf32, #tpu.memory_space<smem>>
    %775 = vector.extract_strided_slice %285 {offsets = [0, 0], sizes = [1, 14], strides = [1, 1]} : vector<1x15xf32> to vector<1x14xf32>
    %776 = vector.broadcast %774 : f32 to vector<1x14xf32>
    %777 = arith.mulf %775, %776 : vector<1x14xf32>
    %778 = vector.broadcast %712 : f32 to vector<1x14xf32>
    %779 = arith.addf %777, %778 : vector<1x14xf32>
    %c49_107 = arith.constant 49 : index
    %780 = memref.load %arg2[%c49_107] : memref<128xf32, #tpu.memory_space<smem>>
    %781 = vector.extract_strided_slice %61 {offsets = [0, 1], sizes = [1, 14], strides = [1, 1]} : vector<1x15xf32> to vector<1x14xf32>
    %782 = vector.broadcast %780 : f32 to vector<1x14xf32>
    %783 = arith.mulf %781, %782 : vector<1x14xf32>
    %784 = arith.addf %779, %783 : vector<1x14xf32>
    %c50_108 = arith.constant 50 : index
    %785 = memref.load %arg2[%c50_108] : memref<128xf32, #tpu.memory_space<smem>>
    %786 = vector.extract_strided_slice %285 {offsets = [0, 1], sizes = [1, 14], strides = [1, 1]} : vector<1x15xf32> to vector<1x14xf32>
    %787 = vector.broadcast %785 : f32 to vector<1x14xf32>
    %788 = arith.mulf %786, %787 : vector<1x14xf32>
    %789 = arith.addf %784, %788 : vector<1x14xf32>
    %c51_109 = arith.constant 51 : index
    %790 = memref.load %arg2[%c51_109] : memref<128xf32, #tpu.memory_space<smem>>
    %791 = vector.extract_strided_slice %341 {offsets = [0, 0], sizes = [1, 14], strides = [1, 1]} : vector<1x15xf32> to vector<1x14xf32>
    %792 = vector.broadcast %790 : f32 to vector<1x14xf32>
    %793 = arith.mulf %791, %792 : vector<1x14xf32>
    %794 = arith.addf %789, %793 : vector<1x14xf32>
    %c52_110 = arith.constant 52 : index
    %795 = memref.load %arg2[%c52_110] : memref<128xf32, #tpu.memory_space<smem>>
    %796 = vector.extract_strided_slice %117 {offsets = [0, 1], sizes = [1, 14], strides = [1, 1]} : vector<1x15xf32> to vector<1x14xf32>
    %797 = vector.broadcast %795 : f32 to vector<1x14xf32>
    %798 = arith.mulf %796, %797 : vector<1x14xf32>
    %799 = arith.addf %794, %798 : vector<1x14xf32>
    %c53_111 = arith.constant 53 : index
    %800 = memref.load %arg2[%c53_111] : memref<128xf32, #tpu.memory_space<smem>>
    %801 = vector.extract_strided_slice %341 {offsets = [0, 1], sizes = [1, 14], strides = [1, 1]} : vector<1x15xf32> to vector<1x14xf32>
    %802 = vector.broadcast %800 : f32 to vector<1x14xf32>
    %803 = arith.mulf %801, %802 : vector<1x14xf32>
    %804 = arith.addf %799, %803 : vector<1x14xf32>
    %c54_112 = arith.constant 54 : index
    %805 = memref.load %arg2[%c54_112] : memref<128xf32, #tpu.memory_space<smem>>
    %806 = vector.extract_strided_slice %397 {offsets = [0, 0], sizes = [1, 14], strides = [1, 1]} : vector<1x15xf32> to vector<1x14xf32>
    %807 = vector.broadcast %805 : f32 to vector<1x14xf32>
    %808 = arith.mulf %806, %807 : vector<1x14xf32>
    %809 = arith.addf %804, %808 : vector<1x14xf32>
    %c55_113 = arith.constant 55 : index
    %810 = memref.load %arg2[%c55_113] : memref<128xf32, #tpu.memory_space<smem>>
    %811 = vector.extract_strided_slice %173 {offsets = [0, 1], sizes = [1, 14], strides = [1, 1]} : vector<1x15xf32> to vector<1x14xf32>
    %812 = vector.broadcast %810 : f32 to vector<1x14xf32>
    %813 = arith.mulf %811, %812 : vector<1x14xf32>
    %814 = arith.addf %809, %813 : vector<1x14xf32>
    %c56_114 = arith.constant 56 : index
    %815 = memref.load %arg2[%c56_114] : memref<128xf32, #tpu.memory_space<smem>>
    %816 = vector.extract_strided_slice %397 {offsets = [0, 1], sizes = [1, 14], strides = [1, 1]} : vector<1x15xf32> to vector<1x14xf32>
    %817 = vector.broadcast %815 : f32 to vector<1x14xf32>
    %818 = arith.mulf %816, %817 : vector<1x14xf32>
    %819 = arith.addf %814, %818 : vector<1x14xf32>
    %c57_115 = arith.constant 57 : index
    %820 = memref.load %arg2[%c57_115] : memref<128xf32, #tpu.memory_space<smem>>
    %821 = vector.extract_strided_slice %453 {offsets = [0, 0], sizes = [1, 14], strides = [1, 1]} : vector<1x15xf32> to vector<1x14xf32>
    %822 = vector.broadcast %820 : f32 to vector<1x14xf32>
    %823 = arith.mulf %821, %822 : vector<1x14xf32>
    %824 = arith.addf %819, %823 : vector<1x14xf32>
    %c58_116 = arith.constant 58 : index
    %825 = memref.load %arg2[%c58_116] : memref<128xf32, #tpu.memory_space<smem>>
    %826 = vector.extract_strided_slice %229 {offsets = [0, 1], sizes = [1, 14], strides = [1, 1]} : vector<1x15xf32> to vector<1x14xf32>
    %827 = vector.broadcast %825 : f32 to vector<1x14xf32>
    %828 = arith.mulf %826, %827 : vector<1x14xf32>
    %829 = arith.addf %824, %828 : vector<1x14xf32>
    %c59_117 = arith.constant 59 : index
    %830 = memref.load %arg2[%c59_117] : memref<128xf32, #tpu.memory_space<smem>>
    %831 = vector.extract_strided_slice %453 {offsets = [0, 1], sizes = [1, 14], strides = [1, 1]} : vector<1x15xf32> to vector<1x14xf32>
    %832 = vector.broadcast %830 : f32 to vector<1x14xf32>
    %833 = arith.mulf %831, %832 : vector<1x14xf32>
    %834 = arith.addf %829, %833 : vector<1x14xf32>
    %835 = arith.maximumf %773, %834 : vector<1x14xf32>
    %cst_118 = arith.constant 0.000000e+00 : f32
    %836 = vector.broadcast %cst_118 : f32 to vector<1x14xf32>
    %837 = arith.maximumf %835, %836 : vector<1x14xf32>
    %c0_119 = arith.constant 0 : index
    %c0_120 = arith.constant 0 : index
    %c28_121 = arith.constant 28 : index
    %838 = vector.load %arg3[%c0_119, %c0_120, %c28_121] : memref<1x1x112xf32, #tpu.memory_space<vmem>>, vector<1x1x14xf32>
    %839 = vector.shape_cast %838 : vector<1x1x14xf32> to vector<1x14xf32>
    %840 = vector.shape_cast %837 : vector<1x14xf32> to vector<1x1x14xf32>
    tpu.vector_store %arg3[%c0_119, %c0_120, %c28_121], %840 {strides = array<i32>} : memref<1x1x112xf32, #tpu.memory_space<vmem>>, vector<1x1x14xf32>,
    %c123 = arith.constant 123 : index
    %841 = memref.load %arg2[%c123] : memref<128xf32, #tpu.memory_space<smem>>
    %c60 = arith.constant 60 : index
    %842 = memref.load %arg2[%c60] : memref<128xf32, #tpu.memory_space<smem>>
    %843 = vector.extract_strided_slice %61 {offsets = [0, 0], sizes = [1, 14], strides = [1, 1]} : vector<1x15xf32> to vector<1x14xf32>
    %844 = vector.broadcast %842 : f32 to vector<1x14xf32>
    %845 = arith.mulf %843, %844 : vector<1x14xf32>
    %846 = vector.broadcast %841 : f32 to vector<1x14xf32>
    %847 = arith.addf %845, %846 : vector<1x14xf32>
    %c61 = arith.constant 61 : index
    %848 = memref.load %arg2[%c61] : memref<128xf32, #tpu.memory_space<smem>>
    %849 = vector.extract_strided_slice %285 {offsets = [0, 0], sizes = [1, 14], strides = [1, 1]} : vector<1x15xf32> to vector<1x14xf32>
    %850 = vector.broadcast %848 : f32 to vector<1x14xf32>
    %851 = arith.mulf %849, %850 : vector<1x14xf32>
    %852 = arith.addf %847, %851 : vector<1x14xf32>
    %c62 = arith.constant 62 : index
    %853 = memref.load %arg2[%c62] : memref<128xf32, #tpu.memory_space<smem>>
    %854 = vector.extract_strided_slice %61 {offsets = [0, 1], sizes = [1, 14], strides = [1, 1]} : vector<1x15xf32> to vector<1x14xf32>
    %855 = vector.broadcast %853 : f32 to vector<1x14xf32>
    %856 = arith.mulf %854, %855 : vector<1x14xf32>
    %857 = arith.addf %852, %856 : vector<1x14xf32>
    %c63 = arith.constant 63 : index
    %858 = memref.load %arg2[%c63] : memref<128xf32, #tpu.memory_space<smem>>
    %859 = vector.extract_strided_slice %117 {offsets = [0, 0], sizes = [1, 14], strides = [1, 1]} : vector<1x15xf32> to vector<1x14xf32>
    %860 = vector.broadcast %858 : f32 to vector<1x14xf32>
    %861 = arith.mulf %859, %860 : vector<1x14xf32>
    %862 = arith.addf %857, %861 : vector<1x14xf32>
    %c64 = arith.constant 64 : index
    %863 = memref.load %arg2[%c64] : memref<128xf32, #tpu.memory_space<smem>>
    %864 = vector.extract_strided_slice %341 {offsets = [0, 0], sizes = [1, 14], strides = [1, 1]} : vector<1x15xf32> to vector<1x14xf32>
    %865 = vector.broadcast %863 : f32 to vector<1x14xf32>
    %866 = arith.mulf %864, %865 : vector<1x14xf32>
    %867 = arith.addf %862, %866 : vector<1x14xf32>
    %c65 = arith.constant 65 : index
    %868 = memref.load %arg2[%c65] : memref<128xf32, #tpu.memory_space<smem>>
    %869 = vector.extract_strided_slice %117 {offsets = [0, 1], sizes = [1, 14], strides = [1, 1]} : vector<1x15xf32> to vector<1x14xf32>
    %870 = vector.broadcast %868 : f32 to vector<1x14xf32>
    %871 = arith.mulf %869, %870 : vector<1x14xf32>
    %872 = arith.addf %867, %871 : vector<1x14xf32>
    %c66 = arith.constant 66 : index
    %873 = memref.load %arg2[%c66] : memref<128xf32, #tpu.memory_space<smem>>
    %874 = vector.extract_strided_slice %173 {offsets = [0, 0], sizes = [1, 14], strides = [1, 1]} : vector<1x15xf32> to vector<1x14xf32>
    %875 = vector.broadcast %873 : f32 to vector<1x14xf32>
    %876 = arith.mulf %874, %875 : vector<1x14xf32>
    %877 = arith.addf %872, %876 : vector<1x14xf32>
    %c67 = arith.constant 67 : index
    %878 = memref.load %arg2[%c67] : memref<128xf32, #tpu.memory_space<smem>>
    %879 = vector.extract_strided_slice %397 {offsets = [0, 0], sizes = [1, 14], strides = [1, 1]} : vector<1x15xf32> to vector<1x14xf32>
    %880 = vector.broadcast %878 : f32 to vector<1x14xf32>
    %881 = arith.mulf %879, %880 : vector<1x14xf32>
    %882 = arith.addf %877, %881 : vector<1x14xf32>
    %c68 = arith.constant 68 : index
    %883 = memref.load %arg2[%c68] : memref<128xf32, #tpu.memory_space<smem>>
    %884 = vector.extract_strided_slice %173 {offsets = [0, 1], sizes = [1, 14], strides = [1, 1]} : vector<1x15xf32> to vector<1x14xf32>
    %885 = vector.broadcast %883 : f32 to vector<1x14xf32>
    %886 = arith.mulf %884, %885 : vector<1x14xf32>
    %887 = arith.addf %882, %886 : vector<1x14xf32>
    %c69 = arith.constant 69 : index
    %888 = memref.load %arg2[%c69] : memref<128xf32, #tpu.memory_space<smem>>
    %889 = vector.extract_strided_slice %229 {offsets = [0, 0], sizes = [1, 14], strides = [1, 1]} : vector<1x15xf32> to vector<1x14xf32>
    %890 = vector.broadcast %888 : f32 to vector<1x14xf32>
    %891 = arith.mulf %889, %890 : vector<1x14xf32>
    %892 = arith.addf %887, %891 : vector<1x14xf32>
    %c70 = arith.constant 70 : index
    %893 = memref.load %arg2[%c70] : memref<128xf32, #tpu.memory_space<smem>>
    %894 = vector.extract_strided_slice %453 {offsets = [0, 0], sizes = [1, 14], strides = [1, 1]} : vector<1x15xf32> to vector<1x14xf32>
    %895 = vector.broadcast %893 : f32 to vector<1x14xf32>
    %896 = arith.mulf %894, %895 : vector<1x14xf32>
    %897 = arith.addf %892, %896 : vector<1x14xf32>
    %c71 = arith.constant 71 : index
    %898 = memref.load %arg2[%c71] : memref<128xf32, #tpu.memory_space<smem>>
    %899 = vector.extract_strided_slice %229 {offsets = [0, 1], sizes = [1, 14], strides = [1, 1]} : vector<1x15xf32> to vector<1x14xf32>
    %900 = vector.broadcast %898 : f32 to vector<1x14xf32>
    %901 = arith.mulf %899, %900 : vector<1x14xf32>
    %902 = arith.addf %897, %901 : vector<1x14xf32>
    %c60_122 = arith.constant 60 : index
    %903 = memref.load %arg2[%c60_122] : memref<128xf32, #tpu.memory_space<smem>>
    %904 = vector.extract_strided_slice %285 {offsets = [0, 0], sizes = [1, 14], strides = [1, 1]} : vector<1x15xf32> to vector<1x14xf32>
    %905 = vector.broadcast %903 : f32 to vector<1x14xf32>
    %906 = arith.mulf %904, %905 : vector<1x14xf32>
    %907 = vector.broadcast %841 : f32 to vector<1x14xf32>
    %908 = arith.addf %906, %907 : vector<1x14xf32>
    %c61_123 = arith.constant 61 : index
    %909 = memref.load %arg2[%c61_123] : memref<128xf32, #tpu.memory_space<smem>>
    %910 = vector.extract_strided_slice %61 {offsets = [0, 1], sizes = [1, 14], strides = [1, 1]} : vector<1x15xf32> to vector<1x14xf32>
    %911 = vector.broadcast %909 : f32 to vector<1x14xf32>
    %912 = arith.mulf %910, %911 : vector<1x14xf32>
    %913 = arith.addf %908, %912 : vector<1x14xf32>
    %c62_124 = arith.constant 62 : index
    %914 = memref.load %arg2[%c62_124] : memref<128xf32, #tpu.memory_space<smem>>
    %915 = vector.extract_strided_slice %285 {offsets = [0, 1], sizes = [1, 14], strides = [1, 1]} : vector<1x15xf32> to vector<1x14xf32>
    %916 = vector.broadcast %914 : f32 to vector<1x14xf32>
    %917 = arith.mulf %915, %916 : vector<1x14xf32>
    %918 = arith.addf %913, %917 : vector<1x14xf32>
    %c63_125 = arith.constant 63 : index
    %919 = memref.load %arg2[%c63_125] : memref<128xf32, #tpu.memory_space<smem>>
    %920 = vector.extract_strided_slice %341 {offsets = [0, 0], sizes = [1, 14], strides = [1, 1]} : vector<1x15xf32> to vector<1x14xf32>
    %921 = vector.broadcast %919 : f32 to vector<1x14xf32>
    %922 = arith.mulf %920, %921 : vector<1x14xf32>
    %923 = arith.addf %918, %922 : vector<1x14xf32>
    %c64_126 = arith.constant 64 : index
    %924 = memref.load %arg2[%c64_126] : memref<128xf32, #tpu.memory_space<smem>>
    %925 = vector.extract_strided_slice %117 {offsets = [0, 1], sizes = [1, 14], strides = [1, 1]} : vector<1x15xf32> to vector<1x14xf32>
    %926 = vector.broadcast %924 : f32 to vector<1x14xf32>
    %927 = arith.mulf %925, %926 : vector<1x14xf32>
    %928 = arith.addf %923, %927 : vector<1x14xf32>
    %c65_127 = arith.constant 65 : index
    %929 = memref.load %arg2[%c65_127] : memref<128xf32, #tpu.memory_space<smem>>
    %930 = vector.extract_strided_slice %341 {offsets = [0, 1], sizes = [1, 14], strides = [1, 1]} : vector<1x15xf32> to vector<1x14xf32>
    %931 = vector.broadcast %929 : f32 to vector<1x14xf32>
    %932 = arith.mulf %930, %931 : vector<1x14xf32>
    %933 = arith.addf %928, %932 : vector<1x14xf32>
    %c66_128 = arith.constant 66 : index
    %934 = memref.load %arg2[%c66_128] : memref<128xf32, #tpu.memory_space<smem>>
    %935 = vector.extract_strided_slice %397 {offsets = [0, 0], sizes = [1, 14], strides = [1, 1]} : vector<1x15xf32> to vector<1x14xf32>
    %936 = vector.broadcast %934 : f32 to vector<1x14xf32>
    %937 = arith.mulf %935, %936 : vector<1x14xf32>
    %938 = arith.addf %933, %937 : vector<1x14xf32>
    %c67_129 = arith.constant 67 : index
    %939 = memref.load %arg2[%c67_129] : memref<128xf32, #tpu.memory_space<smem>>
    %940 = vector.extract_strided_slice %173 {offsets = [0, 1], sizes = [1, 14], strides = [1, 1]} : vector<1x15xf32> to vector<1x14xf32>
    %941 = vector.broadcast %939 : f32 to vector<1x14xf32>
    %942 = arith.mulf %940, %941 : vector<1x14xf32>
    %943 = arith.addf %938, %942 : vector<1x14xf32>
    %c68_130 = arith.constant 68 : index
    %944 = memref.load %arg2[%c68_130] : memref<128xf32, #tpu.memory_space<smem>>
    %945 = vector.extract_strided_slice %397 {offsets = [0, 1], sizes = [1, 14], strides = [1, 1]} : vector<1x15xf32> to vector<1x14xf32>
    %946 = vector.broadcast %944 : f32 to vector<1x14xf32>
    %947 = arith.mulf %945, %946 : vector<1x14xf32>
    %948 = arith.addf %943, %947 : vector<1x14xf32>
    %c69_131 = arith.constant 69 : index
    %949 = memref.load %arg2[%c69_131] : memref<128xf32, #tpu.memory_space<smem>>
    %950 = vector.extract_strided_slice %453 {offsets = [0, 0], sizes = [1, 14], strides = [1, 1]} : vector<1x15xf32> to vector<1x14xf32>
    %951 = vector.broadcast %949 : f32 to vector<1x14xf32>
    %952 = arith.mulf %950, %951 : vector<1x14xf32>
    %953 = arith.addf %948, %952 : vector<1x14xf32>
    %c70_132 = arith.constant 70 : index
    %954 = memref.load %arg2[%c70_132] : memref<128xf32, #tpu.memory_space<smem>>
    %955 = vector.extract_strided_slice %229 {offsets = [0, 1], sizes = [1, 14], strides = [1, 1]} : vector<1x15xf32> to vector<1x14xf32>
    %956 = vector.broadcast %954 : f32 to vector<1x14xf32>
    %957 = arith.mulf %955, %956 : vector<1x14xf32>
    %958 = arith.addf %953, %957 : vector<1x14xf32>
    %c71_133 = arith.constant 71 : index
    %959 = memref.load %arg2[%c71_133] : memref<128xf32, #tpu.memory_space<smem>>
    %960 = vector.extract_strided_slice %453 {offsets = [0, 1], sizes = [1, 14], strides = [1, 1]} : vector<1x15xf32> to vector<1x14xf32>
    %961 = vector.broadcast %959 : f32 to vector<1x14xf32>
    %962 = arith.mulf %960, %961 : vector<1x14xf32>
    %963 = arith.addf %958, %962 : vector<1x14xf32>
    %964 = arith.maximumf %902, %963 : vector<1x14xf32>
    %cst_134 = arith.constant 0.000000e+00 : f32
    %965 = vector.broadcast %cst_134 : f32 to vector<1x14xf32>
    %966 = arith.maximumf %964, %965 : vector<1x14xf32>
    %c0_135 = arith.constant 0 : index
    %c0_136 = arith.constant 0 : index
    %c42_137 = arith.constant 42 : index
    %967 = vector.load %arg3[%c0_135, %c0_136, %c42_137] : memref<1x1x112xf32, #tpu.memory_space<vmem>>, vector<1x1x14xf32>
    %968 = vector.shape_cast %967 : vector<1x1x14xf32> to vector<1x14xf32>
    %969 = vector.shape_cast %966 : vector<1x14xf32> to vector<1x1x14xf32>
    tpu.vector_store %arg3[%c0_135, %c0_136, %c42_137], %969 {strides = array<i32>} : memref<1x1x112xf32, #tpu.memory_space<vmem>>, vector<1x1x14xf32>,
    %c124 = arith.constant 124 : index
    %970 = memref.load %arg2[%c124] : memref<128xf32, #tpu.memory_space<smem>>
    %c72 = arith.constant 72 : index
    %971 = memref.load %arg2[%c72] : memref<128xf32, #tpu.memory_space<smem>>
    %972 = vector.extract_strided_slice %61 {offsets = [0, 0], sizes = [1, 14], strides = [1, 1]} : vector<1x15xf32> to vector<1x14xf32>
    %973 = vector.broadcast %971 : f32 to vector<1x14xf32>
    %974 = arith.mulf %972, %973 : vector<1x14xf32>
    %975 = vector.broadcast %970 : f32 to vector<1x14xf32>
    %976 = arith.addf %974, %975 : vector<1x14xf32>
    %c73 = arith.constant 73 : index
    %977 = memref.load %arg2[%c73] : memref<128xf32, #tpu.memory_space<smem>>
    %978 = vector.extract_strided_slice %285 {offsets = [0, 0], sizes = [1, 14], strides = [1, 1]} : vector<1x15xf32> to vector<1x14xf32>
    %979 = vector.broadcast %977 : f32 to vector<1x14xf32>
    %980 = arith.mulf %978, %979 : vector<1x14xf32>
    %981 = arith.addf %976, %980 : vector<1x14xf32>
    %c74 = arith.constant 74 : index
    %982 = memref.load %arg2[%c74] : memref<128xf32, #tpu.memory_space<smem>>
    %983 = vector.extract_strided_slice %61 {offsets = [0, 1], sizes = [1, 14], strides = [1, 1]} : vector<1x15xf32> to vector<1x14xf32>
    %984 = vector.broadcast %982 : f32 to vector<1x14xf32>
    %985 = arith.mulf %983, %984 : vector<1x14xf32>
    %986 = arith.addf %981, %985 : vector<1x14xf32>
    %c75 = arith.constant 75 : index
    %987 = memref.load %arg2[%c75] : memref<128xf32, #tpu.memory_space<smem>>
    %988 = vector.extract_strided_slice %117 {offsets = [0, 0], sizes = [1, 14], strides = [1, 1]} : vector<1x15xf32> to vector<1x14xf32>
    %989 = vector.broadcast %987 : f32 to vector<1x14xf32>
    %990 = arith.mulf %988, %989 : vector<1x14xf32>
    %991 = arith.addf %986, %990 : vector<1x14xf32>
    %c76 = arith.constant 76 : index
    %992 = memref.load %arg2[%c76] : memref<128xf32, #tpu.memory_space<smem>>
    %993 = vector.extract_strided_slice %341 {offsets = [0, 0], sizes = [1, 14], strides = [1, 1]} : vector<1x15xf32> to vector<1x14xf32>
    %994 = vector.broadcast %992 : f32 to vector<1x14xf32>
    %995 = arith.mulf %993, %994 : vector<1x14xf32>
    %996 = arith.addf %991, %995 : vector<1x14xf32>
    %c77 = arith.constant 77 : index
    %997 = memref.load %arg2[%c77] : memref<128xf32, #tpu.memory_space<smem>>
    %998 = vector.extract_strided_slice %117 {offsets = [0, 1], sizes = [1, 14], strides = [1, 1]} : vector<1x15xf32> to vector<1x14xf32>
    %999 = vector.broadcast %997 : f32 to vector<1x14xf32>
    %1000 = arith.mulf %998, %999 : vector<1x14xf32>
    %1001 = arith.addf %996, %1000 : vector<1x14xf32>
    %c78 = arith.constant 78 : index
    %1002 = memref.load %arg2[%c78] : memref<128xf32, #tpu.memory_space<smem>>
    %1003 = vector.extract_strided_slice %173 {offsets = [0, 0], sizes = [1, 14], strides = [1, 1]} : vector<1x15xf32> to vector<1x14xf32>
    %1004 = vector.broadcast %1002 : f32 to vector<1x14xf32>
    %1005 = arith.mulf %1003, %1004 : vector<1x14xf32>
    %1006 = arith.addf %1001, %1005 : vector<1x14xf32>
    %c79 = arith.constant 79 : index
    %1007 = memref.load %arg2[%c79] : memref<128xf32, #tpu.memory_space<smem>>
    %1008 = vector.extract_strided_slice %397 {offsets = [0, 0], sizes = [1, 14], strides = [1, 1]} : vector<1x15xf32> to vector<1x14xf32>
    %1009 = vector.broadcast %1007 : f32 to vector<1x14xf32>
    %1010 = arith.mulf %1008, %1009 : vector<1x14xf32>
    %1011 = arith.addf %1006, %1010 : vector<1x14xf32>
    %c80 = arith.constant 80 : index
    %1012 = memref.load %arg2[%c80] : memref<128xf32, #tpu.memory_space<smem>>
    %1013 = vector.extract_strided_slice %173 {offsets = [0, 1], sizes = [1, 14], strides = [1, 1]} : vector<1x15xf32> to vector<1x14xf32>
    %1014 = vector.broadcast %1012 : f32 to vector<1x14xf32>
    %1015 = arith.mulf %1013, %1014 : vector<1x14xf32>
    %1016 = arith.addf %1011, %1015 : vector<1x14xf32>
    %c81 = arith.constant 81 : index
    %1017 = memref.load %arg2[%c81] : memref<128xf32, #tpu.memory_space<smem>>
    %1018 = vector.extract_strided_slice %229 {offsets = [0, 0], sizes = [1, 14], strides = [1, 1]} : vector<1x15xf32> to vector<1x14xf32>
    %1019 = vector.broadcast %1017 : f32 to vector<1x14xf32>
    %1020 = arith.mulf %1018, %1019 : vector<1x14xf32>
    %1021 = arith.addf %1016, %1020 : vector<1x14xf32>
    %c82 = arith.constant 82 : index
    %1022 = memref.load %arg2[%c82] : memref<128xf32, #tpu.memory_space<smem>>
    %1023 = vector.extract_strided_slice %453 {offsets = [0, 0], sizes = [1, 14], strides = [1, 1]} : vector<1x15xf32> to vector<1x14xf32>
    %1024 = vector.broadcast %1022 : f32 to vector<1x14xf32>
    %1025 = arith.mulf %1023, %1024 : vector<1x14xf32>
    %1026 = arith.addf %1021, %1025 : vector<1x14xf32>
    %c83 = arith.constant 83 : index
    %1027 = memref.load %arg2[%c83] : memref<128xf32, #tpu.memory_space<smem>>
    %1028 = vector.extract_strided_slice %229 {offsets = [0, 1], sizes = [1, 14], strides = [1, 1]} : vector<1x15xf32> to vector<1x14xf32>
    %1029 = vector.broadcast %1027 : f32 to vector<1x14xf32>
    %1030 = arith.mulf %1028, %1029 : vector<1x14xf32>
    %1031 = arith.addf %1026, %1030 : vector<1x14xf32>
    %c72_138 = arith.constant 72 : index
    %1032 = memref.load %arg2[%c72_138] : memref<128xf32, #tpu.memory_space<smem>>
    %1033 = vector.extract_strided_slice %285 {offsets = [0, 0], sizes = [1, 14], strides = [1, 1]} : vector<1x15xf32> to vector<1x14xf32>
    %1034 = vector.broadcast %1032 : f32 to vector<1x14xf32>
    %1035 = arith.mulf %1033, %1034 : vector<1x14xf32>
    %1036 = vector.broadcast %970 : f32 to vector<1x14xf32>
    %1037 = arith.addf %1035, %1036 : vector<1x14xf32>
    %c73_139 = arith.constant 73 : index
    %1038 = memref.load %arg2[%c73_139] : memref<128xf32, #tpu.memory_space<smem>>
    %1039 = vector.extract_strided_slice %61 {offsets = [0, 1], sizes = [1, 14], strides = [1, 1]} : vector<1x15xf32> to vector<1x14xf32>
    %1040 = vector.broadcast %1038 : f32 to vector<1x14xf32>
    %1041 = arith.mulf %1039, %1040 : vector<1x14xf32>
    %1042 = arith.addf %1037, %1041 : vector<1x14xf32>
    %c74_140 = arith.constant 74 : index
    %1043 = memref.load %arg2[%c74_140] : memref<128xf32, #tpu.memory_space<smem>>
    %1044 = vector.extract_strided_slice %285 {offsets = [0, 1], sizes = [1, 14], strides = [1, 1]} : vector<1x15xf32> to vector<1x14xf32>
    %1045 = vector.broadcast %1043 : f32 to vector<1x14xf32>
    %1046 = arith.mulf %1044, %1045 : vector<1x14xf32>
    %1047 = arith.addf %1042, %1046 : vector<1x14xf32>
    %c75_141 = arith.constant 75 : index
    %1048 = memref.load %arg2[%c75_141] : memref<128xf32, #tpu.memory_space<smem>>
    %1049 = vector.extract_strided_slice %341 {offsets = [0, 0], sizes = [1, 14], strides = [1, 1]} : vector<1x15xf32> to vector<1x14xf32>
    %1050 = vector.broadcast %1048 : f32 to vector<1x14xf32>
    %1051 = arith.mulf %1049, %1050 : vector<1x14xf32>
    %1052 = arith.addf %1047, %1051 : vector<1x14xf32>
    %c76_142 = arith.constant 76 : index
    %1053 = memref.load %arg2[%c76_142] : memref<128xf32, #tpu.memory_space<smem>>
    %1054 = vector.extract_strided_slice %117 {offsets = [0, 1], sizes = [1, 14], strides = [1, 1]} : vector<1x15xf32> to vector<1x14xf32>
    %1055 = vector.broadcast %1053 : f32 to vector<1x14xf32>
    %1056 = arith.mulf %1054, %1055 : vector<1x14xf32>
    %1057 = arith.addf %1052, %1056 : vector<1x14xf32>
    %c77_143 = arith.constant 77 : index
    %1058 = memref.load %arg2[%c77_143] : memref<128xf32, #tpu.memory_space<smem>>
    %1059 = vector.extract_strided_slice %341 {offsets = [0, 1], sizes = [1, 14], strides = [1, 1]} : vector<1x15xf32> to vector<1x14xf32>
    %1060 = vector.broadcast %1058 : f32 to vector<1x14xf32>
    %1061 = arith.mulf %1059, %1060 : vector<1x14xf32>
    %1062 = arith.addf %1057, %1061 : vector<1x14xf32>
    %c78_144 = arith.constant 78 : index
    %1063 = memref.load %arg2[%c78_144] : memref<128xf32, #tpu.memory_space<smem>>
    %1064 = vector.extract_strided_slice %397 {offsets = [0, 0], sizes = [1, 14], strides = [1, 1]} : vector<1x15xf32> to vector<1x14xf32>
    %1065 = vector.broadcast %1063 : f32 to vector<1x14xf32>
    %1066 = arith.mulf %1064, %1065 : vector<1x14xf32>
    %1067 = arith.addf %1062, %1066 : vector<1x14xf32>
    %c79_145 = arith.constant 79 : index
    %1068 = memref.load %arg2[%c79_145] : memref<128xf32, #tpu.memory_space<smem>>
    %1069 = vector.extract_strided_slice %173 {offsets = [0, 1], sizes = [1, 14], strides = [1, 1]} : vector<1x15xf32> to vector<1x14xf32>
    %1070 = vector.broadcast %1068 : f32 to vector<1x14xf32>
    %1071 = arith.mulf %1069, %1070 : vector<1x14xf32>
    %1072 = arith.addf %1067, %1071 : vector<1x14xf32>
    %c80_146 = arith.constant 80 : index
    %1073 = memref.load %arg2[%c80_146] : memref<128xf32, #tpu.memory_space<smem>>
    %1074 = vector.extract_strided_slice %397 {offsets = [0, 1], sizes = [1, 14], strides = [1, 1]} : vector<1x15xf32> to vector<1x14xf32>
    %1075 = vector.broadcast %1073 : f32 to vector<1x14xf32>
    %1076 = arith.mulf %1074, %1075 : vector<1x14xf32>
    %1077 = arith.addf %1072, %1076 : vector<1x14xf32>
    %c81_147 = arith.constant 81 : index
    %1078 = memref.load %arg2[%c81_147] : memref<128xf32, #tpu.memory_space<smem>>
    %1079 = vector.extract_strided_slice %453 {offsets = [0, 0], sizes = [1, 14], strides = [1, 1]} : vector<1x15xf32> to vector<1x14xf32>
    %1080 = vector.broadcast %1078 : f32 to vector<1x14xf32>
    %1081 = arith.mulf %1079, %1080 : vector<1x14xf32>
    %1082 = arith.addf %1077, %1081 : vector<1x14xf32>
    %c82_148 = arith.constant 82 : index
    %1083 = memref.load %arg2[%c82_148] : memref<128xf32, #tpu.memory_space<smem>>
    %1084 = vector.extract_strided_slice %229 {offsets = [0, 1], sizes = [1, 14], strides = [1, 1]} : vector<1x15xf32> to vector<1x14xf32>
    %1085 = vector.broadcast %1083 : f32 to vector<1x14xf32>
    %1086 = arith.mulf %1084, %1085 : vector<1x14xf32>
    %1087 = arith.addf %1082, %1086 : vector<1x14xf32>
    %c83_149 = arith.constant 83 : index
    %1088 = memref.load %arg2[%c83_149] : memref<128xf32, #tpu.memory_space<smem>>
    %1089 = vector.extract_strided_slice %453 {offsets = [0, 1], sizes = [1, 14], strides = [1, 1]} : vector<1x15xf32> to vector<1x14xf32>
    %1090 = vector.broadcast %1088 : f32 to vector<1x14xf32>
    %1091 = arith.mulf %1089, %1090 : vector<1x14xf32>
    %1092 = arith.addf %1087, %1091 : vector<1x14xf32>
    %1093 = arith.maximumf %1031, %1092 : vector<1x14xf32>
    %cst_150 = arith.constant 0.000000e+00 : f32
    %1094 = vector.broadcast %cst_150 : f32 to vector<1x14xf32>
    %1095 = arith.maximumf %1093, %1094 : vector<1x14xf32>
    %c0_151 = arith.constant 0 : index
    %c0_152 = arith.constant 0 : index
    %c56_153 = arith.constant 56 : index
    %1096 = vector.load %arg3[%c0_151, %c0_152, %c56_153] : memref<1x1x112xf32, #tpu.memory_space<vmem>>, vector<1x1x14xf32>
    %1097 = vector.shape_cast %1096 : vector<1x1x14xf32> to vector<1x14xf32>
    %1098 = vector.shape_cast %1095 : vector<1x14xf32> to vector<1x1x14xf32>
    tpu.vector_store %arg3[%c0_151, %c0_152, %c56_153], %1098 {strides = array<i32>} : memref<1x1x112xf32, #tpu.memory_space<vmem>>, vector<1x1x14xf32>,
    %c125 = arith.constant 125 : index
    %1099 = memref.load %arg2[%c125] : memref<128xf32, #tpu.memory_space<smem>>
    %c84 = arith.constant 84 : index
    %1100 = memref.load %arg2[%c84] : memref<128xf32, #tpu.memory_space<smem>>
    %1101 = vector.extract_strided_slice %61 {offsets = [0, 0], sizes = [1, 14], strides = [1, 1]} : vector<1x15xf32> to vector<1x14xf32>
    %1102 = vector.broadcast %1100 : f32 to vector<1x14xf32>
    %1103 = arith.mulf %1101, %1102 : vector<1x14xf32>
    %1104 = vector.broadcast %1099 : f32 to vector<1x14xf32>
    %1105 = arith.addf %1103, %1104 : vector<1x14xf32>
    %c85 = arith.constant 85 : index
    %1106 = memref.load %arg2[%c85] : memref<128xf32, #tpu.memory_space<smem>>
    %1107 = vector.extract_strided_slice %285 {offsets = [0, 0], sizes = [1, 14], strides = [1, 1]} : vector<1x15xf32> to vector<1x14xf32>
    %1108 = vector.broadcast %1106 : f32 to vector<1x14xf32>
    %1109 = arith.mulf %1107, %1108 : vector<1x14xf32>
    %1110 = arith.addf %1105, %1109 : vector<1x14xf32>
    %c86 = arith.constant 86 : index
    %1111 = memref.load %arg2[%c86] : memref<128xf32, #tpu.memory_space<smem>>
    %1112 = vector.extract_strided_slice %61 {offsets = [0, 1], sizes = [1, 14], strides = [1, 1]} : vector<1x15xf32> to vector<1x14xf32>
    %1113 = vector.broadcast %1111 : f32 to vector<1x14xf32>
    %1114 = arith.mulf %1112, %1113 : vector<1x14xf32>
    %1115 = arith.addf %1110, %1114 : vector<1x14xf32>
    %c87 = arith.constant 87 : index
    %1116 = memref.load %arg2[%c87] : memref<128xf32, #tpu.memory_space<smem>>
    %1117 = vector.extract_strided_slice %117 {offsets = [0, 0], sizes = [1, 14], strides = [1, 1]} : vector<1x15xf32> to vector<1x14xf32>
    %1118 = vector.broadcast %1116 : f32 to vector<1x14xf32>
    %1119 = arith.mulf %1117, %1118 : vector<1x14xf32>
    %1120 = arith.addf %1115, %1119 : vector<1x14xf32>
    %c88 = arith.constant 88 : index
    %1121 = memref.load %arg2[%c88] : memref<128xf32, #tpu.memory_space<smem>>
    %1122 = vector.extract_strided_slice %341 {offsets = [0, 0], sizes = [1, 14], strides = [1, 1]} : vector<1x15xf32> to vector<1x14xf32>
    %1123 = vector.broadcast %1121 : f32 to vector<1x14xf32>
    %1124 = arith.mulf %1122, %1123 : vector<1x14xf32>
    %1125 = arith.addf %1120, %1124 : vector<1x14xf32>
    %c89 = arith.constant 89 : index
    %1126 = memref.load %arg2[%c89] : memref<128xf32, #tpu.memory_space<smem>>
    %1127 = vector.extract_strided_slice %117 {offsets = [0, 1], sizes = [1, 14], strides = [1, 1]} : vector<1x15xf32> to vector<1x14xf32>
    %1128 = vector.broadcast %1126 : f32 to vector<1x14xf32>
    %1129 = arith.mulf %1127, %1128 : vector<1x14xf32>
    %1130 = arith.addf %1125, %1129 : vector<1x14xf32>
    %c90 = arith.constant 90 : index
    %1131 = memref.load %arg2[%c90] : memref<128xf32, #tpu.memory_space<smem>>
    %1132 = vector.extract_strided_slice %173 {offsets = [0, 0], sizes = [1, 14], strides = [1, 1]} : vector<1x15xf32> to vector<1x14xf32>
    %1133 = vector.broadcast %1131 : f32 to vector<1x14xf32>
    %1134 = arith.mulf %1132, %1133 : vector<1x14xf32>
    %1135 = arith.addf %1130, %1134 : vector<1x14xf32>
    %c91 = arith.constant 91 : index
    %1136 = memref.load %arg2[%c91] : memref<128xf32, #tpu.memory_space<smem>>
    %1137 = vector.extract_strided_slice %397 {offsets = [0, 0], sizes = [1, 14], strides = [1, 1]} : vector<1x15xf32> to vector<1x14xf32>
    %1138 = vector.broadcast %1136 : f32 to vector<1x14xf32>
    %1139 = arith.mulf %1137, %1138 : vector<1x14xf32>
    %1140 = arith.addf %1135, %1139 : vector<1x14xf32>
    %c92 = arith.constant 92 : index
    %1141 = memref.load %arg2[%c92] : memref<128xf32, #tpu.memory_space<smem>>
    %1142 = vector.extract_strided_slice %173 {offsets = [0, 1], sizes = [1, 14], strides = [1, 1]} : vector<1x15xf32> to vector<1x14xf32>
    %1143 = vector.broadcast %1141 : f32 to vector<1x14xf32>
    %1144 = arith.mulf %1142, %1143 : vector<1x14xf32>
    %1145 = arith.addf %1140, %1144 : vector<1x14xf32>
    %c93 = arith.constant 93 : index
    %1146 = memref.load %arg2[%c93] : memref<128xf32, #tpu.memory_space<smem>>
    %1147 = vector.extract_strided_slice %229 {offsets = [0, 0], sizes = [1, 14], strides = [1, 1]} : vector<1x15xf32> to vector<1x14xf32>
    %1148 = vector.broadcast %1146 : f32 to vector<1x14xf32>
    %1149 = arith.mulf %1147, %1148 : vector<1x14xf32>
    %1150 = arith.addf %1145, %1149 : vector<1x14xf32>
    %c94 = arith.constant 94 : index
    %1151 = memref.load %arg2[%c94] : memref<128xf32, #tpu.memory_space<smem>>
    %1152 = vector.extract_strided_slice %453 {offsets = [0, 0], sizes = [1, 14], strides = [1, 1]} : vector<1x15xf32> to vector<1x14xf32>
    %1153 = vector.broadcast %1151 : f32 to vector<1x14xf32>
    %1154 = arith.mulf %1152, %1153 : vector<1x14xf32>
    %1155 = arith.addf %1150, %1154 : vector<1x14xf32>
    %c95 = arith.constant 95 : index
    %1156 = memref.load %arg2[%c95] : memref<128xf32, #tpu.memory_space<smem>>
    %1157 = vector.extract_strided_slice %229 {offsets = [0, 1], sizes = [1, 14], strides = [1, 1]} : vector<1x15xf32> to vector<1x14xf32>
    %1158 = vector.broadcast %1156 : f32 to vector<1x14xf32>
    %1159 = arith.mulf %1157, %1158 : vector<1x14xf32>
    %1160 = arith.addf %1155, %1159 : vector<1x14xf32>
    %c84_154 = arith.constant 84 : index
    %1161 = memref.load %arg2[%c84_154] : memref<128xf32, #tpu.memory_space<smem>>
    %1162 = vector.extract_strided_slice %285 {offsets = [0, 0], sizes = [1, 14], strides = [1, 1]} : vector<1x15xf32> to vector<1x14xf32>
    %1163 = vector.broadcast %1161 : f32 to vector<1x14xf32>
    %1164 = arith.mulf %1162, %1163 : vector<1x14xf32>
    %1165 = vector.broadcast %1099 : f32 to vector<1x14xf32>
    %1166 = arith.addf %1164, %1165 : vector<1x14xf32>
    %c85_155 = arith.constant 85 : index
    %1167 = memref.load %arg2[%c85_155] : memref<128xf32, #tpu.memory_space<smem>>
    %1168 = vector.extract_strided_slice %61 {offsets = [0, 1], sizes = [1, 14], strides = [1, 1]} : vector<1x15xf32> to vector<1x14xf32>
    %1169 = vector.broadcast %1167 : f32 to vector<1x14xf32>
    %1170 = arith.mulf %1168, %1169 : vector<1x14xf32>
    %1171 = arith.addf %1166, %1170 : vector<1x14xf32>
    %c86_156 = arith.constant 86 : index
    %1172 = memref.load %arg2[%c86_156] : memref<128xf32, #tpu.memory_space<smem>>
    %1173 = vector.extract_strided_slice %285 {offsets = [0, 1], sizes = [1, 14], strides = [1, 1]} : vector<1x15xf32> to vector<1x14xf32>
    %1174 = vector.broadcast %1172 : f32 to vector<1x14xf32>
    %1175 = arith.mulf %1173, %1174 : vector<1x14xf32>
    %1176 = arith.addf %1171, %1175 : vector<1x14xf32>
    %c87_157 = arith.constant 87 : index
    %1177 = memref.load %arg2[%c87_157] : memref<128xf32, #tpu.memory_space<smem>>
    %1178 = vector.extract_strided_slice %341 {offsets = [0, 0], sizes = [1, 14], strides = [1, 1]} : vector<1x15xf32> to vector<1x14xf32>
    %1179 = vector.broadcast %1177 : f32 to vector<1x14xf32>
    %1180 = arith.mulf %1178, %1179 : vector<1x14xf32>
    %1181 = arith.addf %1176, %1180 : vector<1x14xf32>
    %c88_158 = arith.constant 88 : index
    %1182 = memref.load %arg2[%c88_158] : memref<128xf32, #tpu.memory_space<smem>>
    %1183 = vector.extract_strided_slice %117 {offsets = [0, 1], sizes = [1, 14], strides = [1, 1]} : vector<1x15xf32> to vector<1x14xf32>
    %1184 = vector.broadcast %1182 : f32 to vector<1x14xf32>
    %1185 = arith.mulf %1183, %1184 : vector<1x14xf32>
    %1186 = arith.addf %1181, %1185 : vector<1x14xf32>
    %c89_159 = arith.constant 89 : index
    %1187 = memref.load %arg2[%c89_159] : memref<128xf32, #tpu.memory_space<smem>>
    %1188 = vector.extract_strided_slice %341 {offsets = [0, 1], sizes = [1, 14], strides = [1, 1]} : vector<1x15xf32> to vector<1x14xf32>
    %1189 = vector.broadcast %1187 : f32 to vector<1x14xf32>
    %1190 = arith.mulf %1188, %1189 : vector<1x14xf32>
    %1191 = arith.addf %1186, %1190 : vector<1x14xf32>
    %c90_160 = arith.constant 90 : index
    %1192 = memref.load %arg2[%c90_160] : memref<128xf32, #tpu.memory_space<smem>>
    %1193 = vector.extract_strided_slice %397 {offsets = [0, 0], sizes = [1, 14], strides = [1, 1]} : vector<1x15xf32> to vector<1x14xf32>
    %1194 = vector.broadcast %1192 : f32 to vector<1x14xf32>
    %1195 = arith.mulf %1193, %1194 : vector<1x14xf32>
    %1196 = arith.addf %1191, %1195 : vector<1x14xf32>
    %c91_161 = arith.constant 91 : index
    %1197 = memref.load %arg2[%c91_161] : memref<128xf32, #tpu.memory_space<smem>>
    %1198 = vector.extract_strided_slice %173 {offsets = [0, 1], sizes = [1, 14], strides = [1, 1]} : vector<1x15xf32> to vector<1x14xf32>
    %1199 = vector.broadcast %1197 : f32 to vector<1x14xf32>
    %1200 = arith.mulf %1198, %1199 : vector<1x14xf32>
    %1201 = arith.addf %1196, %1200 : vector<1x14xf32>
    %c92_162 = arith.constant 92 : index
    %1202 = memref.load %arg2[%c92_162] : memref<128xf32, #tpu.memory_space<smem>>
    %1203 = vector.extract_strided_slice %397 {offsets = [0, 1], sizes = [1, 14], strides = [1, 1]} : vector<1x15xf32> to vector<1x14xf32>
    %1204 = vector.broadcast %1202 : f32 to vector<1x14xf32>
    %1205 = arith.mulf %1203, %1204 : vector<1x14xf32>
    %1206 = arith.addf %1201, %1205 : vector<1x14xf32>
    %c93_163 = arith.constant 93 : index
    %1207 = memref.load %arg2[%c93_163] : memref<128xf32, #tpu.memory_space<smem>>
    %1208 = vector.extract_strided_slice %453 {offsets = [0, 0], sizes = [1, 14], strides = [1, 1]} : vector<1x15xf32> to vector<1x14xf32>
    %1209 = vector.broadcast %1207 : f32 to vector<1x14xf32>
    %1210 = arith.mulf %1208, %1209 : vector<1x14xf32>
    %1211 = arith.addf %1206, %1210 : vector<1x14xf32>
    %c94_164 = arith.constant 94 : index
    %1212 = memref.load %arg2[%c94_164] : memref<128xf32, #tpu.memory_space<smem>>
    %1213 = vector.extract_strided_slice %229 {offsets = [0, 1], sizes = [1, 14], strides = [1, 1]} : vector<1x15xf32> to vector<1x14xf32>
    %1214 = vector.broadcast %1212 : f32 to vector<1x14xf32>
    %1215 = arith.mulf %1213, %1214 : vector<1x14xf32>
    %1216 = arith.addf %1211, %1215 : vector<1x14xf32>
    %c95_165 = arith.constant 95 : index
    %1217 = memref.load %arg2[%c95_165] : memref<128xf32, #tpu.memory_space<smem>>
    %1218 = vector.extract_strided_slice %453 {offsets = [0, 1], sizes = [1, 14], strides = [1, 1]} : vector<1x15xf32> to vector<1x14xf32>
    %1219 = vector.broadcast %1217 : f32 to vector<1x14xf32>
    %1220 = arith.mulf %1218, %1219 : vector<1x14xf32>
    %1221 = arith.addf %1216, %1220 : vector<1x14xf32>
    %1222 = arith.maximumf %1160, %1221 : vector<1x14xf32>
    %cst_166 = arith.constant 0.000000e+00 : f32
    %1223 = vector.broadcast %cst_166 : f32 to vector<1x14xf32>
    %1224 = arith.maximumf %1222, %1223 : vector<1x14xf32>
    %c0_167 = arith.constant 0 : index
    %c0_168 = arith.constant 0 : index
    %c70_169 = arith.constant 70 : index
    %1225 = vector.load %arg3[%c0_167, %c0_168, %c70_169] : memref<1x1x112xf32, #tpu.memory_space<vmem>>, vector<1x1x14xf32>
    %1226 = vector.shape_cast %1225 : vector<1x1x14xf32> to vector<1x14xf32>
    %1227 = vector.shape_cast %1224 : vector<1x14xf32> to vector<1x1x14xf32>
    tpu.vector_store %arg3[%c0_167, %c0_168, %c70_169], %1227 {strides = array<i32>} : memref<1x1x112xf32, #tpu.memory_space<vmem>>, vector<1x1x14xf32>,
    %c126 = arith.constant 126 : index
    %1228 = memref.load %arg2[%c126] : memref<128xf32, #tpu.memory_space<smem>>
    %c96 = arith.constant 96 : index
    %1229 = memref.load %arg2[%c96] : memref<128xf32, #tpu.memory_space<smem>>
    %1230 = vector.extract_strided_slice %61 {offsets = [0, 0], sizes = [1, 14], strides = [1, 1]} : vector<1x15xf32> to vector<1x14xf32>
    %1231 = vector.broadcast %1229 : f32 to vector<1x14xf32>
    %1232 = arith.mulf %1230, %1231 : vector<1x14xf32>
    %1233 = vector.broadcast %1228 : f32 to vector<1x14xf32>
    %1234 = arith.addf %1232, %1233 : vector<1x14xf32>
    %c97 = arith.constant 97 : index
    %1235 = memref.load %arg2[%c97] : memref<128xf32, #tpu.memory_space<smem>>
    %1236 = vector.extract_strided_slice %285 {offsets = [0, 0], sizes = [1, 14], strides = [1, 1]} : vector<1x15xf32> to vector<1x14xf32>
    %1237 = vector.broadcast %1235 : f32 to vector<1x14xf32>
    %1238 = arith.mulf %1236, %1237 : vector<1x14xf32>
    %1239 = arith.addf %1234, %1238 : vector<1x14xf32>
    %c98 = arith.constant 98 : index
    %1240 = memref.load %arg2[%c98] : memref<128xf32, #tpu.memory_space<smem>>
    %1241 = vector.extract_strided_slice %61 {offsets = [0, 1], sizes = [1, 14], strides = [1, 1]} : vector<1x15xf32> to vector<1x14xf32>
    %1242 = vector.broadcast %1240 : f32 to vector<1x14xf32>
    %1243 = arith.mulf %1241, %1242 : vector<1x14xf32>
    %1244 = arith.addf %1239, %1243 : vector<1x14xf32>
    %c99 = arith.constant 99 : index
    %1245 = memref.load %arg2[%c99] : memref<128xf32, #tpu.memory_space<smem>>
    %1246 = vector.extract_strided_slice %117 {offsets = [0, 0], sizes = [1, 14], strides = [1, 1]} : vector<1x15xf32> to vector<1x14xf32>
    %1247 = vector.broadcast %1245 : f32 to vector<1x14xf32>
    %1248 = arith.mulf %1246, %1247 : vector<1x14xf32>
    %1249 = arith.addf %1244, %1248 : vector<1x14xf32>
    %c100 = arith.constant 100 : index
    %1250 = memref.load %arg2[%c100] : memref<128xf32, #tpu.memory_space<smem>>
    %1251 = vector.extract_strided_slice %341 {offsets = [0, 0], sizes = [1, 14], strides = [1, 1]} : vector<1x15xf32> to vector<1x14xf32>
    %1252 = vector.broadcast %1250 : f32 to vector<1x14xf32>
    %1253 = arith.mulf %1251, %1252 : vector<1x14xf32>
    %1254 = arith.addf %1249, %1253 : vector<1x14xf32>
    %c101 = arith.constant 101 : index
    %1255 = memref.load %arg2[%c101] : memref<128xf32, #tpu.memory_space<smem>>
    %1256 = vector.extract_strided_slice %117 {offsets = [0, 1], sizes = [1, 14], strides = [1, 1]} : vector<1x15xf32> to vector<1x14xf32>
    %1257 = vector.broadcast %1255 : f32 to vector<1x14xf32>
    %1258 = arith.mulf %1256, %1257 : vector<1x14xf32>
    %1259 = arith.addf %1254, %1258 : vector<1x14xf32>
    %c102 = arith.constant 102 : index
    %1260 = memref.load %arg2[%c102] : memref<128xf32, #tpu.memory_space<smem>>
    %1261 = vector.extract_strided_slice %173 {offsets = [0, 0], sizes = [1, 14], strides = [1, 1]} : vector<1x15xf32> to vector<1x14xf32>
    %1262 = vector.broadcast %1260 : f32 to vector<1x14xf32>
    %1263 = arith.mulf %1261, %1262 : vector<1x14xf32>
    %1264 = arith.addf %1259, %1263 : vector<1x14xf32>
    %c103 = arith.constant 103 : index
    %1265 = memref.load %arg2[%c103] : memref<128xf32, #tpu.memory_space<smem>>
    %1266 = vector.extract_strided_slice %397 {offsets = [0, 0], sizes = [1, 14], strides = [1, 1]} : vector<1x15xf32> to vector<1x14xf32>
    %1267 = vector.broadcast %1265 : f32 to vector<1x14xf32>
    %1268 = arith.mulf %1266, %1267 : vector<1x14xf32>
    %1269 = arith.addf %1264, %1268 : vector<1x14xf32>
    %c104 = arith.constant 104 : index
    %1270 = memref.load %arg2[%c104] : memref<128xf32, #tpu.memory_space<smem>>
    %1271 = vector.extract_strided_slice %173 {offsets = [0, 1], sizes = [1, 14], strides = [1, 1]} : vector<1x15xf32> to vector<1x14xf32>
    %1272 = vector.broadcast %1270 : f32 to vector<1x14xf32>
    %1273 = arith.mulf %1271, %1272 : vector<1x14xf32>
    %1274 = arith.addf %1269, %1273 : vector<1x14xf32>
    %c105 = arith.constant 105 : index
    %1275 = memref.load %arg2[%c105] : memref<128xf32, #tpu.memory_space<smem>>
    %1276 = vector.extract_strided_slice %229 {offsets = [0, 0], sizes = [1, 14], strides = [1, 1]} : vector<1x15xf32> to vector<1x14xf32>
    %1277 = vector.broadcast %1275 : f32 to vector<1x14xf32>
    %1278 = arith.mulf %1276, %1277 : vector<1x14xf32>
    %1279 = arith.addf %1274, %1278 : vector<1x14xf32>
    %c106 = arith.constant 106 : index
    %1280 = memref.load %arg2[%c106] : memref<128xf32, #tpu.memory_space<smem>>
    %1281 = vector.extract_strided_slice %453 {offsets = [0, 0], sizes = [1, 14], strides = [1, 1]} : vector<1x15xf32> to vector<1x14xf32>
    %1282 = vector.broadcast %1280 : f32 to vector<1x14xf32>
    %1283 = arith.mulf %1281, %1282 : vector<1x14xf32>
    %1284 = arith.addf %1279, %1283 : vector<1x14xf32>
    %c107 = arith.constant 107 : index
    %1285 = memref.load %arg2[%c107] : memref<128xf32, #tpu.memory_space<smem>>
    %1286 = vector.extract_strided_slice %229 {offsets = [0, 1], sizes = [1, 14], strides = [1, 1]} : vector<1x15xf32> to vector<1x14xf32>
    %1287 = vector.broadcast %1285 : f32 to vector<1x14xf32>
    %1288 = arith.mulf %1286, %1287 : vector<1x14xf32>
    %1289 = arith.addf %1284, %1288 : vector<1x14xf32>
    %c96_170 = arith.constant 96 : index
    %1290 = memref.load %arg2[%c96_170] : memref<128xf32, #tpu.memory_space<smem>>
    %1291 = vector.extract_strided_slice %285 {offsets = [0, 0], sizes = [1, 14], strides = [1, 1]} : vector<1x15xf32> to vector<1x14xf32>
    %1292 = vector.broadcast %1290 : f32 to vector<1x14xf32>
    %1293 = arith.mulf %1291, %1292 : vector<1x14xf32>
    %1294 = vector.broadcast %1228 : f32 to vector<1x14xf32>
    %1295 = arith.addf %1293, %1294 : vector<1x14xf32>
    %c97_171 = arith.constant 97 : index
    %1296 = memref.load %arg2[%c97_171] : memref<128xf32, #tpu.memory_space<smem>>
    %1297 = vector.extract_strided_slice %61 {offsets = [0, 1], sizes = [1, 14], strides = [1, 1]} : vector<1x15xf32> to vector<1x14xf32>
    %1298 = vector.broadcast %1296 : f32 to vector<1x14xf32>
    %1299 = arith.mulf %1297, %1298 : vector<1x14xf32>
    %1300 = arith.addf %1295, %1299 : vector<1x14xf32>
    %c98_172 = arith.constant 98 : index
    %1301 = memref.load %arg2[%c98_172] : memref<128xf32, #tpu.memory_space<smem>>
    %1302 = vector.extract_strided_slice %285 {offsets = [0, 1], sizes = [1, 14], strides = [1, 1]} : vector<1x15xf32> to vector<1x14xf32>
    %1303 = vector.broadcast %1301 : f32 to vector<1x14xf32>
    %1304 = arith.mulf %1302, %1303 : vector<1x14xf32>
    %1305 = arith.addf %1300, %1304 : vector<1x14xf32>
    %c99_173 = arith.constant 99 : index
    %1306 = memref.load %arg2[%c99_173] : memref<128xf32, #tpu.memory_space<smem>>
    %1307 = vector.extract_strided_slice %341 {offsets = [0, 0], sizes = [1, 14], strides = [1, 1]} : vector<1x15xf32> to vector<1x14xf32>
    %1308 = vector.broadcast %1306 : f32 to vector<1x14xf32>
    %1309 = arith.mulf %1307, %1308 : vector<1x14xf32>
    %1310 = arith.addf %1305, %1309 : vector<1x14xf32>
    %c100_174 = arith.constant 100 : index
    %1311 = memref.load %arg2[%c100_174] : memref<128xf32, #tpu.memory_space<smem>>
    %1312 = vector.extract_strided_slice %117 {offsets = [0, 1], sizes = [1, 14], strides = [1, 1]} : vector<1x15xf32> to vector<1x14xf32>
    %1313 = vector.broadcast %1311 : f32 to vector<1x14xf32>
    %1314 = arith.mulf %1312, %1313 : vector<1x14xf32>
    %1315 = arith.addf %1310, %1314 : vector<1x14xf32>
    %c101_175 = arith.constant 101 : index
    %1316 = memref.load %arg2[%c101_175] : memref<128xf32, #tpu.memory_space<smem>>
    %1317 = vector.extract_strided_slice %341 {offsets = [0, 1], sizes = [1, 14], strides = [1, 1]} : vector<1x15xf32> to vector<1x14xf32>
    %1318 = vector.broadcast %1316 : f32 to vector<1x14xf32>
    %1319 = arith.mulf %1317, %1318 : vector<1x14xf32>
    %1320 = arith.addf %1315, %1319 : vector<1x14xf32>
    %c102_176 = arith.constant 102 : index
    %1321 = memref.load %arg2[%c102_176] : memref<128xf32, #tpu.memory_space<smem>>
    %1322 = vector.extract_strided_slice %397 {offsets = [0, 0], sizes = [1, 14], strides = [1, 1]} : vector<1x15xf32> to vector<1x14xf32>
    %1323 = vector.broadcast %1321 : f32 to vector<1x14xf32>
    %1324 = arith.mulf %1322, %1323 : vector<1x14xf32>
    %1325 = arith.addf %1320, %1324 : vector<1x14xf32>
    %c103_177 = arith.constant 103 : index
    %1326 = memref.load %arg2[%c103_177] : memref<128xf32, #tpu.memory_space<smem>>
    %1327 = vector.extract_strided_slice %173 {offsets = [0, 1], sizes = [1, 14], strides = [1, 1]} : vector<1x15xf32> to vector<1x14xf32>
    %1328 = vector.broadcast %1326 : f32 to vector<1x14xf32>
    %1329 = arith.mulf %1327, %1328 : vector<1x14xf32>
    %1330 = arith.addf %1325, %1329 : vector<1x14xf32>
    %c104_178 = arith.constant 104 : index
    %1331 = memref.load %arg2[%c104_178] : memref<128xf32, #tpu.memory_space<smem>>
    %1332 = vector.extract_strided_slice %397 {offsets = [0, 1], sizes = [1, 14], strides = [1, 1]} : vector<1x15xf32> to vector<1x14xf32>
    %1333 = vector.broadcast %1331 : f32 to vector<1x14xf32>
    %1334 = arith.mulf %1332, %1333 : vector<1x14xf32>
    %1335 = arith.addf %1330, %1334 : vector<1x14xf32>
    %c105_179 = arith.constant 105 : index
    %1336 = memref.load %arg2[%c105_179] : memref<128xf32, #tpu.memory_space<smem>>
    %1337 = vector.extract_strided_slice %453 {offsets = [0, 0], sizes = [1, 14], strides = [1, 1]} : vector<1x15xf32> to vector<1x14xf32>
    %1338 = vector.broadcast %1336 : f32 to vector<1x14xf32>
    %1339 = arith.mulf %1337, %1338 : vector<1x14xf32>
    %1340 = arith.addf %1335, %1339 : vector<1x14xf32>
    %c106_180 = arith.constant 106 : index
    %1341 = memref.load %arg2[%c106_180] : memref<128xf32, #tpu.memory_space<smem>>
    %1342 = vector.extract_strided_slice %229 {offsets = [0, 1], sizes = [1, 14], strides = [1, 1]} : vector<1x15xf32> to vector<1x14xf32>
    %1343 = vector.broadcast %1341 : f32 to vector<1x14xf32>
    %1344 = arith.mulf %1342, %1343 : vector<1x14xf32>
    %1345 = arith.addf %1340, %1344 : vector<1x14xf32>
    %c107_181 = arith.constant 107 : index
    %1346 = memref.load %arg2[%c107_181] : memref<128xf32, #tpu.memory_space<smem>>
    %1347 = vector.extract_strided_slice %453 {offsets = [0, 1], sizes = [1, 14], strides = [1, 1]} : vector<1x15xf32> to vector<1x14xf32>
    %1348 = vector.broadcast %1346 : f32 to vector<1x14xf32>
    %1349 = arith.mulf %1347, %1348 : vector<1x14xf32>
    %1350 = arith.addf %1345, %1349 : vector<1x14xf32>
    %1351 = arith.maximumf %1289, %1350 : vector<1x14xf32>
    %cst_182 = arith.constant 0.000000e+00 : f32
    %1352 = vector.broadcast %cst_182 : f32 to vector<1x14xf32>
    %1353 = arith.maximumf %1351, %1352 : vector<1x14xf32>
    %c0_183 = arith.constant 0 : index
    %c0_184 = arith.constant 0 : index
    %c84_185 = arith.constant 84 : index
    %1354 = vector.load %arg3[%c0_183, %c0_184, %c84_185] : memref<1x1x112xf32, #tpu.memory_space<vmem>>, vector<1x1x14xf32>
    %1355 = vector.shape_cast %1354 : vector<1x1x14xf32> to vector<1x14xf32>
    %1356 = vector.shape_cast %1353 : vector<1x14xf32> to vector<1x1x14xf32>
    tpu.vector_store %arg3[%c0_183, %c0_184, %c84_185], %1356 {strides = array<i32>} : memref<1x1x112xf32, #tpu.memory_space<vmem>>, vector<1x1x14xf32>,
    %c127 = arith.constant 127 : index
    %1357 = memref.load %arg2[%c127] : memref<128xf32, #tpu.memory_space<smem>>
    %c108 = arith.constant 108 : index
    %1358 = memref.load %arg2[%c108] : memref<128xf32, #tpu.memory_space<smem>>
    %1359 = vector.extract_strided_slice %61 {offsets = [0, 0], sizes = [1, 14], strides = [1, 1]} : vector<1x15xf32> to vector<1x14xf32>
    %1360 = vector.broadcast %1358 : f32 to vector<1x14xf32>
    %1361 = arith.mulf %1359, %1360 : vector<1x14xf32>
    %1362 = vector.broadcast %1357 : f32 to vector<1x14xf32>
    %1363 = arith.addf %1361, %1362 : vector<1x14xf32>
    %c109 = arith.constant 109 : index
    %1364 = memref.load %arg2[%c109] : memref<128xf32, #tpu.memory_space<smem>>
    %1365 = vector.extract_strided_slice %285 {offsets = [0, 0], sizes = [1, 14], strides = [1, 1]} : vector<1x15xf32> to vector<1x14xf32>
    %1366 = vector.broadcast %1364 : f32 to vector<1x14xf32>
    %1367 = arith.mulf %1365, %1366 : vector<1x14xf32>
    %1368 = arith.addf %1363, %1367 : vector<1x14xf32>
    %c110 = arith.constant 110 : index
    %1369 = memref.load %arg2[%c110] : memref<128xf32, #tpu.memory_space<smem>>
    %1370 = vector.extract_strided_slice %61 {offsets = [0, 1], sizes = [1, 14], strides = [1, 1]} : vector<1x15xf32> to vector<1x14xf32>
    %1371 = vector.broadcast %1369 : f32 to vector<1x14xf32>
    %1372 = arith.mulf %1370, %1371 : vector<1x14xf32>
    %1373 = arith.addf %1368, %1372 : vector<1x14xf32>
    %c111 = arith.constant 111 : index
    %1374 = memref.load %arg2[%c111] : memref<128xf32, #tpu.memory_space<smem>>
    %1375 = vector.extract_strided_slice %117 {offsets = [0, 0], sizes = [1, 14], strides = [1, 1]} : vector<1x15xf32> to vector<1x14xf32>
    %1376 = vector.broadcast %1374 : f32 to vector<1x14xf32>
    %1377 = arith.mulf %1375, %1376 : vector<1x14xf32>
    %1378 = arith.addf %1373, %1377 : vector<1x14xf32>
    %c112 = arith.constant 112 : index
    %1379 = memref.load %arg2[%c112] : memref<128xf32, #tpu.memory_space<smem>>
    %1380 = vector.extract_strided_slice %341 {offsets = [0, 0], sizes = [1, 14], strides = [1, 1]} : vector<1x15xf32> to vector<1x14xf32>
    %1381 = vector.broadcast %1379 : f32 to vector<1x14xf32>
    %1382 = arith.mulf %1380, %1381 : vector<1x14xf32>
    %1383 = arith.addf %1378, %1382 : vector<1x14xf32>
    %c113 = arith.constant 113 : index
    %1384 = memref.load %arg2[%c113] : memref<128xf32, #tpu.memory_space<smem>>
    %1385 = vector.extract_strided_slice %117 {offsets = [0, 1], sizes = [1, 14], strides = [1, 1]} : vector<1x15xf32> to vector<1x14xf32>
    %1386 = vector.broadcast %1384 : f32 to vector<1x14xf32>
    %1387 = arith.mulf %1385, %1386 : vector<1x14xf32>
    %1388 = arith.addf %1383, %1387 : vector<1x14xf32>
    %c114 = arith.constant 114 : index
    %1389 = memref.load %arg2[%c114] : memref<128xf32, #tpu.memory_space<smem>>
    %1390 = vector.extract_strided_slice %173 {offsets = [0, 0], sizes = [1, 14], strides = [1, 1]} : vector<1x15xf32> to vector<1x14xf32>
    %1391 = vector.broadcast %1389 : f32 to vector<1x14xf32>
    %1392 = arith.mulf %1390, %1391 : vector<1x14xf32>
    %1393 = arith.addf %1388, %1392 : vector<1x14xf32>
    %c115 = arith.constant 115 : index
    %1394 = memref.load %arg2[%c115] : memref<128xf32, #tpu.memory_space<smem>>
    %1395 = vector.extract_strided_slice %397 {offsets = [0, 0], sizes = [1, 14], strides = [1, 1]} : vector<1x15xf32> to vector<1x14xf32>
    %1396 = vector.broadcast %1394 : f32 to vector<1x14xf32>
    %1397 = arith.mulf %1395, %1396 : vector<1x14xf32>
    %1398 = arith.addf %1393, %1397 : vector<1x14xf32>
    %c116 = arith.constant 116 : index
    %1399 = memref.load %arg2[%c116] : memref<128xf32, #tpu.memory_space<smem>>
    %1400 = vector.extract_strided_slice %173 {offsets = [0, 1], sizes = [1, 14], strides = [1, 1]} : vector<1x15xf32> to vector<1x14xf32>
    %1401 = vector.broadcast %1399 : f32 to vector<1x14xf32>
    %1402 = arith.mulf %1400, %1401 : vector<1x14xf32>
    %1403 = arith.addf %1398, %1402 : vector<1x14xf32>
    %c117 = arith.constant 117 : index
    %1404 = memref.load %arg2[%c117] : memref<128xf32, #tpu.memory_space<smem>>
    %1405 = vector.extract_strided_slice %229 {offsets = [0, 0], sizes = [1, 14], strides = [1, 1]} : vector<1x15xf32> to vector<1x14xf32>
    %1406 = vector.broadcast %1404 : f32 to vector<1x14xf32>
    %1407 = arith.mulf %1405, %1406 : vector<1x14xf32>
    %1408 = arith.addf %1403, %1407 : vector<1x14xf32>
    %c118 = arith.constant 118 : index
    %1409 = memref.load %arg2[%c118] : memref<128xf32, #tpu.memory_space<smem>>
    %1410 = vector.extract_strided_slice %453 {offsets = [0, 0], sizes = [1, 14], strides = [1, 1]} : vector<1x15xf32> to vector<1x14xf32>
    %1411 = vector.broadcast %1409 : f32 to vector<1x14xf32>
    %1412 = arith.mulf %1410, %1411 : vector<1x14xf32>
    %1413 = arith.addf %1408, %1412 : vector<1x14xf32>
    %c119 = arith.constant 119 : index
    %1414 = memref.load %arg2[%c119] : memref<128xf32, #tpu.memory_space<smem>>
    %1415 = vector.extract_strided_slice %229 {offsets = [0, 1], sizes = [1, 14], strides = [1, 1]} : vector<1x15xf32> to vector<1x14xf32>
    %1416 = vector.broadcast %1414 : f32 to vector<1x14xf32>
    %1417 = arith.mulf %1415, %1416 : vector<1x14xf32>
    %1418 = arith.addf %1413, %1417 : vector<1x14xf32>
    %c108_186 = arith.constant 108 : index
    %1419 = memref.load %arg2[%c108_186] : memref<128xf32, #tpu.memory_space<smem>>
    %1420 = vector.extract_strided_slice %285 {offsets = [0, 0], sizes = [1, 14], strides = [1, 1]} : vector<1x15xf32> to vector<1x14xf32>
    %1421 = vector.broadcast %1419 : f32 to vector<1x14xf32>
    %1422 = arith.mulf %1420, %1421 : vector<1x14xf32>
    %1423 = vector.broadcast %1357 : f32 to vector<1x14xf32>
    %1424 = arith.addf %1422, %1423 : vector<1x14xf32>
    %c109_187 = arith.constant 109 : index
    %1425 = memref.load %arg2[%c109_187] : memref<128xf32, #tpu.memory_space<smem>>
    %1426 = vector.extract_strided_slice %61 {offsets = [0, 1], sizes = [1, 14], strides = [1, 1]} : vector<1x15xf32> to vector<1x14xf32>
    %1427 = vector.broadcast %1425 : f32 to vector<1x14xf32>
    %1428 = arith.mulf %1426, %1427 : vector<1x14xf32>
    %1429 = arith.addf %1424, %1428 : vector<1x14xf32>
    %c110_188 = arith.constant 110 : index
    %1430 = memref.load %arg2[%c110_188] : memref<128xf32, #tpu.memory_space<smem>>
    %1431 = vector.extract_strided_slice %285 {offsets = [0, 1], sizes = [1, 14], strides = [1, 1]} : vector<1x15xf32> to vector<1x14xf32>
    %1432 = vector.broadcast %1430 : f32 to vector<1x14xf32>
    %1433 = arith.mulf %1431, %1432 : vector<1x14xf32>
    %1434 = arith.addf %1429, %1433 : vector<1x14xf32>
    %c111_189 = arith.constant 111 : index
    %1435 = memref.load %arg2[%c111_189] : memref<128xf32, #tpu.memory_space<smem>>
    %1436 = vector.extract_strided_slice %341 {offsets = [0, 0], sizes = [1, 14], strides = [1, 1]} : vector<1x15xf32> to vector<1x14xf32>
    %1437 = vector.broadcast %1435 : f32 to vector<1x14xf32>
    %1438 = arith.mulf %1436, %1437 : vector<1x14xf32>
    %1439 = arith.addf %1434, %1438 : vector<1x14xf32>
    %c112_190 = arith.constant 112 : index
    %1440 = memref.load %arg2[%c112_190] : memref<128xf32, #tpu.memory_space<smem>>
    %1441 = vector.extract_strided_slice %117 {offsets = [0, 1], sizes = [1, 14], strides = [1, 1]} : vector<1x15xf32> to vector<1x14xf32>
    %1442 = vector.broadcast %1440 : f32 to vector<1x14xf32>
    %1443 = arith.mulf %1441, %1442 : vector<1x14xf32>
    %1444 = arith.addf %1439, %1443 : vector<1x14xf32>
    %c113_191 = arith.constant 113 : index
    %1445 = memref.load %arg2[%c113_191] : memref<128xf32, #tpu.memory_space<smem>>
    %1446 = vector.extract_strided_slice %341 {offsets = [0, 1], sizes = [1, 14], strides = [1, 1]} : vector<1x15xf32> to vector<1x14xf32>
    %1447 = vector.broadcast %1445 : f32 to vector<1x14xf32>
    %1448 = arith.mulf %1446, %1447 : vector<1x14xf32>
    %1449 = arith.addf %1444, %1448 : vector<1x14xf32>
    %c114_192 = arith.constant 114 : index
    %1450 = memref.load %arg2[%c114_192] : memref<128xf32, #tpu.memory_space<smem>>
    %1451 = vector.extract_strided_slice %397 {offsets = [0, 0], sizes = [1, 14], strides = [1, 1]} : vector<1x15xf32> to vector<1x14xf32>
    %1452 = vector.broadcast %1450 : f32 to vector<1x14xf32>
    %1453 = arith.mulf %1451, %1452 : vector<1x14xf32>
    %1454 = arith.addf %1449, %1453 : vector<1x14xf32>
    %c115_193 = arith.constant 115 : index
    %1455 = memref.load %arg2[%c115_193] : memref<128xf32, #tpu.memory_space<smem>>
    %1456 = vector.extract_strided_slice %173 {offsets = [0, 1], sizes = [1, 14], strides = [1, 1]} : vector<1x15xf32> to vector<1x14xf32>
    %1457 = vector.broadcast %1455 : f32 to vector<1x14xf32>
    %1458 = arith.mulf %1456, %1457 : vector<1x14xf32>
    %1459 = arith.addf %1454, %1458 : vector<1x14xf32>
    %c116_194 = arith.constant 116 : index
    %1460 = memref.load %arg2[%c116_194] : memref<128xf32, #tpu.memory_space<smem>>
    %1461 = vector.extract_strided_slice %397 {offsets = [0, 1], sizes = [1, 14], strides = [1, 1]} : vector<1x15xf32> to vector<1x14xf32>
    %1462 = vector.broadcast %1460 : f32 to vector<1x14xf32>
    %1463 = arith.mulf %1461, %1462 : vector<1x14xf32>
    %1464 = arith.addf %1459, %1463 : vector<1x14xf32>
    %c117_195 = arith.constant 117 : index
    %1465 = memref.load %arg2[%c117_195] : memref<128xf32, #tpu.memory_space<smem>>
    %1466 = vector.extract_strided_slice %453 {offsets = [0, 0], sizes = [1, 14], strides = [1, 1]} : vector<1x15xf32> to vector<1x14xf32>
    %1467 = vector.broadcast %1465 : f32 to vector<1x14xf32>
    %1468 = arith.mulf %1466, %1467 : vector<1x14xf32>
    %1469 = arith.addf %1464, %1468 : vector<1x14xf32>
    %c118_196 = arith.constant 118 : index
    %1470 = memref.load %arg2[%c118_196] : memref<128xf32, #tpu.memory_space<smem>>
    %1471 = vector.extract_strided_slice %229 {offsets = [0, 1], sizes = [1, 14], strides = [1, 1]} : vector<1x15xf32> to vector<1x14xf32>
    %1472 = vector.broadcast %1470 : f32 to vector<1x14xf32>
    %1473 = arith.mulf %1471, %1472 : vector<1x14xf32>
    %1474 = arith.addf %1469, %1473 : vector<1x14xf32>
    %c119_197 = arith.constant 119 : index
    %1475 = memref.load %arg2[%c119_197] : memref<128xf32, #tpu.memory_space<smem>>
    %1476 = vector.extract_strided_slice %453 {offsets = [0, 1], sizes = [1, 14], strides = [1, 1]} : vector<1x15xf32> to vector<1x14xf32>
    %1477 = vector.broadcast %1475 : f32 to vector<1x14xf32>
    %1478 = arith.mulf %1476, %1477 : vector<1x14xf32>
    %1479 = arith.addf %1474, %1478 : vector<1x14xf32>
    %1480 = arith.maximumf %1418, %1479 : vector<1x14xf32>
    %cst_198 = arith.constant 0.000000e+00 : f32
    %1481 = vector.broadcast %cst_198 : f32 to vector<1x14xf32>
    %1482 = arith.maximumf %1480, %1481 : vector<1x14xf32>
    %c0_199 = arith.constant 0 : index
    %c0_200 = arith.constant 0 : index
    %c98_201 = arith.constant 98 : index
    %1483 = vector.load %arg3[%c0_199, %c0_200, %c98_201] : memref<1x1x112xf32, #tpu.memory_space<vmem>>, vector<1x1x14xf32>
    %1484 = vector.shape_cast %1483 : vector<1x1x14xf32> to vector<1x14xf32>
    %1485 = vector.shape_cast %1482 : vector<1x14xf32> to vector<1x1x14xf32>
    tpu.vector_store %arg3[%c0_199, %c0_200, %c98_201], %1485 {strides = array<i32>} : memref<1x1x112xf32, #tpu.memory_space<vmem>>, vector<1x1x14xf32>,
    return
  }
  func.func @transform_0(%arg0: i32) -> (i32, i32, i32) {
    %c0_i32 = arith.constant 0 : i32
    %c0_i32_0 = arith.constant 0 : i32
    %c0_i32_1 = arith.constant 0 : i32
    return %arg0, %c0_i32, %c0_i32_0 : i32, i32, i32
  }
  func.func @transform_1(%arg0: i32) -> i32 {
    %c0_i32 = arith.constant 0 : i32
    %c0_i32_0 = arith.constant 0 : i32
    return %c0_i32 : i32
  }
  func.func @transform_2(%arg0: i32) -> (i32, i32, i32) {
    %c0_i32 = arith.constant 0 : i32
    %c0_i32_0 = arith.constant 0 : i32
    %c0_i32_1 = arith.constant 0 : i32
    return %arg0, %c0_i32, %c0_i32_0 : i32, i32, i32
  }
}

</mosaic_0001>

<llo_original>
// kernel: tpu_custom_call.1
$region0: #{tpu_custom_call.1}
  #allocation0 [shape = 'u32[]', space=smem, size = 0x4, offset = 0x4, fixed_abs, tag = 'smem constant byte address 0x4 - core index']
  #allocation1 [shape = 'u32[144,128]{1,0:T(1,128)}', space=vmem, size = 0x12000, scoped, tag = 'internal scratch']
  %s0 = inlined_call_operand.hbm [shape: f32[2,4,16], index: 0, kind: input, shape index: {}]
  %s1 = inlined_call_operand.vmem [shape: f32[128], index: 1, kind: input, shape index: {}]
  %s2 = inlined_call_operand.hbm [shape: f32[2,1,112], index: 2, kind: output, shape index: {}]
  %s3 = sld [smem:[#allocation0]]
  $region49: #{tpu_custom_call.1} parent=0
    _
  %s5 = ssub.s32 1, %s3
  %s6 = scalar_select 0, %s5, %s3
  $region1: #{tpu_custom_call.1} parent=0
    #allocation2 [shape = 'u8[4096]{0}', space=vmem, size = 0x1000, scoped, tag = 'input window, operand 0']
    #allocation3 [shape = 's32[2]{0}', space=sflag, size = 0x8, scoped, tag = 'scoped memory for tpu_custom_call.1']
    #allocation4 [shape = 's32[2]{0}', space=sflag, size = 0x8, scoped, tag = 'scoped memory for tpu_custom_call.1']
    #allocation5 [shape = 's32[2]{0}', space=sflag, size = 0x8, scoped, tag = 'scoped memory for tpu_custom_call.1']
    #allocation6 [shape = 'u8[512]{0}', space=smem, size = 0x200, scoped, tag = 'input window, operand 1, single buffered']
    #allocation7 [shape = 'u8[1024]{0}', space=vmem, size = 0x400, scoped, tag = 'output window, operand 0']
    %7 = vsyncpa [#allocation3], 0
    %s8 = scalar_lea.sflag [#allocation3], 1
    %9 = vsyncpa %s8, 0
    %10 = vsyncpa [#allocation5], 0
    %11 = vsyncpa [#allocation4], 0
    %s12 = scalar_lea.sflag [#allocation4], 1
    %13 = vsyncpa %s12, 0
    loop: start=0, step=1, limit=4
    $region2: #{tpu_custom_call.1} parent=1 // loop_pre_header
      _
    $region3: #{tpu_custom_call.1} parent=1 // loop_header
      %s15 = sphi 0, %s19
      %p16 = scmp.ge.s32.totalorder %s15, 4
      %s25 = sphi 0, %s27
      %s28 = sphi 0, %s25
      %s29 = sphi 0, %s28
      %s45 = sphi 0, %s29
      %s49 = sphi 0, %s49
      %s51 = sphi 0, %s49
      %s52 = sphi 0, %s51
      %s66 = sphi 0, %s52
      %s72 = sphi 0, %s74
      %s75 = sphi 0, %s72
      %s76 = sphi 0, %s75
      %s92 = sphi 0, %s76
    $region4: #{tpu_custom_call.1} parent=1 // loop_header_branch
      %18 = sbr.rel (%p16) target = $region8
    $region5: #{tpu_custom_call.1} parent=1 // loop_body
      %s20 = ssub.s32 %s15, 1
      %s21 = ssub.s32 %s15, 2
      %s22 = sadd.s32 %s15, 1
      %s23 = ssub.s32 %s15, %s22
      %p24 = scmp.eq.s32.totalorder %s23, 0
      %s26 = sadd.s32 %s25, 1
      %s27 = scalar_select %p24, %s25, %s26
      %p30 = pneg %p24
      %p31 = scmp.eq.s32.totalorder %s15, 1
      %p32 = por %p30, %p31
      %p33 = scmp.ne.s32.totalorder %s25, %s28
      %p34 = scmp.eq.s32.totalorder %s15, 0
      %p35 = por %p33, %p34
      %p36 = scmp.ne.s32.totalorder %s25, %s28
      %p37 = scmp.eq.s32.totalorder %s20, 1
      %p38 = por %p36, %p37
      %p39 = scmp.ne.s32.totalorder %s28, %s29
      %p40 = scmp.eq.s32.totalorder %s20, 0
      %p41 = por %p39, %p40
      %p42 = scmp.ne.s32.totalorder %s28, %s29
      %p43 = scmp.eq.s32.totalorder %s21, 1
      %p44 = por %p42, %p43
      %p46 = scmp.ne.s32.totalorder %s29, %s45
      %p47 = scmp.eq.s32.totalorder %s21, 0
      %p48 = por %p46, %p47
      %s50 = sadd.s32 %s49, 1
      %p53 = scmp.eq.s32.totalorder %s15, 1
      %p54 = scmp.ne.s32.totalorder %s49, %s51
      %p55 = scmp.eq.s32.totalorder %s15, 0
      %p56 = por %p54, %p55
      %p57 = scmp.ne.s32.totalorder %s49, %s51
      %p58 = scmp.eq.s32.totalorder %s20, 1
      %p59 = por %p57, %p58
      %p60 = scmp.ne.s32.totalorder %s51, %s52
      %p61 = scmp.eq.s32.totalorder %s20, 0
      %p62 = por %p60, %p61
      %p63 = scmp.ne.s32.totalorder %s51, %s52
      %p64 = scmp.eq.s32.totalorder %s21, 1
      %p65 = por %p63, %p64
      %p67 = scmp.ne.s32.totalorder %s52, %s66
      %p68 = scmp.eq.s32.totalorder %s21, 0
      %p69 = por %p67, %p68
      %s70 = ssub.s32 %s15, %s22
      %p71 = scmp.eq.s32.totalorder %s70, 0
      %s73 = sadd.s32 %s72, 1
      %s74 = scalar_select %p71, %s72, %s73
      %p77 = pneg %p71
      %p78 = scmp.eq.s32.totalorder %s15, 1
      %p79 = por %p77, %p78
      %p80 = scmp.ne.s32.totalorder %s72, %s75
      %p81 = scmp.eq.s32.totalorder %s15, 0
      %p82 = por %p80, %p81
      %p83 = scmp.ne.s32.totalorder %s72, %s75
      %p84 = scmp.eq.s32.totalorder %s20, 1
      %p85 = por %p83, %p84
      %p86 = scmp.ne.s32.totalorder %s75, %s76
      %p87 = scmp.eq.s32.totalorder %s20, 0
      %p88 = por %p86, %p87
      %p89 = scmp.ne.s32.totalorder %s75, %s76
      %p90 = scmp.eq.s32.totalorder %s21, 1
      %p91 = por %p89, %p90
      %p93 = scmp.ne.s32.totalorder %s76, %s92
      %p94 = scmp.eq.s32.totalorder %s21, 0
      %p95 = por %p93, %p94
      %p96 = scmp.le.s32.totalorder 1, %s15
      %p97 = scmp.lt.s32.totalorder %s15, 3
      %p98 = pnand %p96, %p97
      %p99 = pneg %p98
      // Predicated region
      $region9: #{tpu_custom_call.1} parent=5 // pred_check
        _
      $region10: #{tpu_custom_call.1} parent=5 // pred_check_branch
        %101 = sbr.rel (%p98) target = $region12
      $region11: #{tpu_custom_call.1} parent=5 // pred_region
        %s102 = ssub.s32 %s15, 1
        // Predicated region
        $region13: #{tpu_custom_call.1} parent=11 // pred_check
          %p103 = pneg %p62
        $region14: #{tpu_custom_call.1} parent=11 // pred_check_branch
          %105 = sbr.rel (%p103) target = $region16
        $region15: #{tpu_custom_call.1} parent=11 // pred_region
          %s107 = ssub.s32 16, 16
          %108 = vsyncadd [#allocation5], %s107
          %s110 = sshll.u32 %s1, 4
          %s111 = int_to_ptr.vmem [resolvable:$true] %s110
          %113 = dma.vmem_to_smem %s111, 16, [#allocation6], [#allocation5]
        $region16: #{tpu_custom_call.1} parent=11 // pred_fallthru
          _
      $region12: #{tpu_custom_call.1} parent=5 // pred_fallthru
        _
      %p114 = scmp.lt.s32.totalorder %s15, 2
      // Predicated region
      $region17: #{tpu_custom_call.1} parent=5 // pred_check
        %p115 = pneg %p114
      $region18: #{tpu_custom_call.1} parent=5 // pred_check_branch
        %117 = sbr.rel (%p115) target = $region20
      $region19: #{tpu_custom_call.1} parent=5 // pred_region
        // Predicated region
        $region21: #{tpu_custom_call.1} parent=19 // pred_check
          %p118 = pneg %p35
        $region22: #{tpu_custom_call.1} parent=19 // pred_check_branch
          %120 = sbr.rel (%p118) target = $region24
        $region23: #{tpu_custom_call.1} parent=19 // pred_region
          %s121 = sand.u32 %s25, 1
          %s122 = scalar_lea.sflag [#allocation3], %s121
          %s123 = sand.u32 %s25, 1
          %s124 = smul.addr %s123, 4
          %s125 = scalar_lea.vmem [#allocation2], %s124
          %s127 = ssub.s32 64, 64
          %128 = vsyncadd %s122, %s127
          %s129 = smul.addr %s15, 64
          %s130 = scalar_lea.hbm %s0, %s129
          %s132 = sshll.u32 %s125, 4
          %s133 = int_to_ptr.vmem [resolvable:$true] %s132
          %135 = dma.hbm_to_vmem [thread:$0]  %s130, 64, %s133, %s122
        $region24: #{tpu_custom_call.1} parent=19 // pred_fallthru
          _
      $region20: #{tpu_custom_call.1} parent=5 // pred_fallthru
        _
      %p136 = scmp.le.s32.totalorder 1, %s15
      %p137 = scmp.lt.s32.totalorder %s15, 3
      %p138 = pnand %p136, %p137
      %p139 = pneg %p138
      // Predicated region
      $region25: #{tpu_custom_call.1} parent=5 // pred_check
        _
      $region26: #{tpu_custom_call.1} parent=5 // pred_check_branch
        %141 = sbr.rel (%p138) target = $region28
      $region27: #{tpu_custom_call.1} parent=5 // pred_region
        %s142 = ssub.s32 %s15, 1
        %s143 = sand.u32 %s28, 1
        %s144 = scalar_lea.sflag [#allocation3], %s143
        %s145 = sand.u32 %s28, 1
        %s146 = smul.addr %s145, 4
        %s147 = scalar_lea.vmem [#allocation2], %s146
        // Predicated region
        $region29: #{tpu_custom_call.1} parent=27 // pred_check
          %p148 = pneg %p41
        $region30: #{tpu_custom_call.1} parent=27 // pred_check_branch
          %150 = sbr.rel (%p148) target = $region32
        $region31: #{tpu_custom_call.1} parent=27 // pred_region
          %151 = dma.done %s144, 64
        $region32: #{tpu_custom_call.1} parent=27 // pred_fallthru
          _
        // Predicated region
        $region33: #{tpu_custom_call.1} parent=27 // pred_check
          %p152 = pneg %p62
        $region34: #{tpu_custom_call.1} parent=27 // pred_check_branch
          %154 = sbr.rel (%p152) target = $region36
        $region35: #{tpu_custom_call.1} parent=27 // pred_region
          %155 = dma.done [#allocation5], 16
        $region36: #{tpu_custom_call.1} parent=27 // pred_fallthru
          _
        %156 = sfence
        %s157 = sand.u32 %s28, 1
        %s158 = scalar_lea.sflag [#allocation3], %s157
        %s159 = sand.u32 %s28, 1
        %s160 = smul.addr %s159, 4
        %s161 = scalar_lea.vmem [#allocation2], %s160
        %p162 = pneg %p41
        %p163 = pneg %p38
        %p164 = pneg %p62
        %p165 = pneg %p59
        %p166 = pneg %p88
        %p167 = pneg %p85
        %s168 = sand.u32 %s75, 1
        %s169 = scalar_lea.sflag [#allocation4], %s168
        %s170 = sand.u32 %s75, 1
        %s171 = scalar_lea.vmem [#allocation7], %s170
        %v172 = vld [vmem:[%s147] sm:$0xf]
        %s173 = sld [smem:[#allocation6 + $0x14]]
        %s174 = sld [smem:[#allocation6]]
        %v175 = vstv %s174
        %v176 = vmul.f32 %v172, %v175
        %v177 = vstv %s173
        %v178 = vadd.f32 %v176, %v177
        %s179 = sld [smem:[#allocation6 + $0x1]]
        %v180 = vstv %s179
        %v181 = vmul.f32 %v172, %v180
        %v183 = vrot.slane %v181, 1
        %v185 = vadd.f32 %v178, %v183
        %s186 = sld [smem:[#allocation6 + $0x2]]
        %v187 = vstv %s186
        %v188 = vmul.f32 %v172, %v187
        %v190 = vrot.slane %v188, 2
        %v192 = vadd.f32 %v185, %v190
        %s193 = sld [smem:[#allocation6 + $0x3]]
        %v194 = vstv %s193
        %v195 = vmul.f32 %v172, %v194
        %v197 = vrot.slane %v195, 3
        %v199 = vadd.f32 %v192, %v197
        %s200 = sld [smem:[#allocation6 + $0x4]]
        %v201 = vstv %s200
        %v202 = vmul.f32 %v172, %v201
        %204 = vrot.lane.b32.xlu0 %v202, 127
        %v205 = vpop.permute.xlu0 %204
        %v207 = vadd.f32 %v199, %v205
        %v208 = vrot.slane %v195, 7
        %209 = vrot.lane.b32.xlu0 %v208, 127
        %v210 = vpop.permute.xlu0 %209
        %v212 = vadd.f32 %v192, %v210
        %v213 = vadd.f32 %v212, %v205
        %v215 = vrot.slane %v213, 1
        %v217 = vmax.f32 %v207, %v215
        %v218 = vmax.f32 %v217, 0.0
        %s219 = sld [smem:[#allocation6 + $0x15]]
        %s220 = sld [smem:[#allocation6 + $0x5]]
        %v221 = vstv %s220
        %v222 = vmul.f32 %v172, %v221
        %v223 = vstv %s219
        %v224 = vadd.f32 %v222, %v223
        %s225 = sld [smem:[#allocation6 + $0x6]]
        %v226 = vstv %s225
        %v227 = vmul.f32 %v172, %v226
        %v229 = vrot.slane %v227, 1
        %v231 = vadd.f32 %v224, %v229
        %s232 = sld [smem:[#allocation6 + $0x7]]
        %v233 = vstv %s232
        %v234 = vmul.f32 %v172, %v233
        %v236 = vrot.slane %v234, 2
        %v238 = vadd.f32 %v231, %v236
        %s239 = sld [smem:[#allocation6 + $0x8]]
        %v240 = vstv %s239
        %v241 = vmul.f32 %v172, %v240
        %v243 = vrot.slane %v241, 3
        %v245 = vadd.f32 %v238, %v243
        %s246 = sld [smem:[#allocation6 + $0x9]]
        %v247 = vstv %s246
        %v248 = vmul.f32 %v172, %v247
        %250 = vrot.lane.b32.xlu0 %v248, 127
        %v251 = vpop.permute.xlu0 %250
        %v253 = vadd.f32 %v245, %v251
        %v254 = vrot.slane %v241, 7
        %255 = vrot.lane.b32.xlu0 %v254, 127
        %v256 = vpop.permute.xlu0 %255
        %v258 = vadd.f32 %v238, %v256
        %v259 = vadd.f32 %v258, %v251
        %v261 = vrot.slane %v259, 1
        %v263 = vmax.f32 %v253, %v261
        %v264 = vmax.f32 %v263, 0.0
        %s265 = sld [smem:[#allocation6 + $0x16]]
        %s266 = sld [smem:[#allocation6 + $0xa]]
        %v267 = vstv %s266
        %v268 = vmul.f32 %v172, %v267
        %v269 = vstv %s265
        %v270 = vadd.f32 %v268, %v269
        %s271 = sld [smem:[#allocation6 + $0xb]]
        %v272 = vstv %s271
        %v273 = vmul.f32 %v172, %v272
        %v275 = vrot.slane %v273, 1
        %v277 = vadd.f32 %v270, %v275
        %s278 = sld [smem:[#allocation6 + $0xc]]
        %v279 = vstv %s278
        %v280 = vmul.f32 %v172, %v279
        %v282 = vrot.slane %v280, 2
        %v284 = vadd.f32 %v277, %v282
        %s285 = sld [smem:[#allocation6 + $0xd]]
        %v286 = vstv %s285
        %v287 = vmul.f32 %v172, %v286
        %v289 = vrot.slane %v287, 3
        %v291 = vadd.f32 %v284, %v289
        %s292 = sld [smem:[#allocation6 + $0xe]]
        %v293 = vstv %s292
        %v294 = vmul.f32 %v172, %v293
        %296 = vrot.lane.b32.xlu0 %v294, 127
        %v297 = vpop.permute.xlu0 %296
        %v299 = vadd.f32 %v291, %v297
        %v300 = vrot.slane %v287, 7
        %301 = vrot.lane.b32.xlu0 %v300, 127
        %v302 = vpop.permute.xlu0 %301
        %v304 = vadd.f32 %v284, %v302
        %v305 = vadd.f32 %v304, %v297
        %v307 = vrot.slane %v305, 1
        %v309 = vmax.f32 %v299, %v307
        %v310 = vmax.f32 %v309, 0.0
        %s311 = sld [smem:[#allocation6 + $0x17]]
        %s312 = sld [smem:[#allocation6 + $0xf]]
        %v313 = vstv %s312
        %v314 = vmul.f32 %v172, %v313
        %v315 = vstv %s311
        %v316 = vadd.f32 %v314, %v315
        %s317 = sld [smem:[#allocation6 + $0x10]]
        %v318 = vstv %s317
        %v319 = vmul.f32 %v172, %v318
        %v321 = vrot.slane %v319, 1
        %v323 = vadd.f32 %v316, %v321
        %s324 = sld [smem:[#allocation6 + $0x11]]
        %v325 = vstv %s324
        %v326 = vmul.f32 %v172, %v325
        %v328 = vrot.slane %v326, 2
        %v330 = vadd.f32 %v323, %v328
        %s331 = sld [smem:[#allocation6 + $0x12]]
        %v332 = vstv %s331
        %v333 = vmul.f32 %v172, %v332
        %v335 = vrot.slane %v333, 3
        %v337 = vadd.f32 %v330, %v335
        %s338 = sld [smem:[#allocation6 + $0x13]]
        %v339 = vstv %s338
        %v340 = vmul.f32 %v172, %v339
        %342 = vrot.lane.b32.xlu0 %v340, 127
        %v343 = vpop.permute.xlu0 %342
        %v345 = vadd.f32 %v337, %v343
        %v346 = vrot.slane %v333, 7
        %347 = vrot.lane.b32.xlu0 %v346, 127
        %v348 = vpop.permute.xlu0 %347
        %v350 = vadd.f32 %v330, %v348
        %v351 = vadd.f32 %v350, %v343
        %v353 = vrot.slane %v351, 1
        %v355 = vmax.f32 %v345, %v353
        %v356 = vmax.f32 %v355, 0.0
        %v357 = vrot.slane %v188, 6
        %358 = vrot.lane.b32.xlu0 %v357, 127
        %v359 = vpop.permute.xlu0 %358
        %v361 = vadd.f32 %v185, %v359
        %v362 = vadd.f32 %v361, %v210
        %v363 = vadd.f32 %v362, %v205
        %v364 = vrot.slane %v181, 5
        %365 = vrot.lane.b32.xlu0 %v364, 127
        %v366 = vpop.permute.xlu0 %365
        %v368 = vadd.f32 %v178, %v366
        %v369 = vadd.f32 %v368, %v359
        %v370 = vadd.f32 %v369, %v210
        %v371 = vadd.f32 %v370, %v205
        %v373 = vrot.slane %v371, 1
        %v375 = vmax.f32 %v363, %v373
        %v376 = vmax.f32 %v375, 0.0
        %v377 = vrot.slane %v234, 6
        %378 = vrot.lane.b32.xlu0 %v377, 127
        %v379 = vpop.permute.xlu0 %378
        %v381 = vadd.f32 %v231, %v379
        %v382 = vadd.f32 %v381, %v256
        %v383 = vadd.f32 %v382, %v251
        %v384 = vrot.slane %v227, 5
        %385 = vrot.lane.b32.xlu0 %v384, 127
        %v386 = vpop.permute.xlu0 %385
        %v388 = vadd.f32 %v224, %v386
        %v389 = vadd.f32 %v388, %v379
        %v390 = vadd.f32 %v389, %v256
        %v391 = vadd.f32 %v390, %v251
        %v393 = vrot.slane %v391, 1
        %v395 = vmax.f32 %v383, %v393
        %v396 = vmax.f32 %v395, 0.0
        %v397 = vrot.slane %v280, 6
        %398 = vrot.lane.b32.xlu0 %v397, 127
        %v399 = vpop.permute.xlu0 %398
        %v401 = vadd.f32 %v277, %v399
        %v402 = vadd.f32 %v401, %v302
        %v403 = vadd.f32 %v402, %v297
        %v404 = vrot.slane %v273, 5
        %405 = vrot.lane.b32.xlu0 %v404, 127
        %v406 = vpop.permute.xlu0 %405
        %v408 = vadd.f32 %v270, %v406
        %v409 = vadd.f32 %v408, %v399
        %v410 = vadd.f32 %v409, %v302
        %v411 = vadd.f32 %v410, %v297
        %v413 = vrot.slane %v411, 1
        %v415 = vmax.f32 %v403, %v413
        %v416 = vmax.f32 %v415, 0.0
        %v417 = vrot.slane %v326, 6
        %418 = vrot.lane.b32.xlu0 %v417, 127
        %v419 = vpop.permute.xlu0 %418
        %v421 = vadd.f32 %v323, %v419
        %v422 = vadd.f32 %v421, %v348
        %v423 = vadd.f32 %v422, %v343
        %v424 = vrot.slane %v319, 5
        %425 = vrot.lane.b32.xlu0 %v424, 127
        %v426 = vpop.permute.xlu0 %425
        %v428 = vadd.f32 %v316, %v426
        %v429 = vadd.f32 %v428, %v419
        %v430 = vadd.f32 %v429, %v348
        %v431 = vadd.f32 %v430, %v343
        %v433 = vrot.slane %v431, 1
        %v435 = vmax.f32 %v423, %v433
        %v436 = vmax.f32 %v435, 0.0
        %s437 = sld [smem:[#allocation6 + $0x78]]
        %s438 = sld [smem:[#allocation6 + $0x18]]
        %v439 = vstv %s438
        %v440 = vmul.f32 %v218, %v439
        %v441 = vstv %s437
        %v442 = vadd.f32 %v440, %v441
        %s443 = sld [smem:[#allocation6 + $0x19]]
        %v444 = vstv %s443
        %v445 = vmul.f32 %v376, %v444
        %v447 = vrot.slane %v445, 2
        %v449 = vadd.f32 %v442, %v447
        %s450 = sld [smem:[#allocation6 + $0x1a]]
        %v451 = vstv %s450
        %v452 = vmul.f32 %v218, %v451
        %454 = vrot.lane.b32.xlu0 %v452, 127
        %v455 = vpop.permute.xlu0 %454
        %v457 = vadd.f32 %v449, %v455
        %s458 = sld [smem:[#allocation6 + $0x1b]]
        %v459 = vstv %s458
        %v460 = vmul.f32 %v264, %v459
        %v461 = vadd.f32 %v457, %v460
        %s462 = sld [smem:[#allocation6 + $0x1c]]
        %v463 = vstv %s462
        %v464 = vmul.f32 %v396, %v463
        %v466 = vrot.slane %v464, 2
        %v468 = vadd.f32 %v461, %v466
        %s469 = sld [smem:[#allocation6 + $0x1d]]
        %v470 = vstv %s469
        %v471 = vmul.f32 %v264, %v470
        %473 = vrot.lane.b32.xlu0 %v471, 127
        %v474 = vpop.permute.xlu0 %473
        %v476 = vadd.f32 %v468, %v474
        %s477 = sld [smem:[#allocation6 + $0x1e]]
        %v478 = vstv %s477
        %v479 = vmul.f32 %v310, %v478
        %v480 = vadd.f32 %v476, %v479
        %s481 = sld [smem:[#allocation6 + $0x1f]]
        %v482 = vstv %s481
        %v483 = vmul.f32 %v416, %v482
        %v485 = vrot.slane %v483, 2
        %v487 = vadd.f32 %v480, %v485
        %s488 = sld [smem:[#allocation6 + $0x20]]
        %v489 = vstv %s488
        %v490 = vmul.f32 %v310, %v489
        %492 = vrot.lane.b32.xlu0 %v490, 127
        %v493 = vpop.permute.xlu0 %492
        %v495 = vadd.f32 %v487, %v493
        %s496 = sld [smem:[#allocation6 + $0x21]]
        %v497 = vstv %s496
        %v498 = vmul.f32 %v356, %v497
        %v499 = vadd.f32 %v495, %v498
        %s500 = sld [smem:[#allocation6 + $0x22]]
        %v501 = vstv %s500
        %v502 = vmul.f32 %v436, %v501
        %v504 = vrot.slane %v502, 2
        %v506 = vadd.f32 %v499, %v504
        %s507 = sld [smem:[#allocation6 + $0x23]]
        %v508 = vstv %s507
        %v509 = vmul.f32 %v356, %v508
        %511 = vrot.lane.b32.xlu0 %v509, 127
        %v512 = vpop.permute.xlu0 %511
        %v514 = vadd.f32 %v506, %v512
        %v515 = vmul.f32 %v376, %v439
        %v516 = vadd.f32 %v515, %v441
        %v517 = vmul.f32 %v218, %v444
        %v519 = vrot.slane %v517, 6
        %520 = vrot.lane.b32.xlu0 %v519, 127
        %v521 = vpop.permute.xlu0 %520
        %v523 = vadd.f32 %v516, %v521
        %v524 = vmul.f32 %v376, %v451
        %526 = vrot.lane.b32.xlu0 %v524, 127
        %v527 = vpop.permute.xlu0 %526
        %v529 = vadd.f32 %v523, %v527
        %v530 = vmul.f32 %v396, %v459
        %v531 = vadd.f32 %v529, %v530
        %v532 = vmul.f32 %v264, %v463
        %v534 = vrot.slane %v532, 6
        %535 = vrot.lane.b32.xlu0 %v534, 127
        %v536 = vpop.permute.xlu0 %535
        %v538 = vadd.f32 %v531, %v536
        %v539 = vmul.f32 %v396, %v470
        %541 = vrot.lane.b32.xlu0 %v539, 127
        %v542 = vpop.permute.xlu0 %541
        %v544 = vadd.f32 %v538, %v542
        %v545 = vmul.f32 %v416, %v478
        %v546 = vadd.f32 %v544, %v545
        %v547 = vmul.f32 %v310, %v482
        %v549 = vrot.slane %v547, 6
        %550 = vrot.lane.b32.xlu0 %v549, 127
        %v551 = vpop.permute.xlu0 %550
        %v553 = vadd.f32 %v546, %v551
        %v554 = vmul.f32 %v416, %v489
        %556 = vrot.lane.b32.xlu0 %v554, 127
        %v557 = vpop.permute.xlu0 %556
        %v559 = vadd.f32 %v553, %v557
        %v560 = vmul.f32 %v436, %v497
        %v561 = vadd.f32 %v559, %v560
        %v562 = vmul.f32 %v356, %v501
        %v564 = vrot.slane %v562, 6
        %565 = vrot.lane.b32.xlu0 %v564, 127
        %v566 = vpop.permute.xlu0 %565
        %v568 = vadd.f32 %v561, %v566
        %v569 = vmul.f32 %v436, %v508
        %571 = vrot.lane.b32.xlu0 %v569, 127
        %v572 = vpop.permute.xlu0 %571
        %v574 = vadd.f32 %v568, %v572
        %v576 = vrot.slane %v574, 2
        %v578 = vmax.f32 %v514, %v576
        %v579 = vmax.f32 %v578, 0.0
        %vm580 = vcmask 106496
        %581 = vst.msk [vmem:[%s171] sm:$0x1] %vm580, %v579
        %s582 = sld [smem:[#allocation6 + $0x79]]
        %s583 = sld [smem:[#allocation6 + $0x24]]
        %v584 = vstv %s583
        %v585 = vmul.f32 %v218, %v584
        %v586 = vstv %s582
        %v587 = vadd.f32 %v585, %v586
        %s588 = sld [smem:[#allocation6 + $0x25]]
        %v589 = vstv %s588
        %v590 = vmul.f32 %v376, %v589
        %v592 = vrot.slane %v590, 2
        %v594 = vadd.f32 %v587, %v592
        %s595 = sld [smem:[#allocation6 + $0x26]]
        %v596 = vstv %s595
        %v597 = vmul.f32 %v218, %v596
        %599 = vrot.lane.b32.xlu0 %v597, 127
        %v600 = vpop.permute.xlu0 %599
        %v602 = vadd.f32 %v594, %v600
        %s603 = sld [smem:[#allocation6 + $0x27]]
        %v604 = vstv %s603
        %v605 = vmul.f32 %v264, %v604
        %v606 = vadd.f32 %v602, %v605
        %s607 = sld [smem:[#allocation6 + $0x28]]
        %v608 = vstv %s607
        %v609 = vmul.f32 %v396, %v608
        %v611 = vrot.slane %v609, 2
        %v613 = vadd.f32 %v606, %v611
        %s614 = sld [smem:[#allocation6 + $0x29]]
        %v615 = vstv %s614
        %v616 = vmul.f32 %v264, %v615
        %618 = vrot.lane.b32.xlu0 %v616, 127
        %v619 = vpop.permute.xlu0 %618
        %v621 = vadd.f32 %v613, %v619
        %s622 = sld [smem:[#allocation6 + $0x2a]]
        %v623 = vstv %s622
        %v624 = vmul.f32 %v310, %v623
        %v625 = vadd.f32 %v621, %v624
        %s626 = sld [smem:[#allocation6 + $0x2b]]
        %v627 = vstv %s626
        %v628 = vmul.f32 %v416, %v627
        %v630 = vrot.slane %v628, 2
        %v632 = vadd.f32 %v625, %v630
        %s633 = sld [smem:[#allocation6 + $0x2c]]
        %v634 = vstv %s633
        %v635 = vmul.f32 %v310, %v634
        %637 = vrot.lane.b32.xlu0 %v635, 127
        %v638 = vpop.permute.xlu0 %637
        %v640 = vadd.f32 %v632, %v638
        %s641 = sld [smem:[#allocation6 + $0x2d]]
        %v642 = vstv %s641
        %v643 = vmul.f32 %v356, %v642
        %v644 = vadd.f32 %v640, %v643
        %s645 = sld [smem:[#allocation6 + $0x2e]]
        %v646 = vstv %s645
        %v647 = vmul.f32 %v436, %v646
        %v649 = vrot.slane %v647, 2
        %v651 = vadd.f32 %v644, %v649
        %s652 = sld [smem:[#allocation6 + $0x2f]]
        %v653 = vstv %s652
        %v654 = vmul.f32 %v356, %v653
        %656 = vrot.lane.b32.xlu0 %v654, 127
        %v657 = vpop.permute.xlu0 %656
        %v659 = vadd.f32 %v651, %v657
        %v660 = vmul.f32 %v376, %v584
        %v661 = vadd.f32 %v660, %v586
        %v662 = vmul.f32 %v218, %v589
        %v664 = vrot.slane %v662, 6
        %665 = vrot.lane.b32.xlu0 %v664, 127
        %v666 = vpop.permute.xlu0 %665
        %v668 = vadd.f32 %v661, %v666
        %v669 = vmul.f32 %v376, %v596
        %671 = vrot.lane.b32.xlu0 %v669, 127
        %v672 = vpop.permute.xlu0 %671
        %v674 = vadd.f32 %v668, %v672
        %v675 = vmul.f32 %v396, %v604
        %v676 = vadd.f32 %v674, %v675
        %v677 = vmul.f32 %v264, %v608
        %v679 = vrot.slane %v677, 6
        %680 = vrot.lane.b32.xlu0 %v679, 127
        %v681 = vpop.permute.xlu0 %680
        %v683 = vadd.f32 %v676, %v681
        %v684 = vmul.f32 %v396, %v615
        %686 = vrot.lane.b32.xlu0 %v684, 127
        %v687 = vpop.permute.xlu0 %686
        %v689 = vadd.f32 %v683, %v687
        %v690 = vmul.f32 %v416, %v623
        %v691 = vadd.f32 %v689, %v690
        %v692 = vmul.f32 %v310, %v627
        %v694 = vrot.slane %v692, 6
        %695 = vrot.lane.b32.xlu0 %v694, 127
        %v696 = vpop.permute.xlu0 %695
        %v698 = vadd.f32 %v691, %v696
        %v699 = vmul.f32 %v416, %v634
        %701 = vrot.lane.b32.xlu0 %v699, 127
        %v702 = vpop.permute.xlu0 %701
        %v704 = vadd.f32 %v698, %v702
        %v705 = vmul.f32 %v436, %v642
        %v706 = vadd.f32 %v704, %v705
        %v707 = vmul.f32 %v356, %v646
        %v709 = vrot.slane %v707, 6
        %710 = vrot.lane.b32.xlu0 %v709, 127
        %v711 = vpop.permute.xlu0 %710
        %v713 = vadd.f32 %v706, %v711
        %v714 = vmul.f32 %v436, %v653
        %716 = vrot.lane.b32.xlu0 %v714, 127
        %v717 = vpop.permute.xlu0 %716
        %v719 = vadd.f32 %v713, %v717
        %v721 = vrot.slane %v719, 2
        %v723 = vmax.f32 %v659, %v721
        %v724 = vmax.f32 %v723, 0.0
        %726 = vrot.lane.b32.xlu0 %v724, 14
        %v727 = vpop.permute.xlu0 %726
        %vm729 = vcmask 221296
        %730 = vst.msk [vmem:[%s171] sm:$0x1] %vm729, %v727
        %s731 = sld [smem:[#allocation6 + $0x7a]]
        %s732 = sld [smem:[#allocation6 + $0x30]]
        %v733 = vstv %s732
        %v734 = vmul.f32 %v218, %v733
        %v735 = vstv %s731
        %v736 = vadd.f32 %v734, %v735
        %s737 = sld [smem:[#allocation6 + $0x31]]
        %v738 = vstv %s737
        %v739 = vmul.f32 %v376, %v738
        %v741 = vrot.slane %v739, 2
        %v743 = vadd.f32 %v736, %v741
        %s744 = sld [smem:[#allocation6 + $0x32]]
        %v745 = vstv %s744
        %v746 = vmul.f32 %v218, %v745
        %748 = vrot.lane.b32.xlu0 %v746, 127
        %v749 = vpop.permute.xlu0 %748
        %v751 = vadd.f32 %v743, %v749
        %s752 = sld [smem:[#allocation6 + $0x33]]
        %v753 = vstv %s752
        %v754 = vmul.f32 %v264, %v753
        %v755 = vadd.f32 %v751, %v754
        %s756 = sld [smem:[#allocation6 + $0x34]]
        %v757 = vstv %s756
        %v758 = vmul.f32 %v396, %v757
        %v760 = vrot.slane %v758, 2
        %v762 = vadd.f32 %v755, %v760
        %s763 = sld [smem:[#allocation6 + $0x35]]
        %v764 = vstv %s763
        %v765 = vmul.f32 %v264, %v764
        %767 = vrot.lane.b32.xlu0 %v765, 127
        %v768 = vpop.permute.xlu0 %767
        %v770 = vadd.f32 %v762, %v768
        %s771 = sld [smem:[#allocation6 + $0x36]]
        %v772 = vstv %s771
        %v773 = vmul.f32 %v310, %v772
        %v774 = vadd.f32 %v770, %v773
        %s775 = sld [smem:[#allocation6 + $0x37]]
        %v776 = vstv %s775
        %v777 = vmul.f32 %v416, %v776
        %v779 = vrot.slane %v777, 2
        %v781 = vadd.f32 %v774, %v779
        %s782 = sld [smem:[#allocation6 + $0x38]]
        %v783 = vstv %s782
        %v784 = vmul.f32 %v310, %v783
        %786 = vrot.lane.b32.xlu0 %v784, 127
        %v787 = vpop.permute.xlu0 %786
        %v789 = vadd.f32 %v781, %v787
        %s790 = sld [smem:[#allocation6 + $0x39]]
        %v791 = vstv %s790
        %v792 = vmul.f32 %v356, %v791
        %v793 = vadd.f32 %v789, %v792
        %s794 = sld [smem:[#allocation6 + $0x3a]]
        %v795 = vstv %s794
        %v796 = vmul.f32 %v436, %v795
        %v798 = vrot.slane %v796, 2
        %v800 = vadd.f32 %v793, %v798
        %s801 = sld [smem:[#allocation6 + $0x3b]]
        %v802 = vstv %s801
        %v803 = vmul.f32 %v356, %v802
        %805 = vrot.lane.b32.xlu0 %v803, 127
        %v806 = vpop.permute.xlu0 %805
        %v808 = vadd.f32 %v800, %v806
        %v809 = vmul.f32 %v376, %v733
        %v810 = vadd.f32 %v809, %v735
        %v811 = vmul.f32 %v218, %v738
        %v813 = vrot.slane %v811, 6
        %814 = vrot.lane.b32.xlu0 %v813, 127
        %v815 = vpop.permute.xlu0 %814
        %v817 = vadd.f32 %v810, %v815
        %v818 = vmul.f32 %v376, %v745
        %820 = vrot.lane.b32.xlu0 %v818, 127
        %v821 = vpop.permute.xlu0 %820
        %v823 = vadd.f32 %v817, %v821
        %v824 = vmul.f32 %v396, %v753
        %v825 = vadd.f32 %v823, %v824
        %v826 = vmul.f32 %v264, %v757
        %v828 = vrot.slane %v826, 6
        %829 = vrot.lane.b32.xlu0 %v828, 127
        %v830 = vpop.permute.xlu0 %829
        %v832 = vadd.f32 %v825, %v830
        %v833 = vmul.f32 %v396, %v764
        %835 = vrot.lane.b32.xlu0 %v833, 127
        %v836 = vpop.permute.xlu0 %835
        %v838 = vadd.f32 %v832, %v836
        %v839 = vmul.f32 %v416, %v772
        %v840 = vadd.f32 %v838, %v839
        %v841 = vmul.f32 %v310, %v776
        %v843 = vrot.slane %v841, 6
        %844 = vrot.lane.b32.xlu0 %v843, 127
        %v845 = vpop.permute.xlu0 %844
        %v847 = vadd.f32 %v840, %v845
        %v848 = vmul.f32 %v416, %v783
        %850 = vrot.lane.b32.xlu0 %v848, 127
        %v851 = vpop.permute.xlu0 %850
        %v853 = vadd.f32 %v847, %v851
        %v854 = vmul.f32 %v436, %v791
        %v855 = vadd.f32 %v853, %v854
        %v856 = vmul.f32 %v356, %v795
        %v858 = vrot.slane %v856, 6
        %859 = vrot.lane.b32.xlu0 %v858, 127
        %v860 = vpop.permute.xlu0 %859
        %v862 = vadd.f32 %v855, %v860
        %v863 = vmul.f32 %v436, %v802
        %865 = vrot.lane.b32.xlu0 %v863, 127
        %v866 = vpop.permute.xlu0 %865
        %v868 = vadd.f32 %v862, %v866
        %v870 = vrot.slane %v868, 2
        %v872 = vmax.f32 %v808, %v870
        %v873 = vmax.f32 %v872, 0.0
        %875 = vrot.lane.b32.xlu0 %v873, 28
        %v876 = vpop.permute.xlu0 %875
        %vm878 = vcmask 336096
        %879 = vst.msk [vmem:[%s171] sm:$0x1] %vm878, %v876
        %s880 = sld [smem:[#allocation6 + $0x7b]]
        %s881 = sld [smem:[#allocation6 + $0x3c]]
        %v882 = vstv %s881
        %v883 = vmul.f32 %v218, %v882
        %v884 = vstv %s880
        %v885 = vadd.f32 %v883, %v884
        %s886 = sld [smem:[#allocation6 + $0x3d]]
        %v887 = vstv %s886
        %v888 = vmul.f32 %v376, %v887
        %v890 = vrot.slane %v888, 2
        %v892 = vadd.f32 %v885, %v890
        %s893 = sld [smem:[#allocation6 + $0x3e]]
        %v894 = vstv %s893
        %v895 = vmul.f32 %v218, %v894
        %897 = vrot.lane.b32.xlu0 %v895, 127
        %v898 = vpop.permute.xlu0 %897
        %v900 = vadd.f32 %v892, %v898
        %s901 = sld [smem:[#allocation6 + $0x3f]]
        %v902 = vstv %s901
        %v903 = vmul.f32 %v264, %v902
        %v904 = vadd.f32 %v900, %v903
        %s905 = sld [smem:[#allocation6 + $0x40]]
        %v906 = vstv %s905
        %v907 = vmul.f32 %v396, %v906
        %v909 = vrot.slane %v907, 2
        %v911 = vadd.f32 %v904, %v909
        %s912 = sld [smem:[#allocation6 + $0x41]]
        %v913 = vstv %s912
        %v914 = vmul.f32 %v264, %v913
        %916 = vrot.lane.b32.xlu0 %v914, 127
        %v917 = vpop.permute.xlu0 %916
        %v919 = vadd.f32 %v911, %v917
        %s920 = sld [smem:[#allocation6 + $0x42]]
        %v921 = vstv %s920
        %v922 = vmul.f32 %v310, %v921
        %v923 = vadd.f32 %v919, %v922
        %s924 = sld [smem:[#allocation6 + $0x43]]
        %v925 = vstv %s924
        %v926 = vmul.f32 %v416, %v925
        %v928 = vrot.slane %v926, 2
        %v930 = vadd.f32 %v923, %v928
        %s931 = sld [smem:[#allocation6 + $0x44]]
        %v932 = vstv %s931
        %v933 = vmul.f32 %v310, %v932
        %935 = vrot.lane.b32.xlu0 %v933, 127
        %v936 = vpop.permute.xlu0 %935
        %v938 = vadd.f32 %v930, %v936
        %s939 = sld [smem:[#allocation6 + $0x45]]
        %v940 = vstv %s939
        %v941 = vmul.f32 %v356, %v940
        %v942 = vadd.f32 %v938, %v941
        %s943 = sld [smem:[#allocation6 + $0x46]]
        %v944 = vstv %s943
        %v945 = vmul.f32 %v436, %v944
        %v947 = vrot.slane %v945, 2
        %v949 = vadd.f32 %v942, %v947
        %s950 = sld [smem:[#allocation6 + $0x47]]
        %v951 = vstv %s950
        %v952 = vmul.f32 %v356, %v951
        %954 = vrot.lane.b32.xlu0 %v952, 127
        %v955 = vpop.permute.xlu0 %954
        %v957 = vadd.f32 %v949, %v955
        %v958 = vmul.f32 %v376, %v882
        %v959 = vadd.f32 %v958, %v884
        %v960 = vmul.f32 %v218, %v887
        %v962 = vrot.slane %v960, 6
        %963 = vrot.lane.b32.xlu0 %v962, 127
        %v964 = vpop.permute.xlu0 %963
        %v966 = vadd.f32 %v959, %v964
        %v967 = vmul.f32 %v376, %v894
        %969 = vrot.lane.b32.xlu0 %v967, 127
        %v970 = vpop.permute.xlu0 %969
        %v972 = vadd.f32 %v966, %v970
        %v973 = vmul.f32 %v396, %v902
        %v974 = vadd.f32 %v972, %v973
        %v975 = vmul.f32 %v264, %v906
        %v977 = vrot.slane %v975, 6
        %978 = vrot.lane.b32.xlu0 %v977, 127
        %v979 = vpop.permute.xlu0 %978
        %v981 = vadd.f32 %v974, %v979
        %v982 = vmul.f32 %v396, %v913
        %984 = vrot.lane.b32.xlu0 %v982, 127
        %v985 = vpop.permute.xlu0 %984
        %v987 = vadd.f32 %v981, %v985
        %v988 = vmul.f32 %v416, %v921
        %v989 = vadd.f32 %v987, %v988
        %v990 = vmul.f32 %v310, %v925
        %v992 = vrot.slane %v990, 6
        %993 = vrot.lane.b32.xlu0 %v992, 127
        %v994 = vpop.permute.xlu0 %993
        %v996 = vadd.f32 %v989, %v994
        %v997 = vmul.f32 %v416, %v932
        %999 = vrot.lane.b32.xlu0 %v997, 127
        %v1000 = vpop.permute.xlu0 %999
        %v1002 = vadd.f32 %v996, %v1000
        %v1003 = vmul.f32 %v436, %v940
        %v1004 = vadd.f32 %v1002, %v1003
        %v1005 = vmul.f32 %v356, %v944
        %v1007 = vrot.slane %v1005, 6
        %1008 = vrot.lane.b32.xlu0 %v1007, 127
        %v1009 = vpop.permute.xlu0 %1008
        %v1011 = vadd.f32 %v1004, %v1009
        %v1012 = vmul.f32 %v436, %v951
        %1014 = vrot.lane.b32.xlu0 %v1012, 127
        %v1015 = vpop.permute.xlu0 %1014
        %v1017 = vadd.f32 %v1011, %v1015
        %v1019 = vrot.slane %v1017, 2
        %v1021 = vmax.f32 %v957, %v1019
        %v1022 = vmax.f32 %v1021, 0.0
        %1024 = vrot.lane.b32.xlu0 %v1022, 42
        %v1025 = vpop.permute.xlu0 %1024
        %vm1027 = vcmask 450896
        %1028 = vst.msk [vmem:[%s171] sm:$0x1] %vm1027, %v1025
        %s1029 = sld [smem:[#allocation6 + $0x7c]]
        %s1030 = sld [smem:[#allocation6 + $0x48]]
        %v1031 = vstv %s1030
        %v1032 = vmul.f32 %v218, %v1031
        %v1033 = vstv %s1029
        %v1034 = vadd.f32 %v1032, %v1033
        %s1035 = sld [smem:[#allocation6 + $0x49]]
        %v1036 = vstv %s1035
        %v1037 = vmul.f32 %v376, %v1036
        %v1039 = vrot.slane %v1037, 2
        %v1041 = vadd.f32 %v1034, %v1039
        %s1042 = sld [smem:[#allocation6 + $0x4a]]
        %v1043 = vstv %s1042
        %v1044 = vmul.f32 %v218, %v1043
        %1046 = vrot.lane.b32.xlu0 %v1044, 127
        %v1047 = vpop.permute.xlu0 %1046
        %v1049 = vadd.f32 %v1041, %v1047
        %s1050 = sld [smem:[#allocation6 + $0x4b]]
        %v1051 = vstv %s1050
        %v1052 = vmul.f32 %v264, %v1051
        %v1053 = vadd.f32 %v1049, %v1052
        %s1054 = sld [smem:[#allocation6 + $0x4c]]
        %v1055 = vstv %s1054
        %v1056 = vmul.f32 %v396, %v1055
        %v1058 = vrot.slane %v1056, 2
        %v1060 = vadd.f32 %v1053, %v1058
        %s1061 = sld [smem:[#allocation6 + $0x4d]]
        %v1062 = vstv %s1061
        %v1063 = vmul.f32 %v264, %v1062
        %1065 = vrot.lane.b32.xlu0 %v1063, 127
        %v1066 = vpop.permute.xlu0 %1065
        %v1068 = vadd.f32 %v1060, %v1066
        %s1069 = sld [smem:[#allocation6 + $0x4e]]
        %v1070 = vstv %s1069
        %v1071 = vmul.f32 %v310, %v1070
        %v1072 = vadd.f32 %v1068, %v1071
        %s1073 = sld [smem:[#allocation6 + $0x4f]]
        %v1074 = vstv %s1073
        %v1075 = vmul.f32 %v416, %v1074
        %v1077 = vrot.slane %v1075, 2
        %v1079 = vadd.f32 %v1072, %v1077
        %s1080 = sld [smem:[#allocation6 + $0x50]]
        %v1081 = vstv %s1080
        %v1082 = vmul.f32 %v310, %v1081
        %1084 = vrot.lane.b32.xlu0 %v1082, 127
        %v1085 = vpop.permute.xlu0 %1084
        %v1087 = vadd.f32 %v1079, %v1085
        %s1088 = sld [smem:[#allocation6 + $0x51]]
        %v1089 = vstv %s1088
        %v1090 = vmul.f32 %v356, %v1089
        %v1091 = vadd.f32 %v1087, %v1090
        %s1092 = sld [smem:[#allocation6 + $0x52]]
        %v1093 = vstv %s1092
        %v1094 = vmul.f32 %v436, %v1093
        %v1096 = vrot.slane %v1094, 2
        %v1098 = vadd.f32 %v1091, %v1096
        %s1099 = sld [smem:[#allocation6 + $0x53]]
        %v1100 = vstv %s1099
        %v1101 = vmul.f32 %v356, %v1100
        %1103 = vrot.lane.b32.xlu0 %v1101, 127
        %v1104 = vpop.permute.xlu0 %1103
        %v1106 = vadd.f32 %v1098, %v1104
        %v1107 = vmul.f32 %v376, %v1031
        %v1108 = vadd.f32 %v1107, %v1033
        %v1109 = vmul.f32 %v218, %v1036
        %v1111 = vrot.slane %v1109, 6
        %1112 = vrot.lane.b32.xlu0 %v1111, 127
        %v1113 = vpop.permute.xlu0 %1112
        %v1115 = vadd.f32 %v1108, %v1113
        %v1116 = vmul.f32 %v376, %v1043
        %1118 = vrot.lane.b32.xlu0 %v1116, 127
        %v1119 = vpop.permute.xlu0 %1118
        %v1121 = vadd.f32 %v1115, %v1119
        %v1122 = vmul.f32 %v396, %v1051
        %v1123 = vadd.f32 %v1121, %v1122
        %v1124 = vmul.f32 %v264, %v1055
        %v1126 = vrot.slane %v1124, 6
        %1127 = vrot.lane.b32.xlu0 %v1126, 127
        %v1128 = vpop.permute.xlu0 %1127
        %v1130 = vadd.f32 %v1123, %v1128
        %v1131 = vmul.f32 %v396, %v1062
        %1133 = vrot.lane.b32.xlu0 %v1131, 127
        %v1134 = vpop.permute.xlu0 %1133
        %v1136 = vadd.f32 %v1130, %v1134
        %v1137 = vmul.f32 %v416, %v1070
        %v1138 = vadd.f32 %v1136, %v1137
        %v1139 = vmul.f32 %v310, %v1074
        %v1141 = vrot.slane %v1139, 6
        %1142 = vrot.lane.b32.xlu0 %v1141, 127
        %v1143 = vpop.permute.xlu0 %1142
        %v1145 = vadd.f32 %v1138, %v1143
        %v1146 = vmul.f32 %v416, %v1081
        %1148 = vrot.lane.b32.xlu0 %v1146, 127
        %v1149 = vpop.permute.xlu0 %1148
        %v1151 = vadd.f32 %v1145, %v1149
        %v1152 = vmul.f32 %v436, %v1089
        %v1153 = vadd.f32 %v1151, %v1152
        %v1154 = vmul.f32 %v356, %v1093
        %v1156 = vrot.slane %v1154, 6
        %1157 = vrot.lane.b32.xlu0 %v1156, 127
        %v1158 = vpop.permute.xlu0 %1157
        %v1160 = vadd.f32 %v1153, %v1158
        %v1161 = vmul.f32 %v436, %v1100
        %1163 = vrot.lane.b32.xlu0 %v1161, 127
        %v1164 = vpop.permute.xlu0 %1163
        %v1166 = vadd.f32 %v1160, %v1164
        %v1168 = vrot.slane %v1166, 2
        %v1170 = vmax.f32 %v1106, %v1168
        %v1171 = vmax.f32 %v1170, 0.0
        %1173 = vrot.lane.b32.xlu0 %v1171, 56
        %v1174 = vpop.permute.xlu0 %1173
        %vm1176 = vcmask 565696
        %1177 = vst.msk [vmem:[%s171] sm:$0x1] %vm1176, %v1174
        %s1178 = sld [smem:[#allocation6 + $0x7d]]
        %s1179 = sld [smem:[#allocation6 + $0x54]]
        %v1180 = vstv %s1179
        %v1181 = vmul.f32 %v218, %v1180
        %v1182 = vstv %s1178
        %v1183 = vadd.f32 %v1181, %v1182
        %s1184 = sld [smem:[#allocation6 + $0x55]]
        %v1185 = vstv %s1184
        %v1186 = vmul.f32 %v376, %v1185
        %v1188 = vrot.slane %v1186, 2
        %v1190 = vadd.f32 %v1183, %v1188
        %s1191 = sld [smem:[#allocation6 + $0x56]]
        %v1192 = vstv %s1191
        %v1193 = vmul.f32 %v218, %v1192
        %1195 = vrot.lane.b32.xlu0 %v1193, 127
        %v1196 = vpop.permute.xlu0 %1195
        %v1198 = vadd.f32 %v1190, %v1196
        %s1199 = sld [smem:[#allocation6 + $0x57]]
        %v1200 = vstv %s1199
        %v1201 = vmul.f32 %v264, %v1200
        %v1202 = vadd.f32 %v1198, %v1201
        %s1203 = sld [smem:[#allocation6 + $0x58]]
        %v1204 = vstv %s1203
        %v1205 = vmul.f32 %v396, %v1204
        %v1207 = vrot.slane %v1205, 2
        %v1209 = vadd.f32 %v1202, %v1207
        %s1210 = sld [smem:[#allocation6 + $0x59]]
        %v1211 = vstv %s1210
        %v1212 = vmul.f32 %v264, %v1211
        %1214 = vrot.lane.b32.xlu0 %v1212, 127
        %v1215 = vpop.permute.xlu0 %1214
        %v1217 = vadd.f32 %v1209, %v1215
        %s1218 = sld [smem:[#allocation6 + $0x5a]]
        %v1219 = vstv %s1218
        %v1220 = vmul.f32 %v310, %v1219
        %v1221 = vadd.f32 %v1217, %v1220
        %s1222 = sld [smem:[#allocation6 + $0x5b]]
        %v1223 = vstv %s1222
        %v1224 = vmul.f32 %v416, %v1223
        %v1226 = vrot.slane %v1224, 2
        %v1228 = vadd.f32 %v1221, %v1226
        %s1229 = sld [smem:[#allocation6 + $0x5c]]
        %v1230 = vstv %s1229
        %v1231 = vmul.f32 %v310, %v1230
        %1233 = vrot.lane.b32.xlu0 %v1231, 127
        %v1234 = vpop.permute.xlu0 %1233
        %v1236 = vadd.f32 %v1228, %v1234
        %s1237 = sld [smem:[#allocation6 + $0x5d]]
        %v1238 = vstv %s1237
        %v1239 = vmul.f32 %v356, %v1238
        %v1240 = vadd.f32 %v1236, %v1239
        %s1241 = sld [smem:[#allocation6 + $0x5e]]
        %v1242 = vstv %s1241
        %v1243 = vmul.f32 %v436, %v1242
        %v1245 = vrot.slane %v1243, 2
        %v1247 = vadd.f32 %v1240, %v1245
        %s1248 = sld [smem:[#allocation6 + $0x5f]]
        %v1249 = vstv %s1248
        %v1250 = vmul.f32 %v356, %v1249
        %1252 = vrot.lane.b32.xlu0 %v1250, 127
        %v1253 = vpop.permute.xlu0 %1252
        %v1255 = vadd.f32 %v1247, %v1253
        %v1256 = vmul.f32 %v376, %v1180
        %v1257 = vadd.f32 %v1256, %v1182
        %v1258 = vmul.f32 %v218, %v1185
        %v1260 = vrot.slane %v1258, 6
        %1261 = vrot.lane.b32.xlu0 %v1260, 127
        %v1262 = vpop.permute.xlu0 %1261
        %v1264 = vadd.f32 %v1257, %v1262
        %v1265 = vmul.f32 %v376, %v1192
        %1267 = vrot.lane.b32.xlu0 %v1265, 127
        %v1268 = vpop.permute.xlu0 %1267
        %v1270 = vadd.f32 %v1264, %v1268
        %v1271 = vmul.f32 %v396, %v1200
        %v1272 = vadd.f32 %v1270, %v1271
        %v1273 = vmul.f32 %v264, %v1204
        %v1275 = vrot.slane %v1273, 6
        %1276 = vrot.lane.b32.xlu0 %v1275, 127
        %v1277 = vpop.permute.xlu0 %1276
        %v1279 = vadd.f32 %v1272, %v1277
        %v1280 = vmul.f32 %v396, %v1211
        %1282 = vrot.lane.b32.xlu0 %v1280, 127
        %v1283 = vpop.permute.xlu0 %1282
        %v1285 = vadd.f32 %v1279, %v1283
        %v1286 = vmul.f32 %v416, %v1219
        %v1287 = vadd.f32 %v1285, %v1286
        %v1288 = vmul.f32 %v310, %v1223
        %v1290 = vrot.slane %v1288, 6
        %1291 = vrot.lane.b32.xlu0 %v1290, 127
        %v1292 = vpop.permute.xlu0 %1291
        %v1294 = vadd.f32 %v1287, %v1292
        %v1295 = vmul.f32 %v416, %v1230
        %1297 = vrot.lane.b32.xlu0 %v1295, 127
        %v1298 = vpop.permute.xlu0 %1297
        %v1300 = vadd.f32 %v1294, %v1298
        %v1301 = vmul.f32 %v436, %v1238
        %v1302 = vadd.f32 %v1300, %v1301
        %v1303 = vmul.f32 %v356, %v1242
        %v1305 = vrot.slane %v1303, 6
        %1306 = vrot.lane.b32.xlu0 %v1305, 127
        %v1307 = vpop.permute.xlu0 %1306
        %v1309 = vadd.f32 %v1302, %v1307
        %v1310 = vmul.f32 %v436, %v1249
        %1312 = vrot.lane.b32.xlu0 %v1310, 127
        %v1313 = vpop.permute.xlu0 %1312
        %v1315 = vadd.f32 %v1309, %v1313
        %v1317 = vrot.slane %v1315, 2
        %v1319 = vmax.f32 %v1255, %v1317
        %v1320 = vmax.f32 %v1319, 0.0
        %1322 = vrot.lane.b32.xlu0 %v1320, 70
        %v1323 = vpop.permute.xlu0 %1322
        %vm1325 = vcmask 680496
        %1326 = vst.msk [vmem:[%s171] sm:$0x1] %vm1325, %v1323
        %s1327 = sld [smem:[#allocation6 + $0x7e]]
        %s1328 = sld [smem:[#allocation6 + $0x60]]
        %v1329 = vstv %s1328
        %v1330 = vmul.f32 %v218, %v1329
        %v1331 = vstv %s1327
        %v1332 = vadd.f32 %v1330, %v1331
        %s1333 = sld [smem:[#allocation6 + $0x61]]
        %v1334 = vstv %s1333
        %v1335 = vmul.f32 %v376, %v1334
        %v1337 = vrot.slane %v1335, 2
        %v1339 = vadd.f32 %v1332, %v1337
        %s1340 = sld [smem:[#allocation6 + $0x62]]
        %v1341 = vstv %s1340
        %v1342 = vmul.f32 %v218, %v1341
        %1344 = vrot.lane.b32.xlu0 %v1342, 127
        %v1345 = vpop.permute.xlu0 %1344
        %v1347 = vadd.f32 %v1339, %v1345
        %s1348 = sld [smem:[#allocation6 + $0x63]]
        %v1349 = vstv %s1348
        %v1350 = vmul.f32 %v264, %v1349
        %v1351 = vadd.f32 %v1347, %v1350
        %s1352 = sld [smem:[#allocation6 + $0x64]]
        %v1353 = vstv %s1352
        %v1354 = vmul.f32 %v396, %v1353
        %v1356 = vrot.slane %v1354, 2
        %v1358 = vadd.f32 %v1351, %v1356
        %s1359 = sld [smem:[#allocation6 + $0x65]]
        %v1360 = vstv %s1359
        %v1361 = vmul.f32 %v264, %v1360
        %1363 = vrot.lane.b32.xlu0 %v1361, 127
        %v1364 = vpop.permute.xlu0 %1363
        %v1366 = vadd.f32 %v1358, %v1364
        %s1367 = sld [smem:[#allocation6 + $0x66]]
        %v1368 = vstv %s1367
        %v1369 = vmul.f32 %v310, %v1368
        %v1370 = vadd.f32 %v1366, %v1369
        %s1371 = sld [smem:[#allocation6 + $0x67]]
        %v1372 = vstv %s1371
        %v1373 = vmul.f32 %v416, %v1372
        %v1375 = vrot.slane %v1373, 2
        %v1377 = vadd.f32 %v1370, %v1375
        %s1378 = sld [smem:[#allocation6 + $0x68]]
        %v1379 = vstv %s1378
        %v1380 = vmul.f32 %v310, %v1379
        %1382 = vrot.lane.b32.xlu0 %v1380, 127
        %v1383 = vpop.permute.xlu0 %1382
        %v1385 = vadd.f32 %v1377, %v1383
        %s1386 = sld [smem:[#allocation6 + $0x69]]
        %v1387 = vstv %s1386
        %v1388 = vmul.f32 %v356, %v1387
        %v1389 = vadd.f32 %v1385, %v1388
        %s1390 = sld [smem:[#allocation6 + $0x6a]]
        %v1391 = vstv %s1390
        %v1392 = vmul.f32 %v436, %v1391
        %v1394 = vrot.slane %v1392, 2
        %v1396 = vadd.f32 %v1389, %v1394
        %s1397 = sld [smem:[#allocation6 + $0x6b]]
        %v1398 = vstv %s1397
        %v1399 = vmul.f32 %v356, %v1398
        %1401 = vrot.lane.b32.xlu0 %v1399, 127
        %v1402 = vpop.permute.xlu0 %1401
        %v1404 = vadd.f32 %v1396, %v1402
        %v1405 = vmul.f32 %v376, %v1329
        %v1406 = vadd.f32 %v1405, %v1331
        %v1407 = vmul.f32 %v218, %v1334
        %v1409 = vrot.slane %v1407, 6
        %1410 = vrot.lane.b32.xlu0 %v1409, 127
        %v1411 = vpop.permute.xlu0 %1410
        %v1413 = vadd.f32 %v1406, %v1411
        %v1414 = vmul.f32 %v376, %v1341
        %1416 = vrot.lane.b32.xlu0 %v1414, 127
        %v1417 = vpop.permute.xlu0 %1416
        %v1419 = vadd.f32 %v1413, %v1417
        %v1420 = vmul.f32 %v396, %v1349
        %v1421 = vadd.f32 %v1419, %v1420
        %v1422 = vmul.f32 %v264, %v1353
        %v1424 = vrot.slane %v1422, 6
        %1425 = vrot.lane.b32.xlu0 %v1424, 127
        %v1426 = vpop.permute.xlu0 %1425
        %v1428 = vadd.f32 %v1421, %v1426
        %v1429 = vmul.f32 %v396, %v1360
        %1431 = vrot.lane.b32.xlu0 %v1429, 127
        %v1432 = vpop.permute.xlu0 %1431
        %v1434 = vadd.f32 %v1428, %v1432
        %v1435 = vmul.f32 %v416, %v1368
        %v1436 = vadd.f32 %v1434, %v1435
        %v1437 = vmul.f32 %v310, %v1372
        %v1439 = vrot.slane %v1437, 6
        %1440 = vrot.lane.b32.xlu0 %v1439, 127
        %v1441 = vpop.permute.xlu0 %1440
        %v1443 = vadd.f32 %v1436, %v1441
        %v1444 = vmul.f32 %v416, %v1379
        %1446 = vrot.lane.b32.xlu0 %v1444, 127
        %v1447 = vpop.permute.xlu0 %1446
        %v1449 = vadd.f32 %v1443, %v1447
        %v1450 = vmul.f32 %v436, %v1387
        %v1451 = vadd.f32 %v1449, %v1450
        %v1452 = vmul.f32 %v356, %v1391
        %v1454 = vrot.slane %v1452, 6
        %1455 = vrot.lane.b32.xlu0 %v1454, 127
        %v1456 = vpop.permute.xlu0 %1455
        %v1458 = vadd.f32 %v1451, %v1456
        %v1459 = vmul.f32 %v436, %v1398
        %1461 = vrot.lane.b32.xlu0 %v1459, 127
        %v1462 = vpop.permute.xlu0 %1461
        %v1464 = vadd.f32 %v1458, %v1462
        %v1466 = vrot.slane %v1464, 2
        %v1468 = vmax.f32 %v1404, %v1466
        %v1469 = vmax.f32 %v1468, 0.0
        %1471 = vrot.lane.b32.xlu0 %v1469, 84
        %v1472 = vpop.permute.xlu0 %1471
        %vm1474 = vcmask 795296
        %1475 = vst.msk [vmem:[%s171] sm:$0x1] %vm1474, %v1472
        %s1476 = sld [smem:[#allocation6 + $0x7f]]
        %s1477 = sld [smem:[#allocation6 + $0x6c]]
        %v1478 = vstv %s1477
        %v1479 = vmul.f32 %v218, %v1478
        %v1480 = vstv %s1476
        %v1481 = vadd.f32 %v1479, %v1480
        %s1482 = sld [smem:[#allocation6 + $0x6d]]
        %v1483 = vstv %s1482
        %v1484 = vmul.f32 %v376, %v1483
        %v1486 = vrot.slane %v1484, 2
        %v1488 = vadd.f32 %v1481, %v1486
        %s1489 = sld [smem:[#allocation6 + $0x6e]]
        %v1490 = vstv %s1489
        %v1491 = vmul.f32 %v218, %v1490
        %1493 = vrot.lane.b32.xlu0 %v1491, 127
        %v1494 = vpop.permute.xlu0 %1493
        %v1496 = vadd.f32 %v1488, %v1494
        %s1497 = sld [smem:[#allocation6 + $0x6f]]
        %v1498 = vstv %s1497
        %v1499 = vmul.f32 %v264, %v1498
        %v1500 = vadd.f32 %v1496, %v1499
        %s1501 = sld [smem:[#allocation6 + $0x70]]
        %v1502 = vstv %s1501
        %v1503 = vmul.f32 %v396, %v1502
        %v1505 = vrot.slane %v1503, 2
        %v1507 = vadd.f32 %v1500, %v1505
        %s1508 = sld [smem:[#allocation6 + $0x71]]
        %v1509 = vstv %s1508
        %v1510 = vmul.f32 %v264, %v1509
        %1512 = vrot.lane.b32.xlu0 %v1510, 127
        %v1513 = vpop.permute.xlu0 %1512
        %v1515 = vadd.f32 %v1507, %v1513
        %s1516 = sld [smem:[#allocation6 + $0x72]]
        %v1517 = vstv %s1516
        %v1518 = vmul.f32 %v310, %v1517
        %v1519 = vadd.f32 %v1515, %v1518
        %s1520 = sld [smem:[#allocation6 + $0x73]]
        %v1521 = vstv %s1520
        %v1522 = vmul.f32 %v416, %v1521
        %v1524 = vrot.slane %v1522, 2
        %v1526 = vadd.f32 %v1519, %v1524
        %s1527 = sld [smem:[#allocation6 + $0x74]]
        %v1528 = vstv %s1527
        %v1529 = vmul.f32 %v310, %v1528
        %1531 = vrot.lane.b32.xlu0 %v1529, 127
        %v1532 = vpop.permute.xlu0 %1531
        %v1534 = vadd.f32 %v1526, %v1532
        %s1535 = sld [smem:[#allocation6 + $0x75]]
        %v1536 = vstv %s1535
        %v1537 = vmul.f32 %v356, %v1536
        %v1538 = vadd.f32 %v1534, %v1537
        %s1539 = sld [smem:[#allocation6 + $0x76]]
        %v1540 = vstv %s1539
        %v1541 = vmul.f32 %v436, %v1540
        %v1543 = vrot.slane %v1541, 2
        %v1545 = vadd.f32 %v1538, %v1543
        %s1546 = sld [smem:[#allocation6 + $0x77]]
        %v1547 = vstv %s1546
        %v1548 = vmul.f32 %v356, %v1547
        %1550 = vrot.lane.b32.xlu0 %v1548, 127
        %v1551 = vpop.permute.xlu0 %1550
        %v1553 = vadd.f32 %v1545, %v1551
        %v1554 = vmul.f32 %v376, %v1478
        %v1555 = vadd.f32 %v1554, %v1480
        %v1556 = vmul.f32 %v218, %v1483
        %v1558 = vrot.slane %v1556, 6
        %1559 = vrot.lane.b32.xlu0 %v1558, 127
        %v1560 = vpop.permute.xlu0 %1559
        %v1562 = vadd.f32 %v1555, %v1560
        %v1563 = vmul.f32 %v376, %v1490
        %1565 = vrot.lane.b32.xlu0 %v1563, 127
        %v1566 = vpop.permute.xlu0 %1565
        %v1568 = vadd.f32 %v1562, %v1566
        %v1569 = vmul.f32 %v396, %v1498
        %v1570 = vadd.f32 %v1568, %v1569
        %v1571 = vmul.f32 %v264, %v1502
        %v1573 = vrot.slane %v1571, 6
        %1574 = vrot.lane.b32.xlu0 %v1573, 127
        %v1575 = vpop.permute.xlu0 %1574
        %v1577 = vadd.f32 %v1570, %v1575
        %v1578 = vmul.f32 %v396, %v1509
        %1580 = vrot.lane.b32.xlu0 %v1578, 127
        %v1581 = vpop.permute.xlu0 %1580
        %v1583 = vadd.f32 %v1577, %v1581
        %v1584 = vmul.f32 %v416, %v1517
        %v1585 = vadd.f32 %v1583, %v1584
        %v1586 = vmul.f32 %v310, %v1521
        %v1588 = vrot.slane %v1586, 6
        %1589 = vrot.lane.b32.xlu0 %v1588, 127
        %v1590 = vpop.permute.xlu0 %1589
        %v1592 = vadd.f32 %v1585, %v1590
        %v1593 = vmul.f32 %v416, %v1528
        %1595 = vrot.lane.b32.xlu0 %v1593, 127
        %v1596 = vpop.permute.xlu0 %1595
        %v1598 = vadd.f32 %v1592, %v1596
        %v1599 = vmul.f32 %v436, %v1536
        %v1600 = vadd.f32 %v1598, %v1599
        %v1601 = vmul.f32 %v356, %v1540
        %v1603 = vrot.slane %v1601, 6
        %1604 = vrot.lane.b32.xlu0 %v1603, 127
        %v1605 = vpop.permute.xlu0 %1604
        %v1607 = vadd.f32 %v1600, %v1605
        %v1608 = vmul.f32 %v436, %v1547
        %1610 = vrot.lane.b32.xlu0 %v1608, 127
        %v1611 = vpop.permute.xlu0 %1610
        %v1613 = vadd.f32 %v1607, %v1611
        %v1615 = vrot.slane %v1613, 2
        %v1617 = vmax.f32 %v1553, %v1615
        %v1618 = vmax.f32 %v1617, 0.0
        %1620 = vrot.lane.b32.xlu0 %v1618, 98
        %v1621 = vpop.permute.xlu0 %1620
        %vm1623 = vcmask 910096
        %1624 = vst.msk [vmem:[%s171] sm:$0x1] %vm1623, %v1621
        %s1625 = sand.u32 %s75, 1
        %s1626 = scalar_lea.sflag [#allocation4], %s1625
        %s1627 = sand.u32 %s75, 1
        %s1628 = scalar_lea.vmem [#allocation7], %s1627
        // Predicated region
        $region37: #{tpu_custom_call.1} parent=27 // pred_check
          %p1629 = pneg %p85
        $region38: #{tpu_custom_call.1} parent=27 // pred_check_branch
          %1631 = sbr.rel (%p1629) target = $region40
        $region39: #{tpu_custom_call.1} parent=27 // pred_region
          %s1633 = ssub.s32 16, 16
          %1634 = vsyncadd %s1626, %s1633
          %s1635 = smul.addr %s20, 16
          %s1636 = scalar_lea.hbm %s2, %s1635
          %s1638 = sshll.u32 %s1628, 4
          %s1639 = int_to_ptr.vmem [resolvable:$true] %s1638
          %1641 = dma.vmem_to_hbm [thread:$0]  %s1639, 16, %s1636, %s1626
        $region40: #{tpu_custom_call.1} parent=27 // pred_fallthru
          _
      $region28: #{tpu_custom_call.1} parent=5 // pred_fallthru
        _
      %p1642 = scmp.le.s32.totalorder 2, %s15
      // Predicated region
      $region41: #{tpu_custom_call.1} parent=5 // pred_check
        %p1643 = pneg %p1642
      $region42: #{tpu_custom_call.1} parent=5 // pred_check_branch
        %1645 = sbr.rel (%p1643) target = $region44
      $region43: #{tpu_custom_call.1} parent=5 // pred_region
        %s1646 = ssub.s32 %s15, 2
        // Predicated region
        $region45: #{tpu_custom_call.1} parent=43 // pred_check
          %p1647 = pneg %p91
        $region46: #{tpu_custom_call.1} parent=43 // pred_check_branch
          %1649 = sbr.rel (%p1647) target = $region48
        $region47: #{tpu_custom_call.1} parent=43 // pred_region
          %s1650 = sand.u32 %s76, 1
          %s1651 = scalar_lea.sflag [#allocation4], %s1650
          %s1652 = sand.u32 %s76, 1
          %s1653 = scalar_lea.vmem [#allocation7], %s1652
          %1654 = dma.done %s1651, 16
        $region48: #{tpu_custom_call.1} parent=43 // pred_fallthru
          _
      $region44: #{tpu_custom_call.1} parent=5 // pred_fallthru
        _
    $region6: #{tpu_custom_call.1} parent=1 // loop_footer
      %s19 = sadd.s32 1, %s15
    $region7: #{tpu_custom_call.1} parent=1 // loop_footer_branch
      %14 = sbr.rel target = $region3
    $region8: #{tpu_custom_call.1} parent=1 // loop_exit
      _
    %1655 = vsyncpa [#allocation3], 1
    %s1656 = scalar_lea.sflag [#allocation3], 1
    %1657 = vsyncpa %s1656, 1
    %1658 = vsyncpa [#allocation4], 1
    %s1659 = scalar_lea.sflag [#allocation4], 1
    %1660 = vsyncpa %s1659, 1
    %1661 = vsyncpa [#allocation5], 1
    %s1662 = scalar_lea.sflag [#allocation5], 1
    %1663 = vsyncpa %s1662, 1

</llo_original>
